<compile_context>
chip_gen: v7x
topology: tpu7x:2x2x1
jax: 0.10.0
libtpu: 0.0.40
codegen_flags: <defaults>
</compile_context>

<pallas_src>
import functools

import jax
import jax.numpy as jnp
from jax.experimental import pallas as pl
from jax.experimental.pallas import tpu as pltpu


# ---------------------------------------------------------------------------
# Model hyper-parameters (small, but shape-consistent with the PyTorch module)
# ---------------------------------------------------------------------------
N_SEMANTIC = 32          # SEMANTIC_MAX (synthetic)
N_STAFF = 4              # STAFF_MAX (synthetic)
D_POSITION = 64          # d_position (sinusoid dims per positional scalar)
ANGLE_CYCLE = 1000.0
D_MODEL = 128
D_INNER = 256
N_LAYERS = 2
N_HEAD = 4
D_K = 32
D_V = 32
LN_EPS = 1e-6

HDK = N_HEAD * D_K       # 128
HDV = N_HEAD * D_V       # 128

FEAT_DIM = N_SEMANTIC + N_STAFF + 1 + 4 * D_POSITION   # TimewiseGraphEncoder.output_dim = 293
FEAT_PAD = ((FEAT_DIM + 127) // 128) * 128              # 384: pad K dim to a multiple of 128


# ---------------------------------------------------------------------------
# Glue: TimewiseGraphEncoder feature construction (plain JAX, cheap)
# ---------------------------------------------------------------------------
def _sinusoid(v, d_hid=D_POSITION, angle_cycle=ANGLE_CYCLE):
    # TODO(synk): exact SinusoidEncoder frequency formula of starry not available;
    # using geometric frequencies base `angle_cycle`, half sin / half cos.
    half = d_hid // 2
    div = angle_cycle ** (jnp.arange(half, dtype=jnp.float32) / float(half))
    ang = v[..., None] / div                                   # (B, L, half)
    return jnp.concatenate([jnp.sin(ang), jnp.cos(ang)], axis=-1)


def timewise_graph_encode(ids, staff, confidence, x, y, sy1, sy2):
    vec_id = jax.nn.one_hot(ids, N_SEMANTIC, dtype=jnp.float32)
    vec_staff = jax.nn.one_hot(staff, N_STAFF, dtype=jnp.float32)
    vec_conf = confidence[..., None].astype(jnp.float32)
    pos = [_sinusoid(p) for p in (x, y, sy1, sy2)]
    feats = jnp.concatenate([vec_id, vec_staff, vec_conf] + pos, axis=-1)   # (B, L, 293)
    feats = jnp.pad(feats, ((0, 0), (0, 0), (0, FEAT_PAD - FEAT_DIM)))
    # bf16 feats: halves the dominant per-step HBM DMA (padded w_emb rows see zeros)
    return feats.astype(jnp.bfloat16)


# ---------------------------------------------------------------------------
# Fused Pallas kernel: embedding + N_LAYERS encoder layers, Bt batch elems/step
# ---------------------------------------------------------------------------
def _fused_encoder_kernel(f_ref, pad_ref, wemb_ref, wqkv_ref, fc_ref,
                          ln1g_ref, ln1b_ref, w1_ref, b1_ref, w2_ref, b2_ref,
                          ln2g_ref, ln2b_ref, o_ref, *, unidirectional):
    Bt, L, FP = f_ref.shape
    D = wemb_ref.shape[1]
    R = Bt * L

    # ---- embedding (Linear, bias=False) on the flattened row slab -----------
    feats = f_ref[...].reshape(R, FP)                                        # bf16
    h = jnp.dot(feats, wemb_ref[...], preferred_element_type=jnp.float32)    # (R, D) f32

    # ---- additive attention bias, kept as broadcast terms (never (Bt,L,L)) --
    pad_bias = (pad_ref[...] - 1.0) * 1e9                    # (Bt, 1, L): 0 valid, -1e9 pad
    if unidirectional:
        row = jax.lax.broadcasted_iota(jnp.int32, (L, L), 0)
        col = jax.lax.broadcasted_iota(jnp.int32, (L, L), 1)
        causal = jnp.where(row >= col, 0.0, -1e9).astype(jnp.float32)[None]  # (1, L, L)

    def layer_norm(x, g, b):
        mu = jnp.mean(x, axis=-1, keepdims=True)
        msq = jnp.mean(x * x, axis=-1, keepdims=True)
        var = jnp.maximum(msq - mu * mu, 0.0)
        return (x - mu) * jax.lax.rsqrt(var + LN_EPS) * g + b

    # ---- AttentionStack: static unroll over layers (weights VMEM-resident) --
    for l in range(N_LAYERS):
        # Fused Q/K/V projection: one wide MXU matmul.  1/sqrt(d_k) already
        # folded into the Q columns of wqkv at parameter-preparation time.
        qkv = jnp.dot(h.astype(jnp.bfloat16), wqkv_ref[l],
                      preferred_element_type=jnp.float32)                    # (R, 3*HDK) f32
        qkv = qkv.astype(jnp.bfloat16)

        ctx_heads = []
        for hh in range(N_HEAD):                             # static unroll over heads
            q = qkv[:, hh * D_K:(hh + 1) * D_K].reshape(Bt, L, D_K)
            k = qkv[:, HDK + hh * D_K: HDK + (hh + 1) * D_K].reshape(Bt, L, D_K)
            v = qkv[:, 2 * HDK + hh * D_V: 2 * HDK + (hh + 1) * D_V].reshape(Bt, L, D_V)

            s = jnp.einsum('bqd,bkd->bqk', q, k,
                           preferred_element_type=jnp.float32)               # (Bt, L, L) f32
            s = s + pad_bias                                                 # (Bt,1,L) bcast
            if unidirectional:
                s = s + causal                                               # (1,L,L) bcast
            m = jnp.max(s, axis=-1, keepdims=True)
            e = jnp.exp(s - m)
            p = e * pl.reciprocal(jnp.sum(e, axis=-1, keepdims=True), approx=True)
            ctx = jnp.einsum('bqk,bkd->bqd', p.astype(jnp.bfloat16), v,
                             preferred_element_type=jnp.float32)             # (Bt, L, D_V)
            ctx_heads.append(ctx.reshape(R, D_V).astype(jnp.bfloat16))

        # Fused output projection: concat(heads) @ fc with full K = H*D_V.
        ctx_cat = jnp.concatenate(ctx_heads, axis=-1)                        # (R, HDV) bf16
        attn = jnp.dot(ctx_cat, fc_ref[l], preferred_element_type=jnp.float32)

        # residual + LayerNorm 1 (f32)
        h1 = layer_norm(h + attn, ln1g_ref[l], ln1b_ref[l])

        # position-wise FFN (bf16 MXU inputs, f32 accumulation / elementwise)
        f = jnp.dot(h1.astype(jnp.bfloat16), w1_ref[l],
                    preferred_element_type=jnp.float32) + b1_ref[l]
        f = jnp.maximum(f, 0.0)
        f = jnp.dot(f.astype(jnp.bfloat16), w2_ref[l],
                    preferred_element_type=jnp.float32) + b2_ref[l]

        # residual + LayerNorm 2 (f32)
        h = layer_norm(h1 + f, ln2g_ref[l], ln2b_ref[l])

    o_ref[...] = h.reshape(Bt, L, D)


def _pick_bt(B, L, target_rows=512, min_steps=2):
    # Cap Bt so the grid has at least `min_steps` steps (v7x 2-core sharding,
    # DMA/compute pipelining), then fill up to ~target_rows rows per step.
    cap = max(1, B // min_steps)
    bt = max(1, min(cap, max(1, target_rows // max(L, 1))))
    while B % bt != 0:
        bt -= 1
    return bt


def fused_encoder(params, feats, pad_f, unidirectional=True):
    B, L, FP = feats.shape
    D = D_MODEL
    Bt = _pick_bt(B, L)

    def const_spec(arr):
        n = arr.ndim
        return pl.BlockSpec(arr.shape, lambda b, _n=n: (0,) * _n)

    weights = [params["w_emb"], params["wqkv"], params["fc"],
               params["ln1_g"], params["ln1_b"],
               params["w1"], params["b1"], params["w2"], params["b2"],
               params["ln2_g"], params["ln2_b"]]

    kernel = functools.partial(_fused_encoder_kernel, unidirectional=unidirectional)

    return pl.pallas_call(
        kernel,
        out_shape=jax.ShapeDtypeStruct((B, L, D), jnp.float32),
        grid=(B // Bt,),
        in_specs=[
            pl.BlockSpec((Bt, L, FP), lambda b: (b, 0, 0)),     # features (bf16)
            pl.BlockSpec((Bt, 1, L), lambda b: (b, 0, 0)),      # padding mask (f32)
        ] + [const_spec(w) for w in weights],
        out_specs=pl.BlockSpec((Bt, L, D), lambda b: (b, 0, 0)),
        compiler_params=pltpu.CompilerParams(
            dimension_semantics=("parallel",),
            vmem_limit_bytes=32 * 1024 * 1024),
    )(feats, pad_f, *weights)


# ---------------------------------------------------------------------------
# Parameter init (deterministic, synthetic).  Per-layer weights are stacked
# along a leading N_LAYERS axis; Q/K/V weights are fused into one wide matrix
# (head-major columns) and fc is the un-split (H*d_v, d_model) matrix.  Matmul
# weights are stored in bf16; LN/bias params stay f32.
# ---------------------------------------------------------------------------
def init_params(key):
    ks = jax.random.split(key, 7)
    scale = 0.02

    wq = jax.random.normal(ks[1], (N_LAYERS, N_HEAD, D_MODEL, D_K), jnp.float32) * scale
    wq = wq * (1.0 / D_K ** 0.5)                               # fold 1/sqrt(d_k) into Q
    wk = jax.random.normal(ks[2], (N_LAYERS, N_HEAD, D_MODEL, D_K), jnp.float32) * scale
    wv = jax.random.normal(ks[3], (N_LAYERS, N_HEAD, D_MODEL, D_V), jnp.float32) * scale
    fc = jax.random.normal(ks[4], (N_LAYERS, N_HEAD, D_V, D_MODEL), jnp.float32) * scale

    def head_major(w):     # (Lyr, H, D, dk) -> (Lyr, D, H*dk), head-major columns
        return jnp.transpose(w, (0, 2, 1, 3)).reshape(N_LAYERS, D_MODEL, -1)

    wqkv = jnp.concatenate([head_major(wq), head_major(wk), head_major(wv)], axis=-1)
    fc_fused = fc.reshape(N_LAYERS, N_HEAD * D_V, D_MODEL)     # rows are (head, d_v)-major

    params = {
        "w_emb": (jax.random.normal(ks[0], (FEAT_PAD, D_MODEL), jnp.float32)
                  * scale).astype(jnp.bfloat16),
        "wqkv": wqkv.astype(jnp.bfloat16),                     # (Lyr, D, 3*H*d_k)
        "fc": fc_fused.astype(jnp.bfloat16),                   # (Lyr, H*d_v, D)
        "ln1_g": jnp.ones((N_LAYERS, 1, D_MODEL), jnp.float32),
        "ln1_b": jnp.zeros((N_LAYERS, 1, D_MODEL), jnp.float32),
        "w1": (jax.random.normal(ks[5], (N_LAYERS, D_MODEL, D_INNER), jnp.float32)
               * scale).astype(jnp.bfloat16),
        "b1": jnp.zeros((N_LAYERS, 1, D_INNER), jnp.float32),
        "w2": (jax.random.normal(ks[6], (N_LAYERS, D_INNER, D_MODEL), jnp.float32)
               * scale).astype(jnp.bfloat16),
        "b2": jnp.zeros((N_LAYERS, 1, D_MODEL), jnp.float32),
        "ln2_g": jnp.ones((N_LAYERS, 1, D_MODEL), jnp.float32),
        "ln2_b": jnp.zeros((N_LAYERS, 1, D_MODEL), jnp.float32),
    }
    return params


# ---------------------------------------------------------------------------
# Full forward pass (GraphParaffEncoder.forward)
# ---------------------------------------------------------------------------
@functools.partial(jax.jit, static_argnames=("unidirectional",))
def graph_paraff_encoder(params, ids, staff, confidence, x, y, sy1, sy2, mask,
                         unidirectional=True):
    feats = timewise_graph_encode(ids, staff, confidence, x, y, sy1, sy2)   # (B, L, 384) bf16
    pad_f = mask.astype(jnp.float32)[:, None, :]                            # (B, 1, L)
    # TODO(synk): if starry's AttentionStack applies an extra final LayerNorm /
    # positional encoding, it is not reproduced here (source not available).
    return fused_encoder(params, feats, pad_f, unidirectional)


# ---------------------------------------------------------------------------
if __name__ == "__main__":
    B, L = 2, 16
    key = jax.random.PRNGKey(0)
    k_par, k_id, k_st, k_cf, k_x, k_y, k_s1, k_s2 = jax.random.split(key, 8)

    params = init_params(k_par)

    ids = jax.random.randint(k_id, (B, L), 0, N_SEMANTIC, dtype=jnp.int32)
    staff = jax.random.randint(k_st, (B, L), 0, N_STAFF, dtype=jnp.int32)
    confidence = jax.random.uniform(k_cf, (B, L), jnp.float32)
    x = jax.random.uniform(k_x, (B, L), jnp.float32) * 10.0
    y = jax.random.uniform(k_y, (B, L), jnp.float32) * 10.0
    sy1 = jax.random.uniform(k_s1, (B, L), jnp.float32) * 10.0
    sy2 = jax.random.uniform(k_s2, (B, L), jnp.float32) * 10.0
    lens = jnp.array([L, L - 4], dtype=jnp.int32)
    mask = jnp.arange(L)[None, :] < lens[:, None]                     # (B, L) bool

    out = graph_paraff_encoder(params, ids, staff, confidence, x, y, sy1, sy2, mask)
    out = jax.block_until_ready(out)

    assert out.shape == (B, L, D_MODEL)
    assert bool(jnp.all(jnp.isfinite(out)))
    print("KERNEL_OK")
</pallas_src>

<mosaic_0001>
module attributes {stable_mosaic.version = 11 : i64} {
  func.func @_fused_encoder_kernel(%arg0: i32, %arg1: memref<1x16x384xbf16, #tpu.memory_space<vmem>>, %arg2: memref<1x1x16xf32, #tpu.memory_space<vmem>>, %arg3: memref<384x128xbf16, #tpu.memory_space<vmem>>, %arg4: memref<2x128x384xbf16, #tpu.memory_space<vmem>>, %arg5: memref<2x128x128xbf16, #tpu.memory_space<vmem>>, %arg6: memref<2x1x128xf32, #tpu.memory_space<vmem>>, %arg7: memref<2x1x128xf32, #tpu.memory_space<vmem>>, %arg8: memref<2x128x256xbf16, #tpu.memory_space<vmem>>, %arg9: memref<2x1x256xf32, #tpu.memory_space<vmem>>, %arg10: memref<2x256x128xbf16, #tpu.memory_space<vmem>>, %arg11: memref<2x1x128xf32, #tpu.memory_space<vmem>>, %arg12: memref<2x1x128xf32, #tpu.memory_space<vmem>>, %arg13: memref<2x1x128xf32, #tpu.memory_space<vmem>>, %arg14: memref<1x16x128xf32, #tpu.memory_space<vmem>>) attributes {dimension_semantics = [#tpu.dimension_semantics<parallel>], iteration_bounds = array<i64: 2>, scalar_prefetch = 0 : i64, scratch_operands = 0 : i64, tpu.core_type = #tpu.core_type<tc>, window_params = [{transform_indices = @transform_0, window_bounds = array<i64: 1, 16, 384>}, {transform_indices = @transform_1, window_bounds = array<i64: 1, 1, 16>}, {pipeline_mode = #tpu.pipeline_mode<synchronous>, transform_indices = @transform_2, window_bounds = array<i64: 384, 128>}, {pipeline_mode = #tpu.pipeline_mode<synchronous>, transform_indices = @transform_3, window_bounds = array<i64: 2, 128, 384>}, {pipeline_mode = #tpu.pipeline_mode<synchronous>, transform_indices = @transform_4, window_bounds = array<i64: 2, 128, 128>}, {pipeline_mode = #tpu.pipeline_mode<synchronous>, transform_indices = @transform_5, window_bounds = array<i64: 2, 1, 128>}, {pipeline_mode = #tpu.pipeline_mode<synchronous>, transform_indices = @transform_6, window_bounds = array<i64: 2, 1, 128>}, {pipeline_mode = #tpu.pipeline_mode<synchronous>, transform_indices = @transform_7, window_bounds = array<i64: 2, 128, 256>}, {pipeline_mode = #tpu.pipeline_mode<synchronous>, transform_indices = @transform_8, window_bounds = array<i64: 2, 1, 256>}, {pipeline_mode = #tpu.pipeline_mode<synchronous>, transform_indices = @transform_9, window_bounds = array<i64: 2, 256, 128>}, {pipeline_mode = #tpu.pipeline_mode<synchronous>, transform_indices = @transform_10, window_bounds = array<i64: 2, 1, 128>}, {pipeline_mode = #tpu.pipeline_mode<synchronous>, transform_indices = @transform_11, window_bounds = array<i64: 2, 1, 128>}, {pipeline_mode = #tpu.pipeline_mode<synchronous>, transform_indices = @transform_12, window_bounds = array<i64: 2, 1, 128>}, {transform_indices = @transform_13, window_bounds = array<i64: 1, 16, 128>}]} {
    %c0 = arith.constant 0 : index
    %c0_0 = arith.constant 0 : index
    %c0_1 = arith.constant 0 : index
    %0 = vector.load %arg1[%c0, %c0_0, %c0_1] : memref<1x16x384xbf16, #tpu.memory_space<vmem>>, vector<1x16x384xbf16>
    %1 = vector.shape_cast %0 : vector<1x16x384xbf16> to vector<16x384xbf16>
    %c0_2 = arith.constant 0 : index
    %c0_3 = arith.constant 0 : index
    %2 = vector.load %arg3[%c0_2, %c0_3] : memref<384x128xbf16, #tpu.memory_space<vmem>>, vector<384x128xbf16>
    %cst = arith.constant dense<0.000000e+00> : vector<16x128xf32>
    %3 = tpu.matmul %1, %2, %cst {dimension_numbers = #tpu.dot_dimension_numbers<[1], [0], [0], [1], [0, 0, 1, 1], [], []>} : vector<16x384xbf16>, vector<384x128xbf16>, vector<16x128xf32> -> vector<16x128xf32>
    %c0_4 = arith.constant 0 : index
    %c0_5 = arith.constant 0 : index
    %c0_6 = arith.constant 0 : index
    %4 = vector.load %arg2[%c0_4, %c0_5, %c0_6] : memref<1x1x16xf32, #tpu.memory_space<vmem>>, vector<1x1x16xf32>
    %cst_7 = arith.constant 1.000000e+00 : f32
    %5 = vector.broadcast %cst_7 : f32 to vector<1x1x16xf32>
    %6 = arith.subf %4, %5 : vector<1x1x16xf32>
    %cst_8 = arith.constant 1.000000e+09 : f32
    %7 = vector.broadcast %cst_8 : f32 to vector<1x1x16xf32>
    %8 = arith.mulf %6, %7 : vector<1x1x16xf32>
    %9 = tpu.iota {dimensions = array<i32: 0>} : vector<16x16xi32>
    %10 = tpu.iota {dimensions = array<i32: 1>} : vector<16x16xi32>
    %11 = arith.cmpi sge, %9, %10 : vector<16x16xi32>
    %cst_9 = arith.constant 0.000000e+00 : f32
    %cst_10 = arith.constant -1.000000e+09 : f32
    %12 = vector.broadcast %cst_9 : f32 to vector<16x16xf32>
    %13 = vector.broadcast %cst_10 : f32 to vector<16x16xf32>
    %14 = arith.select %11, %12, %13 : vector<16x16xi1>, vector<16x16xf32>
    %15 = vector.shape_cast %14 : vector<16x16xf32> to vector<1x16x16xf32>
    %16 = arith.truncf %3 : vector<16x128xf32> to vector<16x128xbf16>
    %c0_11 = arith.constant 0 : index
    %c0_12 = arith.constant 0 : index
    %c0_13 = arith.constant 0 : index
    %17 = vector.load %arg4[%c0_11, %c0_12, %c0_13] : memref<2x128x384xbf16, #tpu.memory_space<vmem>>, vector<1x128x384xbf16>
    %18 = vector.shape_cast %17 : vector<1x128x384xbf16> to vector<128x384xbf16>
    %cst_14 = arith.constant dense<0.000000e+00> : vector<16x384xf32>
    %19 = tpu.matmul %16, %18, %cst_14 {dimension_numbers = #tpu.dot_dimension_numbers<[1], [0], [0], [1], [0, 0, 1, 1], [], []>} : vector<16x128xbf16>, vector<128x384xbf16>, vector<16x384xf32> -> vector<16x384xf32>
    %20 = arith.truncf %19 : vector<16x384xf32> to vector<16x384xbf16>
    %21 = vector.extract_strided_slice %20 {offsets = [0, 0], sizes = [16, 32], strides = [1, 1]} : vector<16x384xbf16> to vector<16x32xbf16>
    %22 = vector.shape_cast %21 : vector<16x32xbf16> to vector<1x16x32xbf16>
    %23 = vector.extract_strided_slice %20 {offsets = [0, 128], sizes = [16, 32], strides = [1, 1]} : vector<16x384xbf16> to vector<16x32xbf16>
    %24 = vector.shape_cast %23 : vector<16x32xbf16> to vector<1x16x32xbf16>
    %25 = vector.extract_strided_slice %20 {offsets = [0, 256], sizes = [16, 32], strides = [1, 1]} : vector<16x384xbf16> to vector<16x32xbf16>
    %26 = vector.shape_cast %25 : vector<16x32xbf16> to vector<1x16x32xbf16>
    "tpu.trace_start"() <{level = 10 : i32, message = "bqd,bkd->bqk"}> : () -> ()
    %cst_15 = arith.constant dense<0.000000e+00> : vector<1x16x16xf32>
    %27 = tpu.matmul %22, %24, %cst_15 {dimension_numbers = #tpu.dot_dimension_numbers<[2], [2], [1], [1], [0, 0, 0, 1, 1, 1], [0], [0]>} : vector<1x16x32xbf16>, vector<1x16x32xbf16>, vector<1x16x16xf32> -> vector<1x16x16xf32>
    "tpu.trace_stop"() : () -> ()
    %28 = vector.broadcast %8 : vector<1x1x16xf32> to vector<1x16x16xf32>
    %29 = arith.addf %27, %28 : vector<1x16x16xf32>
    %30 = arith.addf %29, %15 : vector<1x16x16xf32>
    %cst_16 = arith.constant dense<0xFF800000> : vector<1x16xf32>
    %31 = vector.multi_reduction <maximumf>, %30, %cst_16 [2] : vector<1x16x16xf32> to vector<1x16xf32>
    %32 = vector.shape_cast %31 : vector<1x16xf32> to vector<1x16x1xf32>
    %33 = vector.broadcast %32 : vector<1x16x1xf32> to vector<1x16x16xf32>
    %34 = arith.subf %30, %33 : vector<1x16x16xf32>
    %35 = math.exp %34 : vector<1x16x16xf32>
    %cst_17 = arith.constant dense<0.000000e+00> : vector<1x16xf32>
    %36 = vector.multi_reduction <add>, %35, %cst_17 [2] : vector<1x16x16xf32> to vector<1x16xf32>
    %37 = vector.shape_cast %36 : vector<1x16xf32> to vector<1x16x1xf32>
    %38 = tpu.reciprocal %37 {approx = true} : vector<1x16x1xf32> -> vector<1x16x1xf32>
    %39 = vector.broadcast %38 : vector<1x16x1xf32> to vector<1x16x16xf32>
    %40 = arith.mulf %35, %39 : vector<1x16x16xf32>
    %41 = arith.truncf %40 : vector<1x16x16xf32> to vector<1x16x16xbf16>
    "tpu.trace_start"() <{level = 10 : i32, message = "bqk,bkd->bqd"}> : () -> ()
    %cst_18 = arith.constant dense<0.000000e+00> : vector<1x16x32xf32>
    %42 = tpu.matmul %41, %26, %cst_18 {dimension_numbers = #tpu.dot_dimension_numbers<[2], [1], [1], [2], [0, 0, 0, 1, 1, 2], [0], [0]>} : vector<1x16x16xbf16>, vector<1x16x32xbf16>, vector<1x16x32xf32> -> vector<1x16x32xf32>
    "tpu.trace_stop"() : () -> ()
    %43 = vector.shape_cast %42 : vector<1x16x32xf32> to vector<16x32xf32>
    %44 = arith.truncf %43 : vector<16x32xf32> to vector<16x32xbf16>
    %45 = vector.extract_strided_slice %20 {offsets = [0, 32], sizes = [16, 32], strides = [1, 1]} : vector<16x384xbf16> to vector<16x32xbf16>
    %46 = vector.shape_cast %45 : vector<16x32xbf16> to vector<1x16x32xbf16>
    %47 = vector.extract_strided_slice %20 {offsets = [0, 160], sizes = [16, 32], strides = [1, 1]} : vector<16x384xbf16> to vector<16x32xbf16>
    %48 = vector.shape_cast %47 : vector<16x32xbf16> to vector<1x16x32xbf16>
    %49 = vector.extract_strided_slice %20 {offsets = [0, 288], sizes = [16, 32], strides = [1, 1]} : vector<16x384xbf16> to vector<16x32xbf16>
    %50 = vector.shape_cast %49 : vector<16x32xbf16> to vector<1x16x32xbf16>
    "tpu.trace_start"() <{level = 10 : i32, message = "bqd,bkd->bqk"}> : () -> ()
    %cst_19 = arith.constant dense<0.000000e+00> : vector<1x16x16xf32>
    %51 = tpu.matmul %46, %48, %cst_19 {dimension_numbers = #tpu.dot_dimension_numbers<[2], [2], [1], [1], [0, 0, 0, 1, 1, 1], [0], [0]>} : vector<1x16x32xbf16>, vector<1x16x32xbf16>, vector<1x16x16xf32> -> vector<1x16x16xf32>
    "tpu.trace_stop"() : () -> ()
    %52 = vector.broadcast %8 : vector<1x1x16xf32> to vector<1x16x16xf32>
    %53 = arith.addf %51, %52 : vector<1x16x16xf32>
    %54 = arith.addf %53, %15 : vector<1x16x16xf32>
    %cst_20 = arith.constant dense<0xFF800000> : vector<1x16xf32>
    %55 = vector.multi_reduction <maximumf>, %54, %cst_20 [2] : vector<1x16x16xf32> to vector<1x16xf32>
    %56 = vector.shape_cast %55 : vector<1x16xf32> to vector<1x16x1xf32>
    %57 = vector.broadcast %56 : vector<1x16x1xf32> to vector<1x16x16xf32>
    %58 = arith.subf %54, %57 : vector<1x16x16xf32>
    %59 = math.exp %58 : vector<1x16x16xf32>
    %cst_21 = arith.constant dense<0.000000e+00> : vector<1x16xf32>
    %60 = vector.multi_reduction <add>, %59, %cst_21 [2] : vector<1x16x16xf32> to vector<1x16xf32>
    %61 = vector.shape_cast %60 : vector<1x16xf32> to vector<1x16x1xf32>
    %62 = tpu.reciprocal %61 {approx = true} : vector<1x16x1xf32> -> vector<1x16x1xf32>
    %63 = vector.broadcast %62 : vector<1x16x1xf32> to vector<1x16x16xf32>
    %64 = arith.mulf %59, %63 : vector<1x16x16xf32>
    %65 = arith.truncf %64 : vector<1x16x16xf32> to vector<1x16x16xbf16>
    "tpu.trace_start"() <{level = 10 : i32, message = "bqk,bkd->bqd"}> : () -> ()
    %cst_22 = arith.constant dense<0.000000e+00> : vector<1x16x32xf32>
    %66 = tpu.matmul %65, %50, %cst_22 {dimension_numbers = #tpu.dot_dimension_numbers<[2], [1], [1], [2], [0, 0, 0, 1, 1, 2], [0], [0]>} : vector<1x16x16xbf16>, vector<1x16x32xbf16>, vector<1x16x32xf32> -> vector<1x16x32xf32>
    "tpu.trace_stop"() : () -> ()
    %67 = vector.shape_cast %66 : vector<1x16x32xf32> to vector<16x32xf32>
    %68 = arith.truncf %67 : vector<16x32xf32> to vector<16x32xbf16>
    %69 = vector.extract_strided_slice %20 {offsets = [0, 64], sizes = [16, 32], strides = [1, 1]} : vector<16x384xbf16> to vector<16x32xbf16>
    %70 = vector.shape_cast %69 : vector<16x32xbf16> to vector<1x16x32xbf16>
    %71 = vector.extract_strided_slice %20 {offsets = [0, 192], sizes = [16, 32], strides = [1, 1]} : vector<16x384xbf16> to vector<16x32xbf16>
    %72 = vector.shape_cast %71 : vector<16x32xbf16> to vector<1x16x32xbf16>
    %73 = vector.extract_strided_slice %20 {offsets = [0, 320], sizes = [16, 32], strides = [1, 1]} : vector<16x384xbf16> to vector<16x32xbf16>
    %74 = vector.shape_cast %73 : vector<16x32xbf16> to vector<1x16x32xbf16>
    "tpu.trace_start"() <{level = 10 : i32, message = "bqd,bkd->bqk"}> : () -> ()
    %cst_23 = arith.constant dense<0.000000e+00> : vector<1x16x16xf32>
    %75 = tpu.matmul %70, %72, %cst_23 {dimension_numbers = #tpu.dot_dimension_numbers<[2], [2], [1], [1], [0, 0, 0, 1, 1, 1], [0], [0]>} : vector<1x16x32xbf16>, vector<1x16x32xbf16>, vector<1x16x16xf32> -> vector<1x16x16xf32>
    "tpu.trace_stop"() : () -> ()
    %76 = vector.broadcast %8 : vector<1x1x16xf32> to vector<1x16x16xf32>
    %77 = arith.addf %75, %76 : vector<1x16x16xf32>
    %78 = arith.addf %77, %15 : vector<1x16x16xf32>
    %cst_24 = arith.constant dense<0xFF800000> : vector<1x16xf32>
    %79 = vector.multi_reduction <maximumf>, %78, %cst_24 [2] : vector<1x16x16xf32> to vector<1x16xf32>
    %80 = vector.shape_cast %79 : vector<1x16xf32> to vector<1x16x1xf32>
    %81 = vector.broadcast %80 : vector<1x16x1xf32> to vector<1x16x16xf32>
    %82 = arith.subf %78, %81 : vector<1x16x16xf32>
    %83 = math.exp %82 : vector<1x16x16xf32>
    %cst_25 = arith.constant dense<0.000000e+00> : vector<1x16xf32>
    %84 = vector.multi_reduction <add>, %83, %cst_25 [2] : vector<1x16x16xf32> to vector<1x16xf32>
    %85 = vector.shape_cast %84 : vector<1x16xf32> to vector<1x16x1xf32>
    %86 = tpu.reciprocal %85 {approx = true} : vector<1x16x1xf32> -> vector<1x16x1xf32>
    %87 = vector.broadcast %86 : vector<1x16x1xf32> to vector<1x16x16xf32>
    %88 = arith.mulf %83, %87 : vector<1x16x16xf32>
    %89 = arith.truncf %88 : vector<1x16x16xf32> to vector<1x16x16xbf16>
    "tpu.trace_start"() <{level = 10 : i32, message = "bqk,bkd->bqd"}> : () -> ()
    %cst_26 = arith.constant dense<0.000000e+00> : vector<1x16x32xf32>
    %90 = tpu.matmul %89, %74, %cst_26 {dimension_numbers = #tpu.dot_dimension_numbers<[2], [1], [1], [2], [0, 0, 0, 1, 1, 2], [0], [0]>} : vector<1x16x16xbf16>, vector<1x16x32xbf16>, vector<1x16x32xf32> -> vector<1x16x32xf32>
    "tpu.trace_stop"() : () -> ()
    %91 = vector.shape_cast %90 : vector<1x16x32xf32> to vector<16x32xf32>
    %92 = arith.truncf %91 : vector<16x32xf32> to vector<16x32xbf16>
    %93 = vector.extract_strided_slice %20 {offsets = [0, 96], sizes = [16, 32], strides = [1, 1]} : vector<16x384xbf16> to vector<16x32xbf16>
    %94 = vector.shape_cast %93 : vector<16x32xbf16> to vector<1x16x32xbf16>
    %95 = vector.extract_strided_slice %20 {offsets = [0, 224], sizes = [16, 32], strides = [1, 1]} : vector<16x384xbf16> to vector<16x32xbf16>
    %96 = vector.shape_cast %95 : vector<16x32xbf16> to vector<1x16x32xbf16>
    %97 = vector.extract_strided_slice %20 {offsets = [0, 352], sizes = [16, 32], strides = [1, 1]} : vector<16x384xbf16> to vector<16x32xbf16>
    %98 = vector.shape_cast %97 : vector<16x32xbf16> to vector<1x16x32xbf16>
    "tpu.trace_start"() <{level = 10 : i32, message = "bqd,bkd->bqk"}> : () -> ()
    %cst_27 = arith.constant dense<0.000000e+00> : vector<1x16x16xf32>
    %99 = tpu.matmul %94, %96, %cst_27 {dimension_numbers = #tpu.dot_dimension_numbers<[2], [2], [1], [1], [0, 0, 0, 1, 1, 1], [0], [0]>} : vector<1x16x32xbf16>, vector<1x16x32xbf16>, vector<1x16x16xf32> -> vector<1x16x16xf32>
    "tpu.trace_stop"() : () -> ()
    %100 = vector.broadcast %8 : vector<1x1x16xf32> to vector<1x16x16xf32>
    %101 = arith.addf %99, %100 : vector<1x16x16xf32>
    %102 = arith.addf %101, %15 : vector<1x16x16xf32>
    %cst_28 = arith.constant dense<0xFF800000> : vector<1x16xf32>
    %103 = vector.multi_reduction <maximumf>, %102, %cst_28 [2] : vector<1x16x16xf32> to vector<1x16xf32>
    %104 = vector.shape_cast %103 : vector<1x16xf32> to vector<1x16x1xf32>
    %105 = vector.broadcast %104 : vector<1x16x1xf32> to vector<1x16x16xf32>
    %106 = arith.subf %102, %105 : vector<1x16x16xf32>
    %107 = math.exp %106 : vector<1x16x16xf32>
    %cst_29 = arith.constant dense<0.000000e+00> : vector<1x16xf32>
    %108 = vector.multi_reduction <add>, %107, %cst_29 [2] : vector<1x16x16xf32> to vector<1x16xf32>
    %109 = vector.shape_cast %108 : vector<1x16xf32> to vector<1x16x1xf32>
    %110 = tpu.reciprocal %109 {approx = true} : vector<1x16x1xf32> -> vector<1x16x1xf32>
    %111 = vector.broadcast %110 : vector<1x16x1xf32> to vector<1x16x16xf32>
    %112 = arith.mulf %107, %111 : vector<1x16x16xf32>
    %113 = arith.truncf %112 : vector<1x16x16xf32> to vector<1x16x16xbf16>
    "tpu.trace_start"() <{level = 10 : i32, message = "bqk,bkd->bqd"}> : () -> ()
    %cst_30 = arith.constant dense<0.000000e+00> : vector<1x16x32xf32>
    %114 = tpu.matmul %113, %98, %cst_30 {dimension_numbers = #tpu.dot_dimension_numbers<[2], [1], [1], [2], [0, 0, 0, 1, 1, 2], [0], [0]>} : vector<1x16x16xbf16>, vector<1x16x32xbf16>, vector<1x16x32xf32> -> vector<1x16x32xf32>
    "tpu.trace_stop"() : () -> ()
    %115 = vector.shape_cast %114 : vector<1x16x32xf32> to vector<16x32xf32>
    %116 = arith.truncf %115 : vector<16x32xf32> to vector<16x32xbf16>
    %117 = tpu.concatenate %44, %68, %92, %116 in 1 : vector<16x32xbf16>, vector<16x32xbf16>, vector<16x32xbf16>, vector<16x32xbf16> -> vector<16x128xbf16>
    %c0_31 = arith.constant 0 : index
    %c0_32 = arith.constant 0 : index
    %c0_33 = arith.constant 0 : index
    %118 = vector.load %arg5[%c0_31, %c0_32, %c0_33] : memref<2x128x128xbf16, #tpu.memory_space<vmem>>, vector<1x128x128xbf16>
    %119 = vector.shape_cast %118 : vector<1x128x128xbf16> to vector<128x128xbf16>
    %cst_34 = arith.constant dense<0.000000e+00> : vector<16x128xf32>
    %120 = tpu.matmul %117, %119, %cst_34 {dimension_numbers = #tpu.dot_dimension_numbers<[1], [0], [0], [1], [0, 0, 1, 1], [], []>} : vector<16x128xbf16>, vector<128x128xbf16>, vector<16x128xf32> -> vector<16x128xf32>
    %121 = arith.addf %3, %120 : vector<16x128xf32>
    %c0_35 = arith.constant 0 : index
    %c0_36 = arith.constant 0 : index
    %c0_37 = arith.constant 0 : index
    %122 = vector.load %arg6[%c0_35, %c0_36, %c0_37] : memref<2x1x128xf32, #tpu.memory_space<vmem>>, vector<1x1x128xf32>
    %123 = vector.shape_cast %122 : vector<1x1x128xf32> to vector<1x128xf32>
    %c0_38 = arith.constant 0 : index
    %c0_39 = arith.constant 0 : index
    %c0_40 = arith.constant 0 : index
    %124 = vector.load %arg7[%c0_38, %c0_39, %c0_40] : memref<2x1x128xf32, #tpu.memory_space<vmem>>, vector<1x1x128xf32>
    %125 = vector.shape_cast %124 : vector<1x1x128xf32> to vector<1x128xf32>
    %cst_41 = arith.constant dense<0.000000e+00> : vector<16xf32>
    %126 = vector.multi_reduction <add>, %121, %cst_41 [1] : vector<16x128xf32> to vector<16xf32>
    %127 = vector.shape_cast %126 : vector<16xf32> to vector<16x1xf32>
    %cst_42 = arith.constant 1.280000e+02 : f32
    %128 = vector.broadcast %cst_42 : f32 to vector<16x1xf32>
    %129 = arith.divf %127, %128 : vector<16x1xf32>
    %130 = arith.mulf %121, %121 : vector<16x128xf32>
    %cst_43 = arith.constant dense<0.000000e+00> : vector<16xf32>
    %131 = vector.multi_reduction <add>, %130, %cst_43 [1] : vector<16x128xf32> to vector<16xf32>
    %132 = vector.shape_cast %131 : vector<16xf32> to vector<16x1xf32>
    %cst_44 = arith.constant 1.280000e+02 : f32
    %133 = vector.broadcast %cst_44 : f32 to vector<16x1xf32>
    %134 = arith.divf %132, %133 : vector<16x1xf32>
    %135 = arith.mulf %129, %129 : vector<16x1xf32>
    %136 = arith.subf %134, %135 : vector<16x1xf32>
    %cst_45 = arith.constant 0.000000e+00 : f32
    %137 = vector.broadcast %cst_45 : f32 to vector<16x1xf32>
    %138 = arith.maximumf %136, %137 : vector<16x1xf32>
    %139 = vector.broadcast %129 : vector<16x1xf32> to vector<16x128xf32>
    %140 = arith.subf %121, %139 : vector<16x128xf32>
    %cst_46 = arith.constant 9.99999997E-7 : f32
    %141 = vector.broadcast %cst_46 : f32 to vector<16x1xf32>
    %142 = arith.addf %138, %141 : vector<16x1xf32>
    %143 = math.rsqrt %142 : vector<16x1xf32>
    %144 = vector.broadcast %143 : vector<16x1xf32> to vector<16x128xf32>
    %145 = arith.mulf %140, %144 : vector<16x128xf32>
    %146 = vector.broadcast %123 : vector<1x128xf32> to vector<16x128xf32>
    %147 = arith.mulf %145, %146 : vector<16x128xf32>
    %148 = vector.broadcast %125 : vector<1x128xf32> to vector<16x128xf32>
    %149 = arith.addf %147, %148 : vector<16x128xf32>
    %150 = arith.truncf %149 : vector<16x128xf32> to vector<16x128xbf16>
    %c0_47 = arith.constant 0 : index
    %c0_48 = arith.constant 0 : index
    %c0_49 = arith.constant 0 : index
    %151 = vector.load %arg8[%c0_47, %c0_48, %c0_49] : memref<2x128x256xbf16, #tpu.memory_space<vmem>>, vector<1x128x256xbf16>
    %152 = vector.shape_cast %151 : vector<1x128x256xbf16> to vector<128x256xbf16>
    %cst_50 = arith.constant dense<0.000000e+00> : vector<16x256xf32>
    %153 = tpu.matmul %150, %152, %cst_50 {dimension_numbers = #tpu.dot_dimension_numbers<[1], [0], [0], [1], [0, 0, 1, 1], [], []>} : vector<16x128xbf16>, vector<128x256xbf16>, vector<16x256xf32> -> vector<16x256xf32>
    %c0_51 = arith.constant 0 : index
    %c0_52 = arith.constant 0 : index
    %c0_53 = arith.constant 0 : index
    %154 = vector.load %arg9[%c0_51, %c0_52, %c0_53] : memref<2x1x256xf32, #tpu.memory_space<vmem>>, vector<1x1x256xf32>
    %155 = vector.shape_cast %154 : vector<1x1x256xf32> to vector<1x256xf32>
    %156 = vector.broadcast %155 : vector<1x256xf32> to vector<16x256xf32>
    %157 = arith.addf %153, %156 : vector<16x256xf32>
    %cst_54 = arith.constant 0.000000e+00 : f32
    %158 = vector.broadcast %cst_54 : f32 to vector<16x256xf32>
    %159 = arith.maximumf %157, %158 : vector<16x256xf32>
    %160 = arith.truncf %159 : vector<16x256xf32> to vector<16x256xbf16>
    %c0_55 = arith.constant 0 : index
    %c0_56 = arith.constant 0 : index
    %c0_57 = arith.constant 0 : index
    %161 = vector.load %arg10[%c0_55, %c0_56, %c0_57] : memref<2x256x128xbf16, #tpu.memory_space<vmem>>, vector<1x256x128xbf16>
    %162 = vector.shape_cast %161 : vector<1x256x128xbf16> to vector<256x128xbf16>
    %cst_58 = arith.constant dense<0.000000e+00> : vector<16x128xf32>
    %163 = tpu.matmul %160, %162, %cst_58 {dimension_numbers = #tpu.dot_dimension_numbers<[1], [0], [0], [1], [0, 0, 1, 1], [], []>} : vector<16x256xbf16>, vector<256x128xbf16>, vector<16x128xf32> -> vector<16x128xf32>
    %c0_59 = arith.constant 0 : index
    %c0_60 = arith.constant 0 : index
    %c0_61 = arith.constant 0 : index
    %164 = vector.load %arg11[%c0_59, %c0_60, %c0_61] : memref<2x1x128xf32, #tpu.memory_space<vmem>>, vector<1x1x128xf32>
    %165 = vector.shape_cast %164 : vector<1x1x128xf32> to vector<1x128xf32>
    %166 = vector.broadcast %165 : vector<1x128xf32> to vector<16x128xf32>
    %167 = arith.addf %163, %166 : vector<16x128xf32>
    %168 = arith.addf %149, %167 : vector<16x128xf32>
    %c0_62 = arith.constant 0 : index
    %c0_63 = arith.constant 0 : index
    %c0_64 = arith.constant 0 : index
    %169 = vector.load %arg12[%c0_62, %c0_63, %c0_64] : memref<2x1x128xf32, #tpu.memory_space<vmem>>, vector<1x1x128xf32>
    %170 = vector.shape_cast %169 : vector<1x1x128xf32> to vector<1x128xf32>
    %c0_65 = arith.constant 0 : index
    %c0_66 = arith.constant 0 : index
    %c0_67 = arith.constant 0 : index
    %171 = vector.load %arg13[%c0_65, %c0_66, %c0_67] : memref<2x1x128xf32, #tpu.memory_space<vmem>>, vector<1x1x128xf32>
    %172 = vector.shape_cast %171 : vector<1x1x128xf32> to vector<1x128xf32>
    %cst_68 = arith.constant dense<0.000000e+00> : vector<16xf32>
    %173 = vector.multi_reduction <add>, %168, %cst_68 [1] : vector<16x128xf32> to vector<16xf32>
    %174 = vector.shape_cast %173 : vector<16xf32> to vector<16x1xf32>
    %cst_69 = arith.constant 1.280000e+02 : f32
    %175 = vector.broadcast %cst_69 : f32 to vector<16x1xf32>
    %176 = arith.divf %174, %175 : vector<16x1xf32>
    %177 = arith.mulf %168, %168 : vector<16x128xf32>
    %cst_70 = arith.constant dense<0.000000e+00> : vector<16xf32>
    %178 = vector.multi_reduction <add>, %177, %cst_70 [1] : vector<16x128xf32> to vector<16xf32>
    %179 = vector.shape_cast %178 : vector<16xf32> to vector<16x1xf32>
    %cst_71 = arith.constant 1.280000e+02 : f32
    %180 = vector.broadcast %cst_71 : f32 to vector<16x1xf32>
    %181 = arith.divf %179, %180 : vector<16x1xf32>
    %182 = arith.mulf %176, %176 : vector<16x1xf32>
    %183 = arith.subf %181, %182 : vector<16x1xf32>
    %cst_72 = arith.constant 0.000000e+00 : f32
    %184 = vector.broadcast %cst_72 : f32 to vector<16x1xf32>
    %185 = arith.maximumf %183, %184 : vector<16x1xf32>
    %186 = vector.broadcast %176 : vector<16x1xf32> to vector<16x128xf32>
    %187 = arith.subf %168, %186 : vector<16x128xf32>
    %cst_73 = arith.constant 9.99999997E-7 : f32
    %188 = vector.broadcast %cst_73 : f32 to vector<16x1xf32>
    %189 = arith.addf %185, %188 : vector<16x1xf32>
    %190 = math.rsqrt %189 : vector<16x1xf32>
    %191 = vector.broadcast %190 : vector<16x1xf32> to vector<16x128xf32>
    %192 = arith.mulf %187, %191 : vector<16x128xf32>
    %193 = vector.broadcast %170 : vector<1x128xf32> to vector<16x128xf32>
    %194 = arith.mulf %192, %193 : vector<16x128xf32>
    %195 = vector.broadcast %172 : vector<1x128xf32> to vector<16x128xf32>
    %196 = arith.addf %194, %195 : vector<16x128xf32>
    %197 = arith.truncf %196 : vector<16x128xf32> to vector<16x128xbf16>
    %c1 = arith.constant 1 : index
    %c0_74 = arith.constant 0 : index
    %c0_75 = arith.constant 0 : index
    %198 = vector.load %arg4[%c1, %c0_74, %c0_75] : memref<2x128x384xbf16, #tpu.memory_space<vmem>>, vector<1x128x384xbf16>
    %199 = vector.shape_cast %198 : vector<1x128x384xbf16> to vector<128x384xbf16>
    %cst_76 = arith.constant dense<0.000000e+00> : vector<16x384xf32>
    %200 = tpu.matmul %197, %199, %cst_76 {dimension_numbers = #tpu.dot_dimension_numbers<[1], [0], [0], [1], [0, 0, 1, 1], [], []>} : vector<16x128xbf16>, vector<128x384xbf16>, vector<16x384xf32> -> vector<16x384xf32>
    %201 = arith.truncf %200 : vector<16x384xf32> to vector<16x384xbf16>
    %202 = vector.extract_strided_slice %201 {offsets = [0, 0], sizes = [16, 32], strides = [1, 1]} : vector<16x384xbf16> to vector<16x32xbf16>
    %203 = vector.shape_cast %202 : vector<16x32xbf16> to vector<1x16x32xbf16>
    %204 = vector.extract_strided_slice %201 {offsets = [0, 128], sizes = [16, 32], strides = [1, 1]} : vector<16x384xbf16> to vector<16x32xbf16>
    %205 = vector.shape_cast %204 : vector<16x32xbf16> to vector<1x16x32xbf16>
    %206 = vector.extract_strided_slice %201 {offsets = [0, 256], sizes = [16, 32], strides = [1, 1]} : vector<16x384xbf16> to vector<16x32xbf16>
    %207 = vector.shape_cast %206 : vector<16x32xbf16> to vector<1x16x32xbf16>
    "tpu.trace_start"() <{level = 10 : i32, message = "bqd,bkd->bqk"}> : () -> ()
    %cst_77 = arith.constant dense<0.000000e+00> : vector<1x16x16xf32>
    %208 = tpu.matmul %203, %205, %cst_77 {dimension_numbers = #tpu.dot_dimension_numbers<[2], [2], [1], [1], [0, 0, 0, 1, 1, 1], [0], [0]>} : vector<1x16x32xbf16>, vector<1x16x32xbf16>, vector<1x16x16xf32> -> vector<1x16x16xf32>
    "tpu.trace_stop"() : () -> ()
    %209 = vector.broadcast %8 : vector<1x1x16xf32> to vector<1x16x16xf32>
    %210 = arith.addf %208, %209 : vector<1x16x16xf32>
    %211 = arith.addf %210, %15 : vector<1x16x16xf32>
    %cst_78 = arith.constant dense<0xFF800000> : vector<1x16xf32>
    %212 = vector.multi_reduction <maximumf>, %211, %cst_78 [2] : vector<1x16x16xf32> to vector<1x16xf32>
    %213 = vector.shape_cast %212 : vector<1x16xf32> to vector<1x16x1xf32>
    %214 = vector.broadcast %213 : vector<1x16x1xf32> to vector<1x16x16xf32>
    %215 = arith.subf %211, %214 : vector<1x16x16xf32>
    %216 = math.exp %215 : vector<1x16x16xf32>
    %cst_79 = arith.constant dense<0.000000e+00> : vector<1x16xf32>
    %217 = vector.multi_reduction <add>, %216, %cst_79 [2] : vector<1x16x16xf32> to vector<1x16xf32>
    %218 = vector.shape_cast %217 : vector<1x16xf32> to vector<1x16x1xf32>
    %219 = tpu.reciprocal %218 {approx = true} : vector<1x16x1xf32> -> vector<1x16x1xf32>
    %220 = vector.broadcast %219 : vector<1x16x1xf32> to vector<1x16x16xf32>
    %221 = arith.mulf %216, %220 : vector<1x16x16xf32>
    %222 = arith.truncf %221 : vector<1x16x16xf32> to vector<1x16x16xbf16>
    "tpu.trace_start"() <{level = 10 : i32, message = "bqk,bkd->bqd"}> : () -> ()
    %cst_80 = arith.constant dense<0.000000e+00> : vector<1x16x32xf32>
    %223 = tpu.matmul %222, %207, %cst_80 {dimension_numbers = #tpu.dot_dimension_numbers<[2], [1], [1], [2], [0, 0, 0, 1, 1, 2], [0], [0]>} : vector<1x16x16xbf16>, vector<1x16x32xbf16>, vector<1x16x32xf32> -> vector<1x16x32xf32>
    "tpu.trace_stop"() : () -> ()
    %224 = vector.shape_cast %223 : vector<1x16x32xf32> to vector<16x32xf32>
    %225 = arith.truncf %224 : vector<16x32xf32> to vector<16x32xbf16>
    %226 = vector.extract_strided_slice %201 {offsets = [0, 32], sizes = [16, 32], strides = [1, 1]} : vector<16x384xbf16> to vector<16x32xbf16>
    %227 = vector.shape_cast %226 : vector<16x32xbf16> to vector<1x16x32xbf16>
    %228 = vector.extract_strided_slice %201 {offsets = [0, 160], sizes = [16, 32], strides = [1, 1]} : vector<16x384xbf16> to vector<16x32xbf16>
    %229 = vector.shape_cast %228 : vector<16x32xbf16> to vector<1x16x32xbf16>
    %230 = vector.extract_strided_slice %201 {offsets = [0, 288], sizes = [16, 32], strides = [1, 1]} : vector<16x384xbf16> to vector<16x32xbf16>
    %231 = vector.shape_cast %230 : vector<16x32xbf16> to vector<1x16x32xbf16>
    "tpu.trace_start"() <{level = 10 : i32, message = "bqd,bkd->bqk"}> : () -> ()
    %cst_81 = arith.constant dense<0.000000e+00> : vector<1x16x16xf32>
    %232 = tpu.matmul %227, %229, %cst_81 {dimension_numbers = #tpu.dot_dimension_numbers<[2], [2], [1], [1], [0, 0, 0, 1, 1, 1], [0], [0]>} : vector<1x16x32xbf16>, vector<1x16x32xbf16>, vector<1x16x16xf32> -> vector<1x16x16xf32>
    "tpu.trace_stop"() : () -> ()
    %233 = vector.broadcast %8 : vector<1x1x16xf32> to vector<1x16x16xf32>
    %234 = arith.addf %232, %233 : vector<1x16x16xf32>
    %235 = arith.addf %234, %15 : vector<1x16x16xf32>
    %cst_82 = arith.constant dense<0xFF800000> : vector<1x16xf32>
    %236 = vector.multi_reduction <maximumf>, %235, %cst_82 [2] : vector<1x16x16xf32> to vector<1x16xf32>
    %237 = vector.shape_cast %236 : vector<1x16xf32> to vector<1x16x1xf32>
    %238 = vector.broadcast %237 : vector<1x16x1xf32> to vector<1x16x16xf32>
    %239 = arith.subf %235, %238 : vector<1x16x16xf32>
    %240 = math.exp %239 : vector<1x16x16xf32>
    %cst_83 = arith.constant dense<0.000000e+00> : vector<1x16xf32>
    %241 = vector.multi_reduction <add>, %240, %cst_83 [2] : vector<1x16x16xf32> to vector<1x16xf32>
    %242 = vector.shape_cast %241 : vector<1x16xf32> to vector<1x16x1xf32>
    %243 = tpu.reciprocal %242 {approx = true} : vector<1x16x1xf32> -> vector<1x16x1xf32>
    %244 = vector.broadcast %243 : vector<1x16x1xf32> to vector<1x16x16xf32>
    %245 = arith.mulf %240, %244 : vector<1x16x16xf32>
    %246 = arith.truncf %245 : vector<1x16x16xf32> to vector<1x16x16xbf16>
    "tpu.trace_start"() <{level = 10 : i32, message = "bqk,bkd->bqd"}> : () -> ()
    %cst_84 = arith.constant dense<0.000000e+00> : vector<1x16x32xf32>
    %247 = tpu.matmul %246, %231, %cst_84 {dimension_numbers = #tpu.dot_dimension_numbers<[2], [1], [1], [2], [0, 0, 0, 1, 1, 2], [0], [0]>} : vector<1x16x16xbf16>, vector<1x16x32xbf16>, vector<1x16x32xf32> -> vector<1x16x32xf32>
    "tpu.trace_stop"() : () -> ()
    %248 = vector.shape_cast %247 : vector<1x16x32xf32> to vector<16x32xf32>
    %249 = arith.truncf %248 : vector<16x32xf32> to vector<16x32xbf16>
    %250 = vector.extract_strided_slice %201 {offsets = [0, 64], sizes = [16, 32], strides = [1, 1]} : vector<16x384xbf16> to vector<16x32xbf16>
    %251 = vector.shape_cast %250 : vector<16x32xbf16> to vector<1x16x32xbf16>
    %252 = vector.extract_strided_slice %201 {offsets = [0, 192], sizes = [16, 32], strides = [1, 1]} : vector<16x384xbf16> to vector<16x32xbf16>
    %253 = vector.shape_cast %252 : vector<16x32xbf16> to vector<1x16x32xbf16>
    %254 = vector.extract_strided_slice %201 {offsets = [0, 320], sizes = [16, 32], strides = [1, 1]} : vector<16x384xbf16> to vector<16x32xbf16>
    %255 = vector.shape_cast %254 : vector<16x32xbf16> to vector<1x16x32xbf16>
    "tpu.trace_start"() <{level = 10 : i32, message = "bqd,bkd->bqk"}> : () -> ()
    %cst_85 = arith.constant dense<0.000000e+00> : vector<1x16x16xf32>
    %256 = tpu.matmul %251, %253, %cst_85 {dimension_numbers = #tpu.dot_dimension_numbers<[2], [2], [1], [1], [0, 0, 0, 1, 1, 1], [0], [0]>} : vector<1x16x32xbf16>, vector<1x16x32xbf16>, vector<1x16x16xf32> -> vector<1x16x16xf32>
    "tpu.trace_stop"() : () -> ()
    %257 = vector.broadcast %8 : vector<1x1x16xf32> to vector<1x16x16xf32>
    %258 = arith.addf %256, %257 : vector<1x16x16xf32>
    %259 = arith.addf %258, %15 : vector<1x16x16xf32>
    %cst_86 = arith.constant dense<0xFF800000> : vector<1x16xf32>
    %260 = vector.multi_reduction <maximumf>, %259, %cst_86 [2] : vector<1x16x16xf32> to vector<1x16xf32>
    %261 = vector.shape_cast %260 : vector<1x16xf32> to vector<1x16x1xf32>
    %262 = vector.broadcast %261 : vector<1x16x1xf32> to vector<1x16x16xf32>
    %263 = arith.subf %259, %262 : vector<1x16x16xf32>
    %264 = math.exp %263 : vector<1x16x16xf32>
    %cst_87 = arith.constant dense<0.000000e+00> : vector<1x16xf32>
    %265 = vector.multi_reduction <add>, %264, %cst_87 [2] : vector<1x16x16xf32> to vector<1x16xf32>
    %266 = vector.shape_cast %265 : vector<1x16xf32> to vector<1x16x1xf32>
    %267 = tpu.reciprocal %266 {approx = true} : vector<1x16x1xf32> -> vector<1x16x1xf32>
    %268 = vector.broadcast %267 : vector<1x16x1xf32> to vector<1x16x16xf32>
    %269 = arith.mulf %264, %268 : vector<1x16x16xf32>
    %270 = arith.truncf %269 : vector<1x16x16xf32> to vector<1x16x16xbf16>
    "tpu.trace_start"() <{level = 10 : i32, message = "bqk,bkd->bqd"}> : () -> ()
    %cst_88 = arith.constant dense<0.000000e+00> : vector<1x16x32xf32>
    %271 = tpu.matmul %270, %255, %cst_88 {dimension_numbers = #tpu.dot_dimension_numbers<[2], [1], [1], [2], [0, 0, 0, 1, 1, 2], [0], [0]>} : vector<1x16x16xbf16>, vector<1x16x32xbf16>, vector<1x16x32xf32> -> vector<1x16x32xf32>
    "tpu.trace_stop"() : () -> ()
    %272 = vector.shape_cast %271 : vector<1x16x32xf32> to vector<16x32xf32>
    %273 = arith.truncf %272 : vector<16x32xf32> to vector<16x32xbf16>
    %274 = vector.extract_strided_slice %201 {offsets = [0, 96], sizes = [16, 32], strides = [1, 1]} : vector<16x384xbf16> to vector<16x32xbf16>
    %275 = vector.shape_cast %274 : vector<16x32xbf16> to vector<1x16x32xbf16>
    %276 = vector.extract_strided_slice %201 {offsets = [0, 224], sizes = [16, 32], strides = [1, 1]} : vector<16x384xbf16> to vector<16x32xbf16>
    %277 = vector.shape_cast %276 : vector<16x32xbf16> to vector<1x16x32xbf16>
    %278 = vector.extract_strided_slice %201 {offsets = [0, 352], sizes = [16, 32], strides = [1, 1]} : vector<16x384xbf16> to vector<16x32xbf16>
    %279 = vector.shape_cast %278 : vector<16x32xbf16> to vector<1x16x32xbf16>
    "tpu.trace_start"() <{level = 10 : i32, message = "bqd,bkd->bqk"}> : () -> ()
    %cst_89 = arith.constant dense<0.000000e+00> : vector<1x16x16xf32>
    %280 = tpu.matmul %275, %277, %cst_89 {dimension_numbers = #tpu.dot_dimension_numbers<[2], [2], [1], [1], [0, 0, 0, 1, 1, 1], [0], [0]>} : vector<1x16x32xbf16>, vector<1x16x32xbf16>, vector<1x16x16xf32> -> vector<1x16x16xf32>
    "tpu.trace_stop"() : () -> ()
    %281 = vector.broadcast %8 : vector<1x1x16xf32> to vector<1x16x16xf32>
    %282 = arith.addf %280, %281 : vector<1x16x16xf32>
    %283 = arith.addf %282, %15 : vector<1x16x16xf32>
    %cst_90 = arith.constant dense<0xFF800000> : vector<1x16xf32>
    %284 = vector.multi_reduction <maximumf>, %283, %cst_90 [2] : vector<1x16x16xf32> to vector<1x16xf32>
    %285 = vector.shape_cast %284 : vector<1x16xf32> to vector<1x16x1xf32>
    %286 = vector.broadcast %285 : vector<1x16x1xf32> to vector<1x16x16xf32>
    %287 = arith.subf %283, %286 : vector<1x16x16xf32>
    %288 = math.exp %287 : vector<1x16x16xf32>
    %cst_91 = arith.constant dense<0.000000e+00> : vector<1x16xf32>
    %289 = vector.multi_reduction <add>, %288, %cst_91 [2] : vector<1x16x16xf32> to vector<1x16xf32>
    %290 = vector.shape_cast %289 : vector<1x16xf32> to vector<1x16x1xf32>
    %291 = tpu.reciprocal %290 {approx = true} : vector<1x16x1xf32> -> vector<1x16x1xf32>
    %292 = vector.broadcast %291 : vector<1x16x1xf32> to vector<1x16x16xf32>
    %293 = arith.mulf %288, %292 : vector<1x16x16xf32>
    %294 = arith.truncf %293 : vector<1x16x16xf32> to vector<1x16x16xbf16>
    "tpu.trace_start"() <{level = 10 : i32, message = "bqk,bkd->bqd"}> : () -> ()
    %cst_92 = arith.constant dense<0.000000e+00> : vector<1x16x32xf32>
    %295 = tpu.matmul %294, %279, %cst_92 {dimension_numbers = #tpu.dot_dimension_numbers<[2], [1], [1], [2], [0, 0, 0, 1, 1, 2], [0], [0]>} : vector<1x16x16xbf16>, vector<1x16x32xbf16>, vector<1x16x32xf32> -> vector<1x16x32xf32>
    "tpu.trace_stop"() : () -> ()
    %296 = vector.shape_cast %295 : vector<1x16x32xf32> to vector<16x32xf32>
    %297 = arith.truncf %296 : vector<16x32xf32> to vector<16x32xbf16>
    %298 = tpu.concatenate %225, %249, %273, %297 in 1 : vector<16x32xbf16>, vector<16x32xbf16>, vector<16x32xbf16>, vector<16x32xbf16> -> vector<16x128xbf16>
    %c1_93 = arith.constant 1 : index
    %c0_94 = arith.constant 0 : index
    %c0_95 = arith.constant 0 : index
    %299 = vector.load %arg5[%c1_93, %c0_94, %c0_95] : memref<2x128x128xbf16, #tpu.memory_space<vmem>>, vector<1x128x128xbf16>
    %300 = vector.shape_cast %299 : vector<1x128x128xbf16> to vector<128x128xbf16>
    %cst_96 = arith.constant dense<0.000000e+00> : vector<16x128xf32>
    %301 = tpu.matmul %298, %300, %cst_96 {dimension_numbers = #tpu.dot_dimension_numbers<[1], [0], [0], [1], [0, 0, 1, 1], [], []>} : vector<16x128xbf16>, vector<128x128xbf16>, vector<16x128xf32> -> vector<16x128xf32>
    %302 = arith.addf %196, %301 : vector<16x128xf32>
    %c1_97 = arith.constant 1 : index
    %c0_98 = arith.constant 0 : index
    %c0_99 = arith.constant 0 : index
    %303 = vector.load %arg6[%c1_97, %c0_98, %c0_99] : memref<2x1x128xf32, #tpu.memory_space<vmem>>, vector<1x1x128xf32>
    %304 = vector.shape_cast %303 : vector<1x1x128xf32> to vector<1x128xf32>
    %c1_100 = arith.constant 1 : index
    %c0_101 = arith.constant 0 : index
    %c0_102 = arith.constant 0 : index
    %305 = vector.load %arg7[%c1_100, %c0_101, %c0_102] : memref<2x1x128xf32, #tpu.memory_space<vmem>>, vector<1x1x128xf32>
    %306 = vector.shape_cast %305 : vector<1x1x128xf32> to vector<1x128xf32>
    %cst_103 = arith.constant dense<0.000000e+00> : vector<16xf32>
    %307 = vector.multi_reduction <add>, %302, %cst_103 [1] : vector<16x128xf32> to vector<16xf32>
    %308 = vector.shape_cast %307 : vector<16xf32> to vector<16x1xf32>
    %cst_104 = arith.constant 1.280000e+02 : f32
    %309 = vector.broadcast %cst_104 : f32 to vector<16x1xf32>
    %310 = arith.divf %308, %309 : vector<16x1xf32>
    %311 = arith.mulf %302, %302 : vector<16x128xf32>
    %cst_105 = arith.constant dense<0.000000e+00> : vector<16xf32>
    %312 = vector.multi_reduction <add>, %311, %cst_105 [1] : vector<16x128xf32> to vector<16xf32>
    %313 = vector.shape_cast %312 : vector<16xf32> to vector<16x1xf32>
    %cst_106 = arith.constant 1.280000e+02 : f32
    %314 = vector.broadcast %cst_106 : f32 to vector<16x1xf32>
    %315 = arith.divf %313, %314 : vector<16x1xf32>
    %316 = arith.mulf %310, %310 : vector<16x1xf32>
    %317 = arith.subf %315, %316 : vector<16x1xf32>
    %cst_107 = arith.constant 0.000000e+00 : f32
    %318 = vector.broadcast %cst_107 : f32 to vector<16x1xf32>
    %319 = arith.maximumf %317, %318 : vector<16x1xf32>
    %320 = vector.broadcast %310 : vector<16x1xf32> to vector<16x128xf32>
    %321 = arith.subf %302, %320 : vector<16x128xf32>
    %cst_108 = arith.constant 9.99999997E-7 : f32
    %322 = vector.broadcast %cst_108 : f32 to vector<16x1xf32>
    %323 = arith.addf %319, %322 : vector<16x1xf32>
    %324 = math.rsqrt %323 : vector<16x1xf32>
    %325 = vector.broadcast %324 : vector<16x1xf32> to vector<16x128xf32>
    %326 = arith.mulf %321, %325 : vector<16x128xf32>
    %327 = vector.broadcast %304 : vector<1x128xf32> to vector<16x128xf32>
    %328 = arith.mulf %326, %327 : vector<16x128xf32>
    %329 = vector.broadcast %306 : vector<1x128xf32> to vector<16x128xf32>
    %330 = arith.addf %328, %329 : vector<16x128xf32>
    %331 = arith.truncf %330 : vector<16x128xf32> to vector<16x128xbf16>
    %c1_109 = arith.constant 1 : index
    %c0_110 = arith.constant 0 : index
    %c0_111 = arith.constant 0 : index
    %332 = vector.load %arg8[%c1_109, %c0_110, %c0_111] : memref<2x128x256xbf16, #tpu.memory_space<vmem>>, vector<1x128x256xbf16>
    %333 = vector.shape_cast %332 : vector<1x128x256xbf16> to vector<128x256xbf16>
    %cst_112 = arith.constant dense<0.000000e+00> : vector<16x256xf32>
    %334 = tpu.matmul %331, %333, %cst_112 {dimension_numbers = #tpu.dot_dimension_numbers<[1], [0], [0], [1], [0, 0, 1, 1], [], []>} : vector<16x128xbf16>, vector<128x256xbf16>, vector<16x256xf32> -> vector<16x256xf32>
    %c1_113 = arith.constant 1 : index
    %c0_114 = arith.constant 0 : index
    %c0_115 = arith.constant 0 : index
    %335 = vector.load %arg9[%c1_113, %c0_114, %c0_115] : memref<2x1x256xf32, #tpu.memory_space<vmem>>, vector<1x1x256xf32>
    %336 = vector.shape_cast %335 : vector<1x1x256xf32> to vector<1x256xf32>
    %337 = vector.broadcast %336 : vector<1x256xf32> to vector<16x256xf32>
    %338 = arith.addf %334, %337 : vector<16x256xf32>
    %cst_116 = arith.constant 0.000000e+00 : f32
    %339 = vector.broadcast %cst_116 : f32 to vector<16x256xf32>
    %340 = arith.maximumf %338, %339 : vector<16x256xf32>
    %341 = arith.truncf %340 : vector<16x256xf32> to vector<16x256xbf16>
    %c1_117 = arith.constant 1 : index
    %c0_118 = arith.constant 0 : index
    %c0_119 = arith.constant 0 : index
    %342 = vector.load %arg10[%c1_117, %c0_118, %c0_119] : memref<2x256x128xbf16, #tpu.memory_space<vmem>>, vector<1x256x128xbf16>
    %343 = vector.shape_cast %342 : vector<1x256x128xbf16> to vector<256x128xbf16>
    %cst_120 = arith.constant dense<0.000000e+00> : vector<16x128xf32>
    %344 = tpu.matmul %341, %343, %cst_120 {dimension_numbers = #tpu.dot_dimension_numbers<[1], [0], [0], [1], [0, 0, 1, 1], [], []>} : vector<16x256xbf16>, vector<256x128xbf16>, vector<16x128xf32> -> vector<16x128xf32>
    %c1_121 = arith.constant 1 : index
    %c0_122 = arith.constant 0 : index
    %c0_123 = arith.constant 0 : index
    %345 = vector.load %arg11[%c1_121, %c0_122, %c0_123] : memref<2x1x128xf32, #tpu.memory_space<vmem>>, vector<1x1x128xf32>
    %346 = vector.shape_cast %345 : vector<1x1x128xf32> to vector<1x128xf32>
    %347 = vector.broadcast %346 : vector<1x128xf32> to vector<16x128xf32>
    %348 = arith.addf %344, %347 : vector<16x128xf32>
    %349 = arith.addf %330, %348 : vector<16x128xf32>
    %c1_124 = arith.constant 1 : index
    %c0_125 = arith.constant 0 : index
    %c0_126 = arith.constant 0 : index
    %350 = vector.load %arg12[%c1_124, %c0_125, %c0_126] : memref<2x1x128xf32, #tpu.memory_space<vmem>>, vector<1x1x128xf32>
    %351 = vector.shape_cast %350 : vector<1x1x128xf32> to vector<1x128xf32>
    %c1_127 = arith.constant 1 : index
    %c0_128 = arith.constant 0 : index
    %c0_129 = arith.constant 0 : index
    %352 = vector.load %arg13[%c1_127, %c0_128, %c0_129] : memref<2x1x128xf32, #tpu.memory_space<vmem>>, vector<1x1x128xf32>
    %353 = vector.shape_cast %352 : vector<1x1x128xf32> to vector<1x128xf32>
    %cst_130 = arith.constant dense<0.000000e+00> : vector<16xf32>
    %354 = vector.multi_reduction <add>, %349, %cst_130 [1] : vector<16x128xf32> to vector<16xf32>
    %355 = vector.shape_cast %354 : vector<16xf32> to vector<16x1xf32>
    %cst_131 = arith.constant 1.280000e+02 : f32
    %356 = vector.broadcast %cst_131 : f32 to vector<16x1xf32>
    %357 = arith.divf %355, %356 : vector<16x1xf32>
    %358 = arith.mulf %349, %349 : vector<16x128xf32>
    %cst_132 = arith.constant dense<0.000000e+00> : vector<16xf32>
    %359 = vector.multi_reduction <add>, %358, %cst_132 [1] : vector<16x128xf32> to vector<16xf32>
    %360 = vector.shape_cast %359 : vector<16xf32> to vector<16x1xf32>
    %cst_133 = arith.constant 1.280000e+02 : f32
    %361 = vector.broadcast %cst_133 : f32 to vector<16x1xf32>
    %362 = arith.divf %360, %361 : vector<16x1xf32>
    %363 = arith.mulf %357, %357 : vector<16x1xf32>
    %364 = arith.subf %362, %363 : vector<16x1xf32>
    %cst_134 = arith.constant 0.000000e+00 : f32
    %365 = vector.broadcast %cst_134 : f32 to vector<16x1xf32>
    %366 = arith.maximumf %364, %365 : vector<16x1xf32>
    %367 = vector.broadcast %357 : vector<16x1xf32> to vector<16x128xf32>
    %368 = arith.subf %349, %367 : vector<16x128xf32>
    %cst_135 = arith.constant 9.99999997E-7 : f32
    %369 = vector.broadcast %cst_135 : f32 to vector<16x1xf32>
    %370 = arith.addf %366, %369 : vector<16x1xf32>
    %371 = math.rsqrt %370 : vector<16x1xf32>
    %372 = vector.broadcast %371 : vector<16x1xf32> to vector<16x128xf32>
    %373 = arith.mulf %368, %372 : vector<16x128xf32>
    %374 = vector.broadcast %351 : vector<1x128xf32> to vector<16x128xf32>
    %375 = arith.mulf %373, %374 : vector<16x128xf32>
    %376 = vector.broadcast %353 : vector<1x128xf32> to vector<16x128xf32>
    %377 = arith.addf %375, %376 : vector<16x128xf32>
    %378 = vector.shape_cast %377 : vector<16x128xf32> to vector<1x16x128xf32>
    %c0_136 = arith.constant 0 : index
    %c0_137 = arith.constant 0 : index
    %c0_138 = arith.constant 0 : index
    %379 = vector.load %arg14[%c0_136, %c0_137, %c0_138] : memref<1x16x128xf32, #tpu.memory_space<vmem>>, vector<1x16x128xf32>
    tpu.vector_store %arg14[%c0_136, %c0_137, %c0_138], %378 {strides = array<i32>} : memref<1x16x128xf32, #tpu.memory_space<vmem>>, vector<1x16x128xf32>,
    return
  }
  func.func @transform_0(%arg0: i32) -> (i32, i32, i32) {
    %c0_i32 = arith.constant 0 : i32
    %c0_i32_0 = arith.constant 0 : i32
    %c0_i32_1 = arith.constant 0 : i32
    return %arg0, %c0_i32, %c0_i32_0 : i32, i32, i32
  }
  func.func @transform_1(%arg0: i32) -> (i32, i32, i32) {
    %c0_i32 = arith.constant 0 : i32
    %c0_i32_0 = arith.constant 0 : i32
    %c0_i32_1 = arith.constant 0 : i32
    return %arg0, %c0_i32, %c0_i32_0 : i32, i32, i32
  }
  func.func @transform_2(%arg0: i32) -> (i32, i32) {
    %c0_i32 = arith.constant 0 : i32
    %c0_i32_0 = arith.constant 0 : i32
    %c0_i32_1 = arith.constant 0 : i32
    return %c0_i32, %c0_i32_0 : i32, i32
  }
  func.func @transform_3(%arg0: i32) -> (i32, i32, i32) {
    %c0_i32 = arith.constant 0 : i32
    %c0_i32_0 = arith.constant 0 : i32
    %c0_i32_1 = arith.constant 0 : i32
    %c0_i32_2 = arith.constant 0 : i32
    return %c0_i32, %c0_i32_0, %c0_i32_1 : i32, i32, i32
  }
  func.func @transform_4(%arg0: i32) -> (i32, i32, i32) {
    %c0_i32 = arith.constant 0 : i32
    %c0_i32_0 = arith.constant 0 : i32
    %c0_i32_1 = arith.constant 0 : i32
    %c0_i32_2 = arith.constant 0 : i32
    return %c0_i32, %c0_i32_0, %c0_i32_1 : i32, i32, i32
  }
  func.func @transform_5(%arg0: i32) -> (i32, i32, i32) {
    %c0_i32 = arith.constant 0 : i32
    %c0_i32_0 = arith.constant 0 : i32
    %c0_i32_1 = arith.constant 0 : i32
    %c0_i32_2 = arith.constant 0 : i32
    return %c0_i32, %c0_i32_0, %c0_i32_1 : i32, i32, i32
  }
  func.func @transform_6(%arg0: i32) -> (i32, i32, i32) {
    %c0_i32 = arith.constant 0 : i32
    %c0_i32_0 = arith.constant 0 : i32
    %c0_i32_1 = arith.constant 0 : i32
    %c0_i32_2 = arith.constant 0 : i32
    return %c0_i32, %c0_i32_0, %c0_i32_1 : i32, i32, i32
  }
  func.func @transform_7(%arg0: i32) -> (i32, i32, i32) {
    %c0_i32 = arith.constant 0 : i32
    %c0_i32_0 = arith.constant 0 : i32
    %c0_i32_1 = arith.constant 0 : i32
    %c0_i32_2 = arith.constant 0 : i32
    return %c0_i32, %c0_i32_0, %c0_i32_1 : i32, i32, i32
  }
  func.func @transform_8(%arg0: i32) -> (i32, i32, i32) {
    %c0_i32 = arith.constant 0 : i32
    %c0_i32_0 = arith.constant 0 : i32
    %c0_i32_1 = arith.constant 0 : i32
    %c0_i32_2 = arith.constant 0 : i32
    return %c0_i32, %c0_i32_0, %c0_i32_1 : i32, i32, i32
  }
  func.func @transform_9(%arg0: i32) -> (i32, i32, i32) {
    %c0_i32 = arith.constant 0 : i32
    %c0_i32_0 = arith.constant 0 : i32
    %c0_i32_1 = arith.constant 0 : i32
    %c0_i32_2 = arith.constant 0 : i32
    return %c0_i32, %c0_i32_0, %c0_i32_1 : i32, i32, i32
  }
  func.func @transform_10(%arg0: i32) -> (i32, i32, i32) {
    %c0_i32 = arith.constant 0 : i32
    %c0_i32_0 = arith.constant 0 : i32
    %c0_i32_1 = arith.constant 0 : i32
    %c0_i32_2 = arith.constant 0 : i32
    return %c0_i32, %c0_i32_0, %c0_i32_1 : i32, i32, i32
  }
  func.func @transform_11(%arg0: i32) -> (i32, i32, i32) {
    %c0_i32 = arith.constant 0 : i32
    %c0_i32_0 = arith.constant 0 : i32
    %c0_i32_1 = arith.constant 0 : i32
    %c0_i32_2 = arith.constant 0 : i32
    return %c0_i32, %c0_i32_0, %c0_i32_1 : i32, i32, i32
  }
  func.func @transform_12(%arg0: i32) -> (i32, i32, i32) {
    %c0_i32 = arith.constant 0 : i32
    %c0_i32_0 = arith.constant 0 : i32
    %c0_i32_1 = arith.constant 0 : i32
    %c0_i32_2 = arith.constant 0 : i32
    return %c0_i32, %c0_i32_0, %c0_i32_1 : i32, i32, i32
  }
  func.func @transform_13(%arg0: i32) -> (i32, i32, i32) {
    %c0_i32 = arith.constant 0 : i32
    %c0_i32_0 = arith.constant 0 : i32
    %c0_i32_1 = arith.constant 0 : i32
    return %arg0, %c0_i32, %c0_i32_0 : i32, i32, i32
  }
}

</mosaic_0001>

<llo_original>
// kernel: graph_paraff_encoder.1
$region0: #{graph_paraff_encoder.1}
  #allocation0 [shape = 'u32[]', space=smem, size = 0x4, offset = 0x4, fixed_abs, tag = 'smem constant byte address 0x4 - core index']
  #allocation1 [shape = 'u32[144,128]{1,0:T(1,128)}', space=vmem, size = 0x12000, scoped, tag = 'internal scratch']
  %s0 = inlined_call_operand.vmem [shape: bf16[2,16,384], index: 0, kind: input, shape index: {}]
  %s1 = inlined_call_operand.vmem [shape: f32[2,1,16], index: 1, kind: input, shape index: {}]
  %s2 = inlined_call_operand.hbm [shape: bf16[384,128], index: 2, kind: input, shape index: {}]
  %s3 = inlined_call_operand.vmem [shape: bf16[2,128,384], index: 3, kind: input, shape index: {}]
  %s4 = inlined_call_operand.vmem [shape: bf16[2,128,128], index: 4, kind: input, shape index: {}]
  %s5 = inlined_call_operand.vmem [shape: f32[2,1,128], index: 5, kind: input, shape index: {}]
  %s6 = inlined_call_operand.vmem [shape: f32[2,1,128], index: 6, kind: input, shape index: {}]
  %s7 = inlined_call_operand.hbm [shape: bf16[2,128,256], index: 7, kind: input, shape index: {}]
  %s8 = inlined_call_operand.vmem [shape: f32[2,1,256], index: 8, kind: input, shape index: {}]
  %s9 = inlined_call_operand.hbm [shape: bf16[2,256,128], index: 9, kind: input, shape index: {}]
  %s10 = inlined_call_operand.vmem [shape: f32[2,1,128], index: 10, kind: input, shape index: {}]
  %s11 = inlined_call_operand.vmem [shape: f32[2,1,128], index: 11, kind: input, shape index: {}]
  %s12 = inlined_call_operand.vmem [shape: f32[2,1,128], index: 12, kind: input, shape index: {}]
  %s13 = inlined_call_operand.hbm [shape: f32[2,16,128], index: 13, kind: output, shape index: {}]
  %s14 = sld [smem:[#allocation0]]
  $region97: #{graph_paraff_encoder.1} parent=0
    _
  %s16 = ssub.s32 1, %s14
  %s17 = scalar_select 0, %s16, %s14
  $region1: #{graph_paraff_encoder.1} parent=0
    #allocation2 [shape = 'u8[98304]{0}', space=vmem, size = 0x18000, scoped, tag = 'input window, operand 2, single buffered']
    #allocation3 [shape = 's32[2]{0}', space=sflag, size = 0x8, scoped, tag = 'scoped memory for graph_paraff_encoder.1']
    #allocation4 [shape = 's32[2]{0}', space=sflag, size = 0x8, scoped, tag = 'scoped memory for graph_paraff_encoder.1']
    #allocation5 [shape = 'u8[131072]{0}', space=vmem, size = 0x20000, scoped, tag = 'input window, operand 7, single buffered']
    #allocation6 [shape = 's32[1]{0}', space=sflag, size = 0x4, scoped, tag = 'scoped memory for graph_paraff_encoder.1']
    #allocation7 [shape = 'u8[131072]{0}', space=vmem, size = 0x20000, scoped, tag = 'input window, operand 9, single buffered']
    #allocation8 [shape = 'u8[16384]{0}', space=vmem, size = 0x4000, scoped, tag = 'output window, operand 0']
    %18 = vsyncpa [#allocation3], 0
    %19 = vsyncpa [#allocation6], 0
    %20 = vsyncpa [#allocation4], 0
    %s21 = scalar_lea.sflag [#allocation4], 1
    %22 = vsyncpa %s21, 0
    loop: start=0, step=1, limit=4
    $region2: #{graph_paraff_encoder.1} parent=1 // loop_pre_header
      _
    $region3: #{graph_paraff_encoder.1} parent=1 // loop_header
      %s24 = sphi 0, %s28
      %p25 = scmp.ge.s32.totalorder %s24, 4
      %s34 = sphi 0, %s36
      %s37 = sphi 0, %s34
      %s38 = sphi 0, %s37
      %s54 = sphi 0, %s38
      %s60 = sphi 0, %s62
      %s63 = sphi 0, %s60
      %s64 = sphi 0, %s63
      %s80 = sphi 0, %s64
      %s84 = sphi 0, %s84
      %s86 = sphi 0, %s84
      %s87 = sphi 0, %s86
      %s101 = sphi 0, %s87
      %s105 = sphi 0, %s105
      %s107 = sphi 0, %s105
      %s108 = sphi 0, %s107
      %s122 = sphi 0, %s108
      %s126 = sphi 0, %s126
      %s128 = sphi 0, %s126
      %s129 = sphi 0, %s128
      %s143 = sphi 0, %s129
      %s147 = sphi 0, %s147
      %s149 = sphi 0, %s147
      %s150 = sphi 0, %s149
      %s164 = sphi 0, %s150
      %s168 = sphi 0, %s168
      %s170 = sphi 0, %s168
      %s171 = sphi 0, %s170
      %s185 = sphi 0, %s171
      %s189 = sphi 0, %s189
      %s191 = sphi 0, %s189
      %s192 = sphi 0, %s191
      %s206 = sphi 0, %s192
      %s210 = sphi 0, %s210
      %s212 = sphi 0, %s210
      %s213 = sphi 0, %s212
      %s227 = sphi 0, %s213
      %s231 = sphi 0, %s231
      %s233 = sphi 0, %s231
      %s234 = sphi 0, %s233
      %s248 = sphi 0, %s234
      %s252 = sphi 0, %s252
      %s254 = sphi 0, %s252
      %s255 = sphi 0, %s254
      %s269 = sphi 0, %s255
      %s273 = sphi 0, %s273
      %s275 = sphi 0, %s273
      %s276 = sphi 0, %s275
      %s290 = sphi 0, %s276
      %s294 = sphi 0, %s294
      %s296 = sphi 0, %s294
      %s297 = sphi 0, %s296
      %s311 = sphi 0, %s297
      %s317 = sphi 0, %s319
      %s320 = sphi 0, %s317
      %s321 = sphi 0, %s320
      %s337 = sphi 0, %s321
    $region4: #{graph_paraff_encoder.1} parent=1 // loop_header_branch
      %27 = sbr.rel (%p25) target = $region8
    $region5: #{graph_paraff_encoder.1} parent=1 // loop_body
      %s29 = ssub.s32 %s24, 1
      %s30 = ssub.s32 %s24, 2
      %s31 = sadd.s32 %s24, 1
      %s32 = ssub.s32 %s24, %s31
      %p33 = scmp.eq.s32.totalorder %s32, 0
      %s35 = sadd.s32 %s34, 1
      %s36 = scalar_select %p33, %s34, %s35
      %p39 = pneg %p33
      %p40 = scmp.eq.s32.totalorder %s24, 1
      %p41 = por %p39, %p40
      %p42 = scmp.ne.s32.totalorder %s34, %s37
      %p43 = scmp.eq.s32.totalorder %s24, 0
      %p44 = por %p42, %p43
      %p45 = scmp.ne.s32.totalorder %s34, %s37
      %p46 = scmp.eq.s32.totalorder %s29, 1
      %p47 = por %p45, %p46
      %p48 = scmp.ne.s32.totalorder %s37, %s38
      %p49 = scmp.eq.s32.totalorder %s29, 0
      %p50 = por %p48, %p49
      %p51 = scmp.ne.s32.totalorder %s37, %s38
      %p52 = scmp.eq.s32.totalorder %s30, 1
      %p53 = por %p51, %p52
      %p55 = scmp.ne.s32.totalorder %s38, %s54
      %p56 = scmp.eq.s32.totalorder %s30, 0
      %p57 = por %p55, %p56
      %s58 = ssub.s32 %s24, %s31
      %p59 = scmp.eq.s32.totalorder %s58, 0
      %s61 = sadd.s32 %s60, 1
      %s62 = scalar_select %p59, %s60, %s61
      %p65 = pneg %p59
      %p66 = scmp.eq.s32.totalorder %s24, 1
      %p67 = por %p65, %p66
      %p68 = scmp.ne.s32.totalorder %s60, %s63
      %p69 = scmp.eq.s32.totalorder %s24, 0
      %p70 = por %p68, %p69
      %p71 = scmp.ne.s32.totalorder %s60, %s63
      %p72 = scmp.eq.s32.totalorder %s29, 1
      %p73 = por %p71, %p72
      %p74 = scmp.ne.s32.totalorder %s63, %s64
      %p75 = scmp.eq.s32.totalorder %s29, 0
      %p76 = por %p74, %p75
      %p77 = scmp.ne.s32.totalorder %s63, %s64
      %p78 = scmp.eq.s32.totalorder %s30, 1
      %p79 = por %p77, %p78
      %p81 = scmp.ne.s32.totalorder %s64, %s80
      %p82 = scmp.eq.s32.totalorder %s30, 0
      %p83 = por %p81, %p82
      %s85 = sadd.s32 %s84, 1
      %p88 = scmp.eq.s32.totalorder %s24, 1
      %p89 = scmp.ne.s32.totalorder %s84, %s86
      %p90 = scmp.eq.s32.totalorder %s24, 0
      %p91 = por %p89, %p90
      %p92 = scmp.ne.s32.totalorder %s84, %s86
      %p93 = scmp.eq.s32.totalorder %s29, 1
      %p94 = por %p92, %p93
      %p95 = scmp.ne.s32.totalorder %s86, %s87
      %p96 = scmp.eq.s32.totalorder %s29, 0
      %p97 = por %p95, %p96
      %p98 = scmp.ne.s32.totalorder %s86, %s87
      %p99 = scmp.eq.s32.totalorder %s30, 1
      %p100 = por %p98, %p99
      %p102 = scmp.ne.s32.totalorder %s87, %s101
      %p103 = scmp.eq.s32.totalorder %s30, 0
      %p104 = por %p102, %p103
      %s106 = sadd.s32 %s105, 1
      %p109 = scmp.eq.s32.totalorder %s24, 1
      %p110 = scmp.ne.s32.totalorder %s105, %s107
      %p111 = scmp.eq.s32.totalorder %s24, 0
      %p112 = por %p110, %p111
      %p113 = scmp.ne.s32.totalorder %s105, %s107
      %p114 = scmp.eq.s32.totalorder %s29, 1
      %p115 = por %p113, %p114
      %p116 = scmp.ne.s32.totalorder %s107, %s108
      %p117 = scmp.eq.s32.totalorder %s29, 0
      %p118 = por %p116, %p117
      %p119 = scmp.ne.s32.totalorder %s107, %s108
      %p120 = scmp.eq.s32.totalorder %s30, 1
      %p121 = por %p119, %p120
      %p123 = scmp.ne.s32.totalorder %s108, %s122
      %p124 = scmp.eq.s32.totalorder %s30, 0
      %p125 = por %p123, %p124
      %s127 = sadd.s32 %s126, 1
      %p130 = scmp.eq.s32.totalorder %s24, 1
      %p131 = scmp.ne.s32.totalorder %s126, %s128
      %p132 = scmp.eq.s32.totalorder %s24, 0
      %p133 = por %p131, %p132
      %p134 = scmp.ne.s32.totalorder %s126, %s128
      %p135 = scmp.eq.s32.totalorder %s29, 1
      %p136 = por %p134, %p135
      %p137 = scmp.ne.s32.totalorder %s128, %s129
      %p138 = scmp.eq.s32.totalorder %s29, 0
      %p139 = por %p137, %p138
      %p140 = scmp.ne.s32.totalorder %s128, %s129
      %p141 = scmp.eq.s32.totalorder %s30, 1
      %p142 = por %p140, %p141
      %p144 = scmp.ne.s32.totalorder %s129, %s143
      %p145 = scmp.eq.s32.totalorder %s30, 0
      %p146 = por %p144, %p145
      %s148 = sadd.s32 %s147, 1
      %p151 = scmp.eq.s32.totalorder %s24, 1
      %p152 = scmp.ne.s32.totalorder %s147, %s149
      %p153 = scmp.eq.s32.totalorder %s24, 0
      %p154 = por %p152, %p153
      %p155 = scmp.ne.s32.totalorder %s147, %s149
      %p156 = scmp.eq.s32.totalorder %s29, 1
      %p157 = por %p155, %p156
      %p158 = scmp.ne.s32.totalorder %s149, %s150
      %p159 = scmp.eq.s32.totalorder %s29, 0
      %p160 = por %p158, %p159
      %p161 = scmp.ne.s32.totalorder %s149, %s150
      %p162 = scmp.eq.s32.totalorder %s30, 1
      %p163 = por %p161, %p162
      %p165 = scmp.ne.s32.totalorder %s150, %s164
      %p166 = scmp.eq.s32.totalorder %s30, 0
      %p167 = por %p165, %p166
      %s169 = sadd.s32 %s168, 1
      %p172 = scmp.eq.s32.totalorder %s24, 1
      %p173 = scmp.ne.s32.totalorder %s168, %s170
      %p174 = scmp.eq.s32.totalorder %s24, 0
      %p175 = por %p173, %p174
      %p176 = scmp.ne.s32.totalorder %s168, %s170
      %p177 = scmp.eq.s32.totalorder %s29, 1
      %p178 = por %p176, %p177
      %p179 = scmp.ne.s32.totalorder %s170, %s171
      %p180 = scmp.eq.s32.totalorder %s29, 0
      %p181 = por %p179, %p180
      %p182 = scmp.ne.s32.totalorder %s170, %s171
      %p183 = scmp.eq.s32.totalorder %s30, 1
      %p184 = por %p182, %p183
      %p186 = scmp.ne.s32.totalorder %s171, %s185
      %p187 = scmp.eq.s32.totalorder %s30, 0
      %p188 = por %p186, %p187
      %s190 = sadd.s32 %s189, 1
      %p193 = scmp.eq.s32.totalorder %s24, 1
      %p194 = scmp.ne.s32.totalorder %s189, %s191
      %p195 = scmp.eq.s32.totalorder %s24, 0
      %p196 = por %p194, %p195
      %p197 = scmp.ne.s32.totalorder %s189, %s191
      %p198 = scmp.eq.s32.totalorder %s29, 1
      %p199 = por %p197, %p198
      %p200 = scmp.ne.s32.totalorder %s191, %s192
      %p201 = scmp.eq.s32.totalorder %s29, 0
      %p202 = por %p200, %p201
      %p203 = scmp.ne.s32.totalorder %s191, %s192
      %p204 = scmp.eq.s32.totalorder %s30, 1
      %p205 = por %p203, %p204
      %p207 = scmp.ne.s32.totalorder %s192, %s206
      %p208 = scmp.eq.s32.totalorder %s30, 0
      %p209 = por %p207, %p208
      %s211 = sadd.s32 %s210, 1
      %p214 = scmp.eq.s32.totalorder %s24, 1
      %p215 = scmp.ne.s32.totalorder %s210, %s212
      %p216 = scmp.eq.s32.totalorder %s24, 0
      %p217 = por %p215, %p216
      %p218 = scmp.ne.s32.totalorder %s210, %s212
      %p219 = scmp.eq.s32.totalorder %s29, 1
      %p220 = por %p218, %p219
      %p221 = scmp.ne.s32.totalorder %s212, %s213
      %p222 = scmp.eq.s32.totalorder %s29, 0
      %p223 = por %p221, %p222
      %p224 = scmp.ne.s32.totalorder %s212, %s213
      %p225 = scmp.eq.s32.totalorder %s30, 1
      %p226 = por %p224, %p225
      %p228 = scmp.ne.s32.totalorder %s213, %s227
      %p229 = scmp.eq.s32.totalorder %s30, 0
      %p230 = por %p228, %p229
      %s232 = sadd.s32 %s231, 1
      %p235 = scmp.eq.s32.totalorder %s24, 1
      %p236 = scmp.ne.s32.totalorder %s231, %s233
      %p237 = scmp.eq.s32.totalorder %s24, 0
      %p238 = por %p236, %p237
      %p239 = scmp.ne.s32.totalorder %s231, %s233
      %p240 = scmp.eq.s32.totalorder %s29, 1
      %p241 = por %p239, %p240
      %p242 = scmp.ne.s32.totalorder %s233, %s234
      %p243 = scmp.eq.s32.totalorder %s29, 0
      %p244 = por %p242, %p243
      %p245 = scmp.ne.s32.totalorder %s233, %s234
      %p246 = scmp.eq.s32.totalorder %s30, 1
      %p247 = por %p245, %p246
      %p249 = scmp.ne.s32.totalorder %s234, %s248
      %p250 = scmp.eq.s32.totalorder %s30, 0
      %p251 = por %p249, %p250
      %s253 = sadd.s32 %s252, 1
      %p256 = scmp.eq.s32.totalorder %s24, 1
      %p257 = scmp.ne.s32.totalorder %s252, %s254
      %p258 = scmp.eq.s32.totalorder %s24, 0
      %p259 = por %p257, %p258
      %p260 = scmp.ne.s32.totalorder %s252, %s254
      %p261 = scmp.eq.s32.totalorder %s29, 1
      %p262 = por %p260, %p261
      %p263 = scmp.ne.s32.totalorder %s254, %s255
      %p264 = scmp.eq.s32.totalorder %s29, 0
      %p265 = por %p263, %p264
      %p266 = scmp.ne.s32.totalorder %s254, %s255
      %p267 = scmp.eq.s32.totalorder %s30, 1
      %p268 = por %p266, %p267
      %p270 = scmp.ne.s32.totalorder %s255, %s269
      %p271 = scmp.eq.s32.totalorder %s30, 0
      %p272 = por %p270, %p271
      %s274 = sadd.s32 %s273, 1
      %p277 = scmp.eq.s32.totalorder %s24, 1
      %p278 = scmp.ne.s32.totalorder %s273, %s275
      %p279 = scmp.eq.s32.totalorder %s24, 0
      %p280 = por %p278, %p279
      %p281 = scmp.ne.s32.totalorder %s273, %s275
      %p282 = scmp.eq.s32.totalorder %s29, 1
      %p283 = por %p281, %p282
      %p284 = scmp.ne.s32.totalorder %s275, %s276
      %p285 = scmp.eq.s32.totalorder %s29, 0
      %p286 = por %p284, %p285
      %p287 = scmp.ne.s32.totalorder %s275, %s276
      %p288 = scmp.eq.s32.totalorder %s30, 1
      %p289 = por %p287, %p288
      %p291 = scmp.ne.s32.totalorder %s276, %s290
      %p292 = scmp.eq.s32.totalorder %s30, 0
      %p293 = por %p291, %p292
      %s295 = sadd.s32 %s294, 1
      %p298 = scmp.eq.s32.totalorder %s24, 1
      %p299 = scmp.ne.s32.totalorder %s294, %s296
      %p300 = scmp.eq.s32.totalorder %s24, 0
      %p301 = por %p299, %p300
      %p302 = scmp.ne.s32.totalorder %s294, %s296
      %p303 = scmp.eq.s32.totalorder %s29, 1
      %p304 = por %p302, %p303
      %p305 = scmp.ne.s32.totalorder %s296, %s297
      %p306 = scmp.eq.s32.totalorder %s29, 0
      %p307 = por %p305, %p306
      %p308 = scmp.ne.s32.totalorder %s296, %s297
      %p309 = scmp.eq.s32.totalorder %s30, 1
      %p310 = por %p308, %p309
      %p312 = scmp.ne.s32.totalorder %s297, %s311
      %p313 = scmp.eq.s32.totalorder %s30, 0
      %p314 = por %p312, %p313
      %s315 = ssub.s32 %s24, %s31
      %p316 = scmp.eq.s32.totalorder %s315, 0
      %s318 = sadd.s32 %s317, 1
      %s319 = scalar_select %p316, %s317, %s318
      %p322 = pneg %p316
      %p323 = scmp.eq.s32.totalorder %s24, 1
      %p324 = por %p322, %p323
      %p325 = scmp.ne.s32.totalorder %s317, %s320
      %p326 = scmp.eq.s32.totalorder %s24, 0
      %p327 = por %p325, %p326
      %p328 = scmp.ne.s32.totalorder %s317, %s320
      %p329 = scmp.eq.s32.totalorder %s29, 1
      %p330 = por %p328, %p329
      %p331 = scmp.ne.s32.totalorder %s320, %s321
      %p332 = scmp.eq.s32.totalorder %s29, 0
      %p333 = por %p331, %p332
      %p334 = scmp.ne.s32.totalorder %s320, %s321
      %p335 = scmp.eq.s32.totalorder %s30, 1
      %p336 = por %p334, %p335
      %p338 = scmp.ne.s32.totalorder %s321, %s337
      %p339 = scmp.eq.s32.totalorder %s30, 0
      %p340 = por %p338, %p339
      %p341 = scmp.le.s32.totalorder 1, %s24
      %p342 = scmp.lt.s32.totalorder %s24, 3
      %p343 = pnand %p341, %p342
      %p344 = pneg %p343
      // Predicated region
      $region9: #{graph_paraff_encoder.1} parent=5 // pred_check
        _
      $region10: #{graph_paraff_encoder.1} parent=5 // pred_check_branch
        %346 = sbr.rel (%p343) target = $region12
      $region11: #{graph_paraff_encoder.1} parent=5 // pred_region
        %s347 = ssub.s32 %s24, 1
        // Predicated region
        $region13: #{graph_paraff_encoder.1} parent=11 // pred_check
          %p348 = pneg %p97
        $region14: #{graph_paraff_encoder.1} parent=11 // pred_check_branch
          %350 = sbr.rel (%p348) target = $region16
        $region15: #{graph_paraff_encoder.1} parent=11 // pred_region
          %s352 = ssub.s32 3072, 3072
          %353 = vsyncadd [#allocation3], %s352
          %s354 = sshll.u32 [#allocation2], 4
          %s355 = int_to_ptr.vmem [resolvable:$true] %s354
          %360 = dma.hbm_to_vmem [thread:$0]  %s2, 3072, %s355, [#allocation3], 64, 64, 4
        $region16: #{graph_paraff_encoder.1} parent=11 // pred_fallthru
          _
        // Predicated region
        $region17: #{graph_paraff_encoder.1} parent=11 // pred_check
          %p361 = pneg %p118
        $region18: #{graph_paraff_encoder.1} parent=11 // pred_check_branch
          %363 = sbr.rel (%p361) target = $region20
        $region19: #{graph_paraff_encoder.1} parent=11 // pred_region
          _
        $region20: #{graph_paraff_encoder.1} parent=11 // pred_fallthru
          _
        // Predicated region
        $region21: #{graph_paraff_encoder.1} parent=11 // pred_check
          %p364 = pneg %p139
        $region22: #{graph_paraff_encoder.1} parent=11 // pred_check_branch
          %366 = sbr.rel (%p364) target = $region24
        $region23: #{graph_paraff_encoder.1} parent=11 // pred_region
          _
        $region24: #{graph_paraff_encoder.1} parent=11 // pred_fallthru
          _
        // Predicated region
        $region25: #{graph_paraff_encoder.1} parent=11 // pred_check
          %p367 = pneg %p160
        $region26: #{graph_paraff_encoder.1} parent=11 // pred_check_branch
          %369 = sbr.rel (%p367) target = $region28
        $region27: #{graph_paraff_encoder.1} parent=11 // pred_region
          _
        $region28: #{graph_paraff_encoder.1} parent=11 // pred_fallthru
          _
        // Predicated region
        $region29: #{graph_paraff_encoder.1} parent=11 // pred_check
          %p370 = pneg %p181
        $region30: #{graph_paraff_encoder.1} parent=11 // pred_check_branch
          %372 = sbr.rel (%p370) target = $region32
        $region31: #{graph_paraff_encoder.1} parent=11 // pred_region
          _
        $region32: #{graph_paraff_encoder.1} parent=11 // pred_fallthru
          _
        // Predicated region
        $region33: #{graph_paraff_encoder.1} parent=11 // pred_check
          %p373 = pneg %p202
        $region34: #{graph_paraff_encoder.1} parent=11 // pred_check_branch
          %375 = sbr.rel (%p373) target = $region36
        $region35: #{graph_paraff_encoder.1} parent=11 // pred_region
          %s377 = ssub.s32 4096, 4096
          %378 = vsyncadd [#allocation6], %s377
          %s379 = sshll.u32 [#allocation5], 4
          %s380 = int_to_ptr.vmem [resolvable:$true] %s379
          %385 = dma.hbm_to_vmem [thread:$0]  %s7, 4096, %s380, [#allocation6], 128, 128, 8
        $region36: #{graph_paraff_encoder.1} parent=11 // pred_fallthru
          _
        // Predicated region
        $region37: #{graph_paraff_encoder.1} parent=11 // pred_check
          %p386 = pneg %p223
        $region38: #{graph_paraff_encoder.1} parent=11 // pred_check_branch
          %388 = sbr.rel (%p386) target = $region40
        $region39: #{graph_paraff_encoder.1} parent=11 // pred_region
          _
        $region40: #{graph_paraff_encoder.1} parent=11 // pred_fallthru
          _
        // Predicated region
        $region41: #{graph_paraff_encoder.1} parent=11 // pred_check
          %p389 = pneg %p244
        $region42: #{graph_paraff_encoder.1} parent=11 // pred_check_branch
          %391 = sbr.rel (%p389) target = $region44
        $region43: #{graph_paraff_encoder.1} parent=11 // pred_region
          %s393 = ssub.s32 4096, 4096
          %394 = vsyncadd [#allocation6], %s393
          %s395 = sshll.u32 [#allocation7], 4
          %s396 = int_to_ptr.vmem [resolvable:$true] %s395
          %401 = dma.hbm_to_vmem [thread:$0]  %s9, 4096, %s396, [#allocation6], 64, 64, 4
        $region44: #{graph_paraff_encoder.1} parent=11 // pred_fallthru
          _
        // Predicated region
        $region45: #{graph_paraff_encoder.1} parent=11 // pred_check
          %p402 = pneg %p265
        $region46: #{graph_paraff_encoder.1} parent=11 // pred_check_branch
          %404 = sbr.rel (%p402) target = $region48
        $region47: #{graph_paraff_encoder.1} parent=11 // pred_region
          _
        $region48: #{graph_paraff_encoder.1} parent=11 // pred_fallthru
          _
        // Predicated region
        $region49: #{graph_paraff_encoder.1} parent=11 // pred_check
          %p405 = pneg %p286
        $region50: #{graph_paraff_encoder.1} parent=11 // pred_check_branch
          %407 = sbr.rel (%p405) target = $region52
        $region51: #{graph_paraff_encoder.1} parent=11 // pred_region
          _
        $region52: #{graph_paraff_encoder.1} parent=11 // pred_fallthru
          _
        // Predicated region
        $region53: #{graph_paraff_encoder.1} parent=11 // pred_check
          %p408 = pneg %p307
        $region54: #{graph_paraff_encoder.1} parent=11 // pred_check_branch
          %410 = sbr.rel (%p408) target = $region56
        $region55: #{graph_paraff_encoder.1} parent=11 // pred_region
          _
        $region56: #{graph_paraff_encoder.1} parent=11 // pred_fallthru
          _
      $region12: #{graph_paraff_encoder.1} parent=5 // pred_fallthru
        _
      %p411 = scmp.lt.s32.totalorder %s24, 2
      // Predicated region
      $region57: #{graph_paraff_encoder.1} parent=5 // pred_check
        %p412 = pneg %p411
      $region58: #{graph_paraff_encoder.1} parent=5 // pred_check_branch
        %414 = sbr.rel (%p412) target = $region60
      $region59: #{graph_paraff_encoder.1} parent=5 // pred_region
        // Predicated region
        $region61: #{graph_paraff_encoder.1} parent=59 // pred_check
          %p415 = pneg %p44
        $region62: #{graph_paraff_encoder.1} parent=59 // pred_check_branch
          %417 = sbr.rel (%p415) target = $region64
        $region63: #{graph_paraff_encoder.1} parent=59 // pred_region
          %p418 = scmp.lt.s32.totalorder %s24, 1
          %s419 = scalar_select %p418, %s24, 1
          %s420 = smul.addr %s419, 6
          %s421 = smul.addr %s420, 4
          %s422 = scalar_lea.vmem %s0, %s421
        $region64: #{graph_paraff_encoder.1} parent=59 // pred_fallthru
          _
        // Predicated region
        $region65: #{graph_paraff_encoder.1} parent=59 // pred_check
          %p423 = pneg %p70
        $region66: #{graph_paraff_encoder.1} parent=59 // pred_check_branch
          %425 = sbr.rel (%p423) target = $region68
        $region67: #{graph_paraff_encoder.1} parent=59 // pred_region
          %p426 = scmp.lt.s32.totalorder %s24, 1
          %s427 = scalar_select %p426, %s24, 1
          %s428 = scalar_lea.vmem %s1, %s427
        $region68: #{graph_paraff_encoder.1} parent=59 // pred_fallthru
          _
      $region60: #{graph_paraff_encoder.1} parent=5 // pred_fallthru
        _
      %p429 = scmp.le.s32.totalorder 1, %s24
      %p430 = scmp.lt.s32.totalorder %s24, 3
      %p431 = pnand %p429, %p430
      %p432 = pneg %p431
      // Predicated region
      $region69: #{graph_paraff_encoder.1} parent=5 // pred_check
        _
      $region70: #{graph_paraff_encoder.1} parent=5 // pred_check_branch
        %434 = sbr.rel (%p431) target = $region72
      $region71: #{graph_paraff_encoder.1} parent=5 // pred_region
        %s435 = ssub.s32 %s24, 1
        // Predicated region
        $region73: #{graph_paraff_encoder.1} parent=71 // pred_check
          %p436 = pneg %p97
        $region74: #{graph_paraff_encoder.1} parent=71 // pred_check_branch
          %438 = sbr.rel (%p436) target = $region76
        $region75: #{graph_paraff_encoder.1} parent=71 // pred_region
          %439 = dma.done [#allocation3], 3072
        $region76: #{graph_paraff_encoder.1} parent=71 // pred_fallthru
          _
        // Predicated region
        $region77: #{graph_paraff_encoder.1} parent=71 // pred_check
          %p440 = pneg %p202
        $region78: #{graph_paraff_encoder.1} parent=71 // pred_check_branch
          %442 = sbr.rel (%p440) target = $region80
        $region79: #{graph_paraff_encoder.1} parent=71 // pred_region
          %443 = dma.done [#allocation6], 4096
        $region80: #{graph_paraff_encoder.1} parent=71 // pred_fallthru
          _
        // Predicated region
        $region81: #{graph_paraff_encoder.1} parent=71 // pred_check
          %p444 = pneg %p244
        $region82: #{graph_paraff_encoder.1} parent=71 // pred_check_branch
          %446 = sbr.rel (%p444) target = $region84
        $region83: #{graph_paraff_encoder.1} parent=71 // pred_region
          %447 = dma.done [#allocation6], 4096
        $region84: #{graph_paraff_encoder.1} parent=71 // pred_fallthru
          _
        %p448 = scmp.lt.s32.totalorder %s29, 1
        %s449 = scalar_select %p448, %s29, 1
        %s450 = smul.addr %s449, 6
        %s451 = smul.addr %s450, 4
        %s452 = scalar_lea.vmem %s0, %s451
        %p453 = pneg %p50
        %p454 = pneg %p47
        %p455 = scmp.lt.s32.totalorder %s29, 1
        %s456 = scalar_select %p455, %s29, 1
        %s457 = scalar_lea.vmem %s1, %s456
        %p458 = pneg %p76
        %p459 = pneg %p73
        %p460 = pneg %p97
        %p461 = pneg %p94
        %p462 = pneg %p118
        %p463 = pneg %p115
        %p464 = pneg %p139
        %p465 = pneg %p136
        %p466 = pneg %p160
        %p467 = pneg %p157
        %p468 = pneg %p181
        %p469 = pneg %p178
        %p470 = pneg %p202
        %p471 = pneg %p199
        %p472 = pneg %p223
        %p473 = pneg %p220
        %p474 = pneg %p244
        %p475 = pneg %p241
        %p476 = pneg %p265
        %p477 = pneg %p262
        %p478 = pneg %p286
        %p479 = pneg %p283
        %p480 = pneg %p307
        %p481 = pneg %p304
        %p482 = pneg %p333
        %p483 = pneg %p330
        %s484 = sand.u32 %s320, 1
        %s485 = scalar_lea.sflag [#allocation4], %s484
        %s486 = sand.u32 %s320, 1
        %s487 = smul.addr %s486, 16
        %s488 = scalar_lea.vmem [#allocation8], %s487
        %p489 = scmp.lt.s32.totalorder %s29, 1
        %s490 = scalar_select %p489, %s29, 1
        %s491 = smul.addr %s490, 6
        %s492 = smul.addr %s491, 4
        %s493 = scalar_lea.vmem %s0, %s492
        %p494 = scmp.lt.s32.totalorder %s29, 1
        %s495 = scalar_select %p494, %s29, 1
        %s496 = scalar_lea.vmem %s1, %s495
        %v498 = vld [vmem:[%s493] sm:$0xff]
        %v499 = vld [vmem:[%s493 + $0x8] sm:$0xf]
        %v500 = vld [vmem:[%s493 + $0xc] sm:$0xff]
        %v501 = vld [vmem:[%s493 + $0x14] sm:$0xf]
        %v502 = vld [vmem:[#allocation2] sm:$0xf]
        %v503 = vld [vmem:[#allocation2 + $0x4] sm:$0xf]
        %v504 = vld [vmem:[#allocation2 + $0x8] sm:$0xf]
        %v505 = vld [vmem:[#allocation2 + $0xc] sm:$0xf]
        %v506 = vld [vmem:[#allocation2 + $0x10] sm:$0xf]
        %v507 = vld [vmem:[#allocation2 + $0x14] sm:$0xf]
        %v508 = vld [vmem:[#allocation2 + $0x18] sm:$0xf]
        %v509 = vld [vmem:[#allocation2 + $0x1c] sm:$0xf]
        %v510 = vld [vmem:[#allocation2 + $0x20] sm:$0xf]
        %v511 = vld [vmem:[#allocation2 + $0x24] sm:$0xf]
        %v512 = vld [vmem:[#allocation2 + $0x28] sm:$0xf]
        %v513 = vld [vmem:[#allocation2 + $0x2c] sm:$0xf]
        %v514 = vld [vmem:[#allocation2 + $0x30] sm:$0xf]
        %v515 = vld [vmem:[#allocation2 + $0x34] sm:$0xf]
        %v516 = vld [vmem:[#allocation2 + $0x38] sm:$0xf]
        %v517 = vld [vmem:[#allocation2 + $0x3c] sm:$0xf]
        %v518 = vld [vmem:[#allocation2 + $0x40] sm:$0xf]
        %v519 = vld [vmem:[#allocation2 + $0x44] sm:$0xf]
        %v520 = vld [vmem:[#allocation2 + $0x48] sm:$0xf]
        %v521 = vld [vmem:[#allocation2 + $0x4c] sm:$0xf]
        %v522 = vld [vmem:[#allocation2 + $0x50] sm:$0xf]
        %v523 = vld [vmem:[#allocation2 + $0x54] sm:$0xf]
        %v524 = vld [vmem:[#allocation2 + $0x58] sm:$0xf]
        %v525 = vld [vmem:[#allocation2 + $0x5c] sm:$0xf]
        %v526 = vld [vmem:[#allocation2 + $0x60] sm:$0xf]
        %v527 = vld [vmem:[#allocation2 + $0x64] sm:$0xf]
        %v528 = vld [vmem:[#allocation2 + $0x68] sm:$0xf]
        %v529 = vld [vmem:[#allocation2 + $0x6c] sm:$0xf]
        %v530 = vld [vmem:[#allocation2 + $0x70] sm:$0xf]
        %v531 = vld [vmem:[#allocation2 + $0x74] sm:$0xf]
        %v532 = vld [vmem:[#allocation2 + $0x78] sm:$0xf]
        %v533 = vld [vmem:[#allocation2 + $0x7c] sm:$0xf]
        %v534 = vld [vmem:[#allocation2 + $0x80] sm:$0xf]
        %v535 = vld [vmem:[#allocation2 + $0x84] sm:$0xf]
        %v536 = vld [vmem:[#allocation2 + $0x88] sm:$0xf]
        %v537 = vld [vmem:[#allocation2 + $0x8c] sm:$0xf]
        %v538 = vld [vmem:[#allocation2 + $0x90] sm:$0xf]
        %v539 = vld [vmem:[#allocation2 + $0x94] sm:$0xf]
        %v540 = vld [vmem:[#allocation2 + $0x98] sm:$0xf]
        %v541 = vld [vmem:[#allocation2 + $0x9c] sm:$0xf]
        %v542 = vld [vmem:[#allocation2 + $0xa0] sm:$0xf]
        %v543 = vld [vmem:[#allocation2 + $0xa4] sm:$0xf]
        %v544 = vld [vmem:[#allocation2 + $0xa8] sm:$0xf]
        %v545 = vld [vmem:[#allocation2 + $0xac] sm:$0xf]
        %v546 = vld [vmem:[#allocation2 + $0xb0] sm:$0xf]
        %v547 = vld [vmem:[#allocation2 + $0xb4] sm:$0xf]
        %v548 = vld [vmem:[#allocation2 + $0xb8] sm:$0xf]
        %v549 = vld [vmem:[#allocation2 + $0xbc] sm:$0xf]
        %v554 = vunpack.c.l.b16 %v498
        %v555 = vunpack.c.h.b16 %v498
        %v556 = vunpack.c.l.b16 %v499
        %v557 = vunpack.c.l.b16 %v500
        %v558 = vunpack.c.h.b16 %v500
        %v559 = vunpack.c.l.b16 %v501
        %v560 = vpack.c.b16 %v557, %v554
        %v561 = vpack.c.b16 %v558, %v555
        %v562 = vpack.c.b16 %v559, %v556
        %v614 = vunpack.c.l.b16 %v502
        %v615 = vunpack.c.l.b16 %v503
        %v616 = vunpack.c.l.b16 %v504
        %v617 = vunpack.c.l.b16 %v505
        %v618 = vunpack.c.l.b16 %v506
        %v619 = vunpack.c.l.b16 %v507
        %v620 = vunpack.c.l.b16 %v508
        %v621 = vunpack.c.l.b16 %v509
        %v622 = vunpack.c.l.b16 %v510
        %v623 = vunpack.c.l.b16 %v511
        %v624 = vunpack.c.l.b16 %v512
        %v625 = vunpack.c.l.b16 %v513
        %v626 = vunpack.c.l.b16 %v514
        %v627 = vunpack.c.l.b16 %v515
        %v628 = vunpack.c.l.b16 %v516
        %v629 = vunpack.c.l.b16 %v517
        %v630 = vunpack.c.l.b16 %v518
        %v631 = vunpack.c.l.b16 %v519
        %v632 = vunpack.c.l.b16 %v520
        %v633 = vunpack.c.l.b16 %v521
        %v634 = vunpack.c.l.b16 %v522
        %v635 = vunpack.c.l.b16 %v523
        %v636 = vunpack.c.l.b16 %v524
        %v637 = vunpack.c.l.b16 %v525
        %v638 = vunpack.c.l.b16 %v526
        %v639 = vunpack.c.l.b16 %v527
        %v640 = vunpack.c.l.b16 %v528
        %v641 = vunpack.c.l.b16 %v529
        %v642 = vunpack.c.l.b16 %v530
        %v643 = vunpack.c.l.b16 %v531
        %v644 = vunpack.c.l.b16 %v532
        %v645 = vunpack.c.l.b16 %v533
        %v646 = vunpack.c.l.b16 %v534
        %v647 = vunpack.c.l.b16 %v535
        %v648 = vunpack.c.l.b16 %v536
        %v649 = vunpack.c.l.b16 %v537
        %v650 = vunpack.c.l.b16 %v538
        %v651 = vunpack.c.l.b16 %v539
        %v652 = vunpack.c.l.b16 %v540
        %v653 = vunpack.c.l.b16 %v541
        %v654 = vunpack.c.l.b16 %v542
        %v655 = vunpack.c.l.b16 %v543
        %v656 = vunpack.c.l.b16 %v544
        %v657 = vunpack.c.l.b16 %v545
        %v658 = vunpack.c.l.b16 %v546
        %v659 = vunpack.c.l.b16 %v547
        %v660 = vunpack.c.l.b16 %v548
        %v661 = vunpack.c.l.b16 %v549
        %v662 = vpack.c.b16 %v615, %v614
        %v663 = vpack.c.b16 %v617, %v616
        %v664 = vpack.c.b16 %v619, %v618
        %v665 = vpack.c.b16 %v621, %v620
        %v666 = vpack.c.b16 %v623, %v622
        %v667 = vpack.c.b16 %v625, %v624
        %v668 = vpack.c.b16 %v627, %v626
        %v669 = vpack.c.b16 %v629, %v628
        %v670 = vpack.c.b16 %v631, %v630
        %v671 = vpack.c.b16 %v633, %v632
        %v672 = vpack.c.b16 %v635, %v634
        %v673 = vpack.c.b16 %v637, %v636
        %v674 = vpack.c.b16 %v639, %v638
        %v675 = vpack.c.b16 %v641, %v640
        %v676 = vpack.c.b16 %v643, %v642
        %v677 = vpack.c.b16 %v645, %v644
        %v678 = vpack.c.b16 %v647, %v646
        %v679 = vpack.c.b16 %v649, %v648
        %v680 = vpack.c.b16 %v651, %v650
        %v681 = vpack.c.b16 %v653, %v652
        %v682 = vpack.c.b16 %v655, %v654
        %v683 = vpack.c.b16 %v657, %v656
        %v684 = vpack.c.b16 %v659, %v658
        %v685 = vpack.c.b16 %v661, %v660
        %710 = vmatprep.subr.bf16.mxu0 0
        %711 = vmatpush1.bf16.msra.mxu0 %v662
        %712 = vmatprep.subr.bf16.mxu0 0
        %713 = vmatpush1.bf16.msra.mxu0 %v663
        %714 = vmatprep.subr.bf16.mxu0 0
        %715 = vmatpush1.bf16.msra.mxu0 %v664
        %716 = vmatprep.subr.bf16.mxu0 0
        %717 = vmatpush1.bf16.msra.mxu0 %v665
        %718 = vmatprep.subr.bf16.mxu0 0
        %719 = vmatpush1.bf16.msra.mxu0 %v666
        %720 = vmatprep.subr.bf16.mxu0 0
        %721 = vmatpush1.bf16.msra.mxu0 %v667
        %722 = vmatprep.subr.bf16.mxu0 0
        %723 = vmatpush1.bf16.msra.mxu0 %v668
        %724 = vmatprep.subr.bf16.mxu0 0
        %725 = vmatpush1.bf16.msra.mxu0 %v669
        %726 = vmatprep.subr.bf16.mxu0 0
        %727 = vmatpush1.bf16.msra.mxu0 %v670
        %728 = vmatprep.subr.bf16.mxu0 0
        %729 = vmatpush1.bf16.msra.mxu0 %v671
        %730 = vmatprep.subr.bf16.mxu0 0
        %731 = vmatpush1.bf16.msra.mxu0 %v672
        %732 = vmatprep.subr.bf16.mxu0 0
        %733 = vmatpush1.bf16.msra.mxu0 %v673
        %734 = vmatprep.subr.bf16.mxu0 0
        %735 = vmatpush1.bf16.msra.mxu0 %v674
        %736 = vmatprep.subr.bf16.mxu0 0
        %737 = vmatpush1.bf16.msra.mxu0 %v675
        %738 = vmatprep.subr.bf16.mxu0 0
        %739 = vmatpush1.bf16.msra.mxu0 %v676
        %740 = vmatprep.subr.bf16.mxu0 0
        %741 = vmatpush1.bf16.msra.mxu0 %v677
        %742 = vmatprep.mubr.bf16.mxu0 %v561
        %743 = vmatmul.mubr.bf16.gmra.mrb[0].mxu0 %v560
        %v744 = vpop.f32.mrb[0].mxu0
        %v745 = vadd.f32 0.0, %v744
        %v746 = vpop.f32.mrb[0].mxu0
        %v747 = vpop.f32.mrb[0].mxu0
        %v748 = vadd.f32 0.0, %v747
        %v749 = vpop.f32.mrb[0].mxu0
        %750 = vdwg.mxu0
        %751 = vmatprep.subr.bf16.mxu0 0
        %752 = vmatpush1.bf16.msra.mxu0 %v678
        %753 = vmatprep.subr.bf16.mxu0 0
        %754 = vmatpush1.bf16.msra.mxu0 %v679
        %755 = vmatprep.subr.bf16.mxu0 0
        %756 = vmatpush1.bf16.msra.mxu0 %v680
        %757 = vmatprep.subr.bf16.mxu0 0
        %758 = vmatpush1.bf16.msra.mxu0 %v681
        %759 = vmatprep.subr.bf16.mxu0 0
        %760 = vmatpush1.bf16.msra.mxu0 %v682
        %761 = vmatprep.subr.bf16.mxu0 0
        %762 = vmatpush1.bf16.msra.mxu0 %v683
        %763 = vmatprep.subr.bf16.mxu0 0
        %764 = vmatpush1.bf16.msra.mxu0 %v684
        %765 = vmatprep.subr.bf16.mxu0 0
        %766 = vmatpush1.bf16.msra.mxu0 %v685
        %767 = vmatprep.subr.bf16.mxu0 0
        %768 = vmatpush1.bf16.msra.mxu0 0
        %769 = vmatprep.subr.bf16.mxu0 0
        %770 = vmatpush1.bf16.msra.mxu0 0
        %771 = vmatprep.subr.bf16.mxu0 0
        %772 = vmatpush1.bf16.msra.mxu0 0
        %773 = vmatprep.subr.bf16.mxu0 0
        %774 = vmatpush1.bf16.msra.mxu0 0
        %775 = vmatprep.subr.bf16.mxu0 0
        %776 = vmatpush1.bf16.msra.mxu0 0
        %777 = vmatprep.subr.bf16.mxu0 0
        %778 = vmatpush1.bf16.msra.mxu0 0
        %779 = vmatprep.subr.bf16.mxu0 0
        %780 = vmatpush1.bf16.msra.mxu0 0
        %781 = vmatprep.subr.bf16.mxu0 0
        %782 = vmatpush1.bf16.msra.mxu0 0
        %783 = vmatprep.mubr.bf16.mxu0 0
        %784 = vmatmul.mubr.bf16.gmra.mrb[0].mxu0 %v562
        %v785 = vpop.f32.mrb[0].mxu0
        %v786 = vadd.f32 %v745, %v785
        %v787 = vpop.f32.mrb[0].mxu0
        %v788 = vpop.f32.mrb[0].mxu0
        %v789 = vadd.f32 %v748, %v788
        %v790 = vpop.f32.mrb[0].mxu0
        %791 = vdwg.mxu0
        %v792 = vld [vmem:[%s496] sm:$0x1]
        %v793 = vsub.f32 %v792, 1.0
        %v794 = vmul.f32 %v793, 1e+09
        %v795 = vlaneseq
        %v796 = vshrl.u32 %v795, 7
        %v797 = vadd.s32 %v796, 8
        %v798 = vlaneseq
        %v799 = vand.u32 %v798, 127
        %vm800 = vcmp.ge.s32.totalorder %v796, %v799
        %vm801 = vcmp.ge.s32.totalorder %v797, %v799
        %v802 = vsel %vm800, 0.0, -1e+09
        %v803 = vsel %vm801, 0.0, -1e+09
        %v804 = vpack.c.bf16 %v789, %v786
        %v805 = vld [vmem:[%s3] sm:$0xff]
        %v806 = vld [vmem:[%s3 + $0x8] sm:$0xf]
        %v807 = vld [vmem:[%s3 + $0xc] sm:$0xff]
        %v808 = vld [vmem:[%s3 + $0x14] sm:$0xf]
        %v809 = vld [vmem:[%s3 + $0x18] sm:$0xff]
        %v810 = vld [vmem:[%s3 + $0x20] sm:$0xf]
        %v811 = vld [vmem:[%s3 + $0x24] sm:$0xff]
        %v812 = vld [vmem:[%s3 + $0x2c] sm:$0xf]
        %v813 = vld [vmem:[%s3 + $0x30] sm:$0xff]
        %v814 = vld [vmem:[%s3 + $0x38] sm:$0xf]
        %v815 = vld [vmem:[%s3 + $0x3c] sm:$0xff]
        %v816 = vld [vmem:[%s3 + $0x44] sm:$0xf]
        %v817 = vld [vmem:[%s3 + $0x48] sm:$0xff]
        %v818 = vld [vmem:[%s3 + $0x50] sm:$0xf]
        %v819 = vld [vmem:[%s3 + $0x54] sm:$0xff]
        %v820 = vld [vmem:[%s3 + $0x5c] sm:$0xf]
        %v821 = vld [vmem:[%s3 + $0x60] sm:$0xff]
        %v822 = vld [vmem:[%s3 + $0x68] sm:$0xf]
        %v823 = vld [vmem:[%s3 + $0x6c] sm:$0xff]
        %v824 = vld [vmem:[%s3 + $0x74] sm:$0xf]
        %v825 = vld [vmem:[%s3 + $0x78] sm:$0xff]
        %v826 = vld [vmem:[%s3 + $0x80] sm:$0xf]
        %v827 = vld [vmem:[%s3 + $0x84] sm:$0xff]
        %v828 = vld [vmem:[%s3 + $0x8c] sm:$0xf]
        %v829 = vld [vmem:[%s3 + $0x90] sm:$0xff]
        %v830 = vld [vmem:[%s3 + $0x98] sm:$0xf]
        %v831 = vld [vmem:[%s3 + $0x9c] sm:$0xff]
        %v832 = vld [vmem:[%s3 + $0xa4] sm:$0xf]
        %v833 = vld [vmem:[%s3 + $0xa8] sm:$0xff]
        %v834 = vld [vmem:[%s3 + $0xb0] sm:$0xf]
        %v835 = vld [vmem:[%s3 + $0xb4] sm:$0xff]
        %v836 = vld [vmem:[%s3 + $0xbc] sm:$0xf]
        %v869 = vunpack.c.l.b16 %v805
        %v870 = vunpack.c.h.b16 %v805
        %v871 = vunpack.c.l.b16 %v806
        %v872 = vunpack.c.l.b16 %v807
        %v873 = vunpack.c.h.b16 %v807
        %v874 = vunpack.c.l.b16 %v808
        %v875 = vunpack.c.l.b16 %v809
        %v876 = vunpack.c.h.b16 %v809
        %v877 = vunpack.c.l.b16 %v810
        %v878 = vunpack.c.l.b16 %v811
        %v879 = vunpack.c.h.b16 %v811
        %v880 = vunpack.c.l.b16 %v812
        %v881 = vunpack.c.l.b16 %v813
        %v882 = vunpack.c.h.b16 %v813
        %v883 = vunpack.c.l.b16 %v814
        %v884 = vunpack.c.l.b16 %v815
        %v885 = vunpack.c.h.b16 %v815
        %v886 = vunpack.c.l.b16 %v816
        %v887 = vunpack.c.l.b16 %v817
        %v888 = vunpack.c.h.b16 %v817
        %v889 = vunpack.c.l.b16 %v818
        %v890 = vunpack.c.l.b16 %v819
        %v891 = vunpack.c.h.b16 %v819
        %v892 = vunpack.c.l.b16 %v820
        %v893 = vunpack.c.l.b16 %v821
        %v894 = vunpack.c.h.b16 %v821
        %v895 = vunpack.c.l.b16 %v822
        %v896 = vunpack.c.l.b16 %v823
        %v897 = vunpack.c.h.b16 %v823
        %v898 = vunpack.c.l.b16 %v824
        %v899 = vunpack.c.l.b16 %v825
        %v900 = vunpack.c.h.b16 %v825
        %v901 = vunpack.c.l.b16 %v826
        %v902 = vunpack.c.l.b16 %v827
        %v903 = vunpack.c.h.b16 %v827
        %v904 = vunpack.c.l.b16 %v828
        %v905 = vunpack.c.l.b16 %v829
        %v906 = vunpack.c.h.b16 %v829
        %v907 = vunpack.c.l.b16 %v830
        %v908 = vunpack.c.l.b16 %v831
        %v909 = vunpack.c.h.b16 %v831
        %v910 = vunpack.c.l.b16 %v832
        %v911 = vunpack.c.l.b16 %v833
        %v912 = vunpack.c.h.b16 %v833
        %v913 = vunpack.c.l.b16 %v834
        %v914 = vunpack.c.l.b16 %v835
        %v915 = vunpack.c.h.b16 %v835
        %v916 = vunpack.c.l.b16 %v836
        %v917 = vpack.c.b16 %v872, %v869
        %v918 = vpack.c.b16 %v873, %v870
        %v919 = vpack.c.b16 %v874, %v871
        %v920 = vpack.c.b16 %v878, %v875
        %v921 = vpack.c.b16 %v879, %v876
        %v922 = vpack.c.b16 %v880, %v877
        %v923 = vpack.c.b16 %v884, %v881
        %v924 = vpack.c.b16 %v885, %v882
        %v925 = vpack.c.b16 %v886, %v883
        %v926 = vpack.c.b16 %v890, %v887
        %v927 = vpack.c.b16 %v891, %v888
        %v928 = vpack.c.b16 %v892, %v889
        %v929 = vpack.c.b16 %v896, %v893
        %v930 = vpack.c.b16 %v897, %v894
        %v931 = vpack.c.b16 %v898, %v895
        %v932 = vpack.c.b16 %v902, %v899
        %v933 = vpack.c.b16 %v903, %v900
        %v934 = vpack.c.b16 %v904, %v901
        %v935 = vpack.c.b16 %v908, %v905
        %v936 = vpack.c.b16 %v909, %v906
        %v937 = vpack.c.b16 %v910, %v907
        %v938 = vpack.c.b16 %v914, %v911
        %v939 = vpack.c.b16 %v915, %v912
        %v940 = vpack.c.b16 %v916, %v913
        %965 = vmatprep.subr.bf16.mxu0 %v918
        %966 = vmatpush1.bf16.msra.mxu0 %v917
        %967 = vmatprep.subr.bf16.mxu0 %v921
        %968 = vmatpush1.bf16.msra.mxu0 %v920
        %969 = vmatprep.subr.bf16.mxu0 %v924
        %970 = vmatpush1.bf16.msra.mxu0 %v923
        %971 = vmatprep.subr.bf16.mxu0 %v927
        %972 = vmatpush1.bf16.msra.mxu0 %v926
        %973 = vmatprep.subr.bf16.mxu0 %v930
        %974 = vmatpush1.bf16.msra.mxu0 %v929
        %975 = vmatprep.subr.bf16.mxu0 %v933
        %976 = vmatpush1.bf16.msra.mxu0 %v932
        %977 = vmatprep.subr.bf16.mxu0 %v936
        %978 = vmatpush1.bf16.msra.mxu0 %v935
        %979 = vmatprep.subr.bf16.mxu0 %v939
        %980 = vmatpush1.bf16.msra.mxu0 %v938
        %981 = vmatprep.subr.bf16.mxu0 0
        %982 = vmatpush1.bf16.msra.mxu0 0
        %983 = vmatprep.subr.bf16.mxu0 0
        %984 = vmatpush1.bf16.msra.mxu0 0
        %985 = vmatprep.subr.bf16.mxu0 0
        %986 = vmatpush1.bf16.msra.mxu0 0
        %987 = vmatprep.subr.bf16.mxu0 0
        %988 = vmatpush1.bf16.msra.mxu0 0
        %989 = vmatprep.subr.bf16.mxu0 0
        %990 = vmatpush1.bf16.msra.mxu0 0
        %991 = vmatprep.subr.bf16.mxu0 0
        %992 = vmatpush1.bf16.msra.mxu0 0
        %993 = vmatprep.subr.bf16.mxu0 0
        %994 = vmatpush1.bf16.msra.mxu0 0
        %995 = vmatprep.subr.bf16.mxu0 0
        %996 = vmatpush1.bf16.msra.mxu0 0
        %997 = vmatprep.mubr.bf16.mxu0 0
        %998 = vmatmul.mubr.bf16.gmra.mrb[0].mxu0 %v804
        %v999 = vpop.f32.mrb[0].mxu0
        %v1000 = vadd.f32 0.0, %v999
        %v1001 = vpop.f32.mrb[0].mxu0
        %v1002 = vadd.f32 0.0, %v1001
        %v1003 = vpop.f32.mrb[0].mxu0
        %v1004 = vadd.f32 0.0, %v1003
        %v1005 = vpop.f32.mrb[0].mxu0
        %v1006 = vadd.f32 0.0, %v1005
        %1007 = vdwg.mxu0
        %1008 = vmatprep.subr.bf16.mxu0 0
        %1009 = vmatpush1.bf16.msra.mxu0 %v919
        %1010 = vmatprep.subr.bf16.mxu0 0
        %1011 = vmatpush1.bf16.msra.mxu0 %v922
        %1012 = vmatprep.subr.bf16.mxu0 0
        %1013 = vmatpush1.bf16.msra.mxu0 %v925
        %1014 = vmatprep.subr.bf16.mxu0 0
        %1015 = vmatpush1.bf16.msra.mxu0 %v928
        %1016 = vmatprep.subr.bf16.mxu0 0
        %1017 = vmatpush1.bf16.msra.mxu0 %v931
        %1018 = vmatprep.subr.bf16.mxu0 0
        %1019 = vmatpush1.bf16.msra.mxu0 %v934
        %1020 = vmatprep.subr.bf16.mxu0 0
        %1021 = vmatpush1.bf16.msra.mxu0 %v937
        %1022 = vmatprep.subr.bf16.mxu0 0
        %1023 = vmatpush1.bf16.msra.mxu0 %v940
        %1024 = vmatprep.subr.bf16.mxu0 0
        %1025 = vmatpush1.bf16.msra.mxu0 0
        %1026 = vmatprep.subr.bf16.mxu0 0
        %1027 = vmatpush1.bf16.msra.mxu0 0
        %1028 = vmatprep.subr.bf16.mxu0 0
        %1029 = vmatpush1.bf16.msra.mxu0 0
        %1030 = vmatprep.subr.bf16.mxu0 0
        %1031 = vmatpush1.bf16.msra.mxu0 0
        %1032 = vmatprep.subr.bf16.mxu0 0
        %1033 = vmatpush1.bf16.msra.mxu0 0
        %1034 = vmatprep.subr.bf16.mxu0 0
        %1035 = vmatpush1.bf16.msra.mxu0 0
        %1036 = vmatprep.subr.bf16.mxu0 0
        %1037 = vmatpush1.bf16.msra.mxu0 0
        %1038 = vmatprep.subr.bf16.mxu0 0
        %1039 = vmatpush1.bf16.msra.mxu0 0
        %1040 = vmatprep.mubr.bf16.mxu0 0
        %1041 = vmatmul.mubr.bf16.gmra.mrb[0].mxu0 %v804
        %v1042 = vpop.f32.mrb[0].mxu0
        %v1043 = vadd.f32 0.0, %v1042
        %v1044 = vpop.f32.mrb[0].mxu0
        %v1045 = vpop.f32.mrb[0].mxu0
        %v1046 = vadd.f32 0.0, %v1045
        %v1047 = vpop.f32.mrb[0].mxu0
        %1048 = vdwg.mxu0
        %v1049 = vpack.c.bf16 %v1004, %v1000
        %v1050 = vpack.c.bf16 %v1006, %v1002
        %v1051 = vpack.c.bf16 %v1046, %v1043
        %v1053 = vlaneseq
        %v1054 = vshrl.u32 %v1053, 7
        %v1055 = vsub.s32 0, %v1054
        %v1056 = vrot.slane %v794, %v1055
        %vm1058 = vcmask 261120
        %v1060 = vsel %vm1058, %v1049, 0
        %v1063 = vsel %vm1058, %v1050, 0
        %1065 = vmatprep.subr.bf16.mxu0 0
        %1066 = vmatpush1.bf16.xpose.msra.mxu0 %v1063
        %1067 = vmatprep.subr.bf16.mxu0 0
        %1068 = vmatpush1.bf16.xpose.msra.mxu0 0
        %1069 = vmatprep.subr.bf16.mxu0 0
        %1070 = vmatpush1.bf16.xpose.msra.mxu0 0
        %1071 = vmatprep.subr.bf16.mxu0 0
        %1072 = vmatpush1.bf16.xpose.msra.mxu0 0
        %1073 = vmatprep.subr.bf16.mxu0 0
        %1074 = vmatpush1.bf16.xpose.msra.mxu0 0
        %1075 = vmatprep.subr.bf16.mxu0 0
        %1076 = vmatpush1.bf16.xpose.msra.mxu0 0
        %1077 = vmatprep.subr.bf16.mxu0 0
        %1078 = vmatpush1.bf16.xpose.msra.mxu0 0
        %1079 = vmatprep.subr.bf16.mxu0 0
        %1080 = vmatpush1.bf16.xpose.msra.mxu0 0
        %1081 = vmatprep.subr.bf16.mxu0 0
        %1082 = vmatpush1.bf16.xpose.msra.mxu0 0
        %1083 = vmatprep.subr.bf16.mxu0 0
        %1084 = vmatpush1.bf16.xpose.msra.mxu0 0
        %1085 = vmatprep.subr.bf16.mxu0 0
        %1086 = vmatpush1.bf16.xpose.msra.mxu0 0
        %1087 = vmatprep.subr.bf16.mxu0 0
        %1088 = vmatpush1.bf16.xpose.msra.mxu0 0
        %1089 = vmatprep.subr.bf16.mxu0 0
        %1090 = vmatpush1.bf16.xpose.msra.mxu0 0
        %1091 = vmatprep.subr.bf16.mxu0 0
        %1092 = vmatpush1.bf16.xpose.msra.mxu0 0
        %1093 = vmatprep.subr.bf16.mxu0 0
        %1094 = vmatpush1.bf16.xpose.msra.mxu0 0
        %1095 = vmatprep.subr.bf16.mxu0 0
        %1096 = vmatpush1.bf16.xpose.msra.mxu0 0
        %1097 = vmatprep.mubr.bf16.mxu0 0
        %1098 = vmatmul.mubr.bf16.gmra.mrb[0].mxu0 %v1060
        %v1099 = vpop.f32.mrb[0].mxu0
        %v1100 = vadd.f32 %v1056, %v1099
        %v1101 = vpop.f32.mrb[0].mxu0
        %v1102 = vpop.f32.mrb[0].mxu0
        %v1103 = vadd.f32 %v1056, %v1102
        %v1104 = vpop.f32.mrb[0].mxu0
        %1105 = vdwg.mxu0
        %v1106 = vadd.f32 %v1100, %v802
        %v1107 = vadd.f32 %v1103, %v803
        %vm1108 = vcmask 130048
        %v1109 = vsel %vm1108, %v1106, -inf
        %1110 = vmax.xlane.f32.xlu0 %v1109
        %v1111 = vpop.xlane.xlu0 %1110
        %v1112 = vsel %vm1108, %v1107, -inf
        %1113 = vmax.xlane.f32.xlu0 %v1112
        %v1114 = vpop.xlane.xlu0 %1113
        %v1115 = vsub.f32 %v1106, %v1111
        %v1116 = vsub.f32 %v1107, %v1114
        %v1117 = vmul.f32 %v1115, 1.442695
        %v1118 = vpow.pop %v1117
        %v1119 = vmul.f32 %v1116, 1.442695
        %v1120 = vpow.pop %v1119
        %v1121 = vsel %vm1108, %v1118, 0.0
        %1122 = vadd.xlane.f32.xlu0 %v1121
        %v1123 = vpop.xlane.xlu0 %1122
        %v1124 = vsel %vm1108, %v1120, 0.0
        %1125 = vadd.xlane.f32.xlu0 %v1124
        %v1126 = vpop.xlane.xlu0 %1125
        %v1127 = vrcp.pop %v1123
        %v1128 = vrcp.pop %v1126
        %v1129 = vmul.f32 %v1118, %v1127
        %v1130 = vmul.f32 %v1120, %v1128
        %v1131 = vpack.c.bf16 %v1130, %v1129
        %v1133 = vsel %vm1108, %v1131, 0
        %1135 = vmatprep.subr.bf16.mxu0 0
        %1136 = vmatpush1.bf16.msra.mxu0 %v1051
        %1137 = vmatprep.subr.bf16.mxu0 0
        %1138 = vmatpush1.bf16.msra.mxu0 0
        %1139 = vmatprep.subr.bf16.mxu0 0
        %1140 = vmatpush1.bf16.msra.mxu0 0
        %1141 = vmatprep.subr.bf16.mxu0 0
        %1142 = vmatpush1.bf16.msra.mxu0 0
        %1143 = vmatprep.subr.bf16.mxu0 0
        %1144 = vmatpush1.bf16.msra.mxu0 0
        %1145 = vmatprep.subr.bf16.mxu0 0
        %1146 = vmatpush1.bf16.msra.mxu0 0
        %1147 = vmatprep.subr.bf16.mxu0 0
        %1148 = vmatpush1.bf16.msra.mxu0 0
        %1149 = vmatprep.subr.bf16.mxu0 0
        %1150 = vmatpush1.bf16.msra.mxu0 0
        %1151 = vmatprep.subr.bf16.mxu0 0
        %1152 = vmatpush1.bf16.msra.mxu0 0
        %1153 = vmatprep.subr.bf16.mxu0 0
        %1154 = vmatpush1.bf16.msra.mxu0 0
        %1155 = vmatprep.subr.bf16.mxu0 0
        %1156 = vmatpush1.bf16.msra.mxu0 0
        %1157 = vmatprep.subr.bf16.mxu0 0
        %1158 = vmatpush1.bf16.msra.mxu0 0
        %1159 = vmatprep.subr.bf16.mxu0 0
        %1160 = vmatpush1.bf16.msra.mxu0 0
        %1161 = vmatprep.subr.bf16.mxu0 0
        %1162 = vmatpush1.bf16.msra.mxu0 0
        %1163 = vmatprep.subr.bf16.mxu0 0
        %1164 = vmatpush1.bf16.msra.mxu0 0
        %1165 = vmatprep.subr.bf16.mxu0 0
        %1166 = vmatpush1.bf16.msra.mxu0 0
        %1167 = vmatprep.mubr.bf16.mxu0 0
        %1168 = vmatmul.mubr.bf16.gmra.mrb[0].mxu0 %v1133
        %v1169 = vpop.f32.mrb[0].mxu0
        %v1170 = vadd.f32 0.0, %v1169
        %v1171 = vpop.f32.mrb[0].mxu0
        %v1172 = vpop.f32.mrb[0].mxu0
        %v1173 = vadd.f32 0.0, %v1172
        %v1174 = vpop.f32.mrb[0].mxu0
        %1175 = vdwg.mxu0
        %v1176 = vpack.c.bf16 %v1173, %v1170
        %1178 = vrot.lane.b32.xlu0 %v1049, 96
        %v1179 = vpop.permute.xlu0 %1178
        %1181 = vrot.lane.b32.xlu0 %v1050, 96
        %v1182 = vpop.permute.xlu0 %1181
        %v1184 = vsel %vm1058, %v1179, 0
        %v1187 = vsel %vm1058, %v1182, 0
        %1189 = vmatprep.subr.bf16.mxu0 0
        %1190 = vmatpush1.bf16.xpose.msra.mxu0 %v1187
        %1191 = vmatprep.subr.bf16.mxu0 0
        %1192 = vmatpush1.bf16.xpose.msra.mxu0 0
        %1193 = vmatprep.subr.bf16.mxu0 0
        %1194 = vmatpush1.bf16.xpose.msra.mxu0 0
        %1195 = vmatprep.subr.bf16.mxu0 0
        %1196 = vmatpush1.bf16.xpose.msra.mxu0 0
        %1197 = vmatprep.subr.bf16.mxu0 0
        %1198 = vmatpush1.bf16.xpose.msra.mxu0 0
        %1199 = vmatprep.subr.bf16.mxu0 0
        %1200 = vmatpush1.bf16.xpose.msra.mxu0 0
        %1201 = vmatprep.subr.bf16.mxu0 0
        %1202 = vmatpush1.bf16.xpose.msra.mxu0 0
        %1203 = vmatprep.subr.bf16.mxu0 0
        %1204 = vmatpush1.bf16.xpose.msra.mxu0 0
        %1205 = vmatprep.subr.bf16.mxu0 0
        %1206 = vmatpush1.bf16.xpose.msra.mxu0 0
        %1207 = vmatprep.subr.bf16.mxu0 0
        %1208 = vmatpush1.bf16.xpose.msra.mxu0 0
        %1209 = vmatprep.subr.bf16.mxu0 0
        %1210 = vmatpush1.bf16.xpose.msra.mxu0 0
        %1211 = vmatprep.subr.bf16.mxu0 0
        %1212 = vmatpush1.bf16.xpose.msra.mxu0 0
        %1213 = vmatprep.subr.bf16.mxu0 0
        %1214 = vmatpush1.bf16.xpose.msra.mxu0 0
        %1215 = vmatprep.subr.bf16.mxu0 0
        %1216 = vmatpush1.bf16.xpose.msra.mxu0 0
        %1217 = vmatprep.subr.bf16.mxu0 0
        %1218 = vmatpush1.bf16.xpose.msra.mxu0 0
        %1219 = vmatprep.subr.bf16.mxu0 0
        %1220 = vmatpush1.bf16.xpose.msra.mxu0 0
        %1221 = vmatprep.mubr.bf16.mxu0 0
        %1222 = vmatmul.mubr.bf16.gmra.mrb[0].mxu0 %v1184
        %v1223 = vpop.f32.mrb[0].mxu0
        %v1224 = vadd.f32 %v1056, %v1223
        %v1225 = vpop.f32.mrb[0].mxu0
        %v1226 = vpop.f32.mrb[0].mxu0
        %v1227 = vadd.f32 %v1056, %v1226
        %v1228 = vpop.f32.mrb[0].mxu0
        %1229 = vdwg.mxu0
        %v1230 = vadd.f32 %v1224, %v802
        %v1231 = vadd.f32 %v1227, %v803
        %v1232 = vsel %vm1108, %v1230, -inf
        %1233 = vmax.xlane.f32.xlu0 %v1232
        %v1234 = vpop.xlane.xlu0 %1233
        %v1235 = vsel %vm1108, %v1231, -inf
        %1236 = vmax.xlane.f32.xlu0 %v1235
        %v1237 = vpop.xlane.xlu0 %1236
        %v1238 = vsub.f32 %v1230, %v1234
        %v1239 = vsub.f32 %v1231, %v1237
        %v1240 = vmul.f32 %v1238, 1.442695
        %v1241 = vpow.pop %v1240
        %v1242 = vmul.f32 %v1239, 1.442695
        %v1243 = vpow.pop %v1242
        %v1244 = vsel %vm1108, %v1241, 0.0
        %1245 = vadd.xlane.f32.xlu0 %v1244
        %v1246 = vpop.xlane.xlu0 %1245
        %v1247 = vsel %vm1108, %v1243, 0.0
        %1248 = vadd.xlane.f32.xlu0 %v1247
        %v1249 = vpop.xlane.xlu0 %1248
        %v1250 = vrcp.pop %v1246
        %v1251 = vrcp.pop %v1249
        %v1252 = vmul.f32 %v1241, %v1250
        %v1253 = vmul.f32 %v1243, %v1251
        %v1254 = vpack.c.bf16 %v1253, %v1252
        %1256 = vrot.lane.b32.xlu0 %v1051, 96
        %v1257 = vpop.permute.xlu0 %1256
        %v1260 = vsel %vm1108, %v1254, 0
        %1262 = vmatprep.subr.bf16.mxu0 0
        %1263 = vmatpush1.bf16.msra.mxu0 %v1257
        %1264 = vmatprep.subr.bf16.mxu0 0
        %1265 = vmatpush1.bf16.msra.mxu0 0
        %1266 = vmatprep.subr.bf16.mxu0 0
        %1267 = vmatpush1.bf16.msra.mxu0 0
        %1268 = vmatprep.subr.bf16.mxu0 0
        %1269 = vmatpush1.bf16.msra.mxu0 0
        %1270 = vmatprep.subr.bf16.mxu0 0
        %1271 = vmatpush1.bf16.msra.mxu0 0
        %1272 = vmatprep.subr.bf16.mxu0 0
        %1273 = vmatpush1.bf16.msra.mxu0 0
        %1274 = vmatprep.subr.bf16.mxu0 0
        %1275 = vmatpush1.bf16.msra.mxu0 0
        %1276 = vmatprep.subr.bf16.mxu0 0
        %1277 = vmatpush1.bf16.msra.mxu0 0
        %1278 = vmatprep.subr.bf16.mxu0 0
        %1279 = vmatpush1.bf16.msra.mxu0 0
        %1280 = vmatprep.subr.bf16.mxu0 0
        %1281 = vmatpush1.bf16.msra.mxu0 0
        %1282 = vmatprep.subr.bf16.mxu0 0
        %1283 = vmatpush1.bf16.msra.mxu0 0
        %1284 = vmatprep.subr.bf16.mxu0 0
        %1285 = vmatpush1.bf16.msra.mxu0 0
        %1286 = vmatprep.subr.bf16.mxu0 0
        %1287 = vmatpush1.bf16.msra.mxu0 0
        %1288 = vmatprep.subr.bf16.mxu0 0
        %1289 = vmatpush1.bf16.msra.mxu0 0
        %1290 = vmatprep.subr.bf16.mxu0 0
        %1291 = vmatpush1.bf16.msra.mxu0 0
        %1292 = vmatprep.subr.bf16.mxu0 0
        %1293 = vmatpush1.bf16.msra.mxu0 0
        %1294 = vmatprep.mubr.bf16.mxu0 0
        %1295 = vmatmul.mubr.bf16.gmra.mrb[0].mxu0 %v1260
        %v1296 = vpop.f32.mrb[0].mxu0
        %v1297 = vadd.f32 0.0, %v1296
        %v1298 = vpop.f32.mrb[0].mxu0
        %v1299 = vpop.f32.mrb[0].mxu0
        %v1300 = vadd.f32 0.0, %v1299
        %v1301 = vpop.f32.mrb[0].mxu0
        %1302 = vdwg.mxu0
        %v1303 = vpack.c.bf16 %v1300, %v1297
        %1304 = vrot.lane.b32.xlu0 %v1049, 64
        %v1305 = vpop.permute.xlu0 %1304
        %1306 = vrot.lane.b32.xlu0 %v1050, 64
        %v1307 = vpop.permute.xlu0 %1306
        %v1309 = vsel %vm1058, %v1305, 0
        %v1312 = vsel %vm1058, %v1307, 0
        %1314 = vmatprep.subr.bf16.mxu0 0
        %1315 = vmatpush1.bf16.xpose.msra.mxu0 %v1312
        %1316 = vmatprep.subr.bf16.mxu0 0
        %1317 = vmatpush1.bf16.xpose.msra.mxu0 0
        %1318 = vmatprep.subr.bf16.mxu0 0
        %1319 = vmatpush1.bf16.xpose.msra.mxu0 0
        %1320 = vmatprep.subr.bf16.mxu0 0
        %1321 = vmatpush1.bf16.xpose.msra.mxu0 0
        %1322 = vmatprep.subr.bf16.mxu0 0
        %1323 = vmatpush1.bf16.xpose.msra.mxu0 0
        %1324 = vmatprep.subr.bf16.mxu0 0
        %1325 = vmatpush1.bf16.xpose.msra.mxu0 0
        %1326 = vmatprep.subr.bf16.mxu0 0
        %1327 = vmatpush1.bf16.xpose.msra.mxu0 0
        %1328 = vmatprep.subr.bf16.mxu0 0
        %1329 = vmatpush1.bf16.xpose.msra.mxu0 0
        %1330 = vmatprep.subr.bf16.mxu0 0
        %1331 = vmatpush1.bf16.xpose.msra.mxu0 0
        %1332 = vmatprep.subr.bf16.mxu0 0
        %1333 = vmatpush1.bf16.xpose.msra.mxu0 0
        %1334 = vmatprep.subr.bf16.mxu0 0
        %1335 = vmatpush1.bf16.xpose.msra.mxu0 0
        %1336 = vmatprep.subr.bf16.mxu0 0
        %1337 = vmatpush1.bf16.xpose.msra.mxu0 0
        %1338 = vmatprep.subr.bf16.mxu0 0
        %1339 = vmatpush1.bf16.xpose.msra.mxu0 0
        %1340 = vmatprep.subr.bf16.mxu0 0
        %1341 = vmatpush1.bf16.xpose.msra.mxu0 0
        %1342 = vmatprep.subr.bf16.mxu0 0
        %1343 = vmatpush1.bf16.xpose.msra.mxu0 0
        %1344 = vmatprep.subr.bf16.mxu0 0
        %1345 = vmatpush1.bf16.xpose.msra.mxu0 0
        %1346 = vmatprep.mubr.bf16.mxu0 0
        %1347 = vmatmul.mubr.bf16.gmra.mrb[0].mxu0 %v1309
        %v1348 = vpop.f32.mrb[0].mxu0
        %v1349 = vadd.f32 %v1056, %v1348
        %v1350 = vpop.f32.mrb[0].mxu0
        %v1351 = vpop.f32.mrb[0].mxu0
        %v1352 = vadd.f32 %v1056, %v1351
        %v1353 = vpop.f32.mrb[0].mxu0
        %1354 = vdwg.mxu0
        %v1355 = vadd.f32 %v1349, %v802
        %v1356 = vadd.f32 %v1352, %v803
        %v1357 = vsel %vm1108, %v1355, -inf
        %1358 = vmax.xlane.f32.xlu0 %v1357
        %v1359 = vpop.xlane.xlu0 %1358
        %v1360 = vsel %vm1108, %v1356, -inf
        %1361 = vmax.xlane.f32.xlu0 %v1360
        %v1362 = vpop.xlane.xlu0 %1361
        %v1363 = vsub.f32 %v1355, %v1359
        %v1364 = vsub.f32 %v1356, %v1362
        %v1365 = vmul.f32 %v1363, 1.442695
        %v1366 = vpow.pop %v1365
        %v1367 = vmul.f32 %v1364, 1.442695
        %v1368 = vpow.pop %v1367
        %v1369 = vsel %vm1108, %v1366, 0.0
        %1370 = vadd.xlane.f32.xlu0 %v1369
        %v1371 = vpop.xlane.xlu0 %1370
        %v1372 = vsel %vm1108, %v1368, 0.0
        %1373 = vadd.xlane.f32.xlu0 %v1372
        %v1374 = vpop.xlane.xlu0 %1373
        %v1375 = vrcp.pop %v1371
        %v1376 = vrcp.pop %v1374
        %v1377 = vmul.f32 %v1366, %v1375
        %v1378 = vmul.f32 %v1368, %v1376
        %v1379 = vpack.c.bf16 %v1378, %v1377
        %1380 = vrot.lane.b32.xlu0 %v1051, 64
        %v1381 = vpop.permute.xlu0 %1380
        %v1384 = vsel %vm1108, %v1379, 0
        %1386 = vmatprep.subr.bf16.mxu0 0
        %1387 = vmatpush1.bf16.msra.mxu0 %v1381
        %1388 = vmatprep.subr.bf16.mxu0 0
        %1389 = vmatpush1.bf16.msra.mxu0 0
        %1390 = vmatprep.subr.bf16.mxu0 0
        %1391 = vmatpush1.bf16.msra.mxu0 0
        %1392 = vmatprep.subr.bf16.mxu0 0
        %1393 = vmatpush1.bf16.msra.mxu0 0
        %1394 = vmatprep.subr.bf16.mxu0 0
        %1395 = vmatpush1.bf16.msra.mxu0 0
        %1396 = vmatprep.subr.bf16.mxu0 0
        %1397 = vmatpush1.bf16.msra.mxu0 0
        %1398 = vmatprep.subr.bf16.mxu0 0
        %1399 = vmatpush1.bf16.msra.mxu0 0
        %1400 = vmatprep.subr.bf16.mxu0 0
        %1401 = vmatpush1.bf16.msra.mxu0 0
        %1402 = vmatprep.subr.bf16.mxu0 0
        %1403 = vmatpush1.bf16.msra.mxu0 0
        %1404 = vmatprep.subr.bf16.mxu0 0
        %1405 = vmatpush1.bf16.msra.mxu0 0
        %1406 = vmatprep.subr.bf16.mxu0 0
        %1407 = vmatpush1.bf16.msra.mxu0 0
        %1408 = vmatprep.subr.bf16.mxu0 0
        %1409 = vmatpush1.bf16.msra.mxu0 0
        %1410 = vmatprep.subr.bf16.mxu0 0
        %1411 = vmatpush1.bf16.msra.mxu0 0
        %1412 = vmatprep.subr.bf16.mxu0 0
        %1413 = vmatpush1.bf16.msra.mxu0 0
        %1414 = vmatprep.subr.bf16.mxu0 0
        %1415 = vmatpush1.bf16.msra.mxu0 0
        %1416 = vmatprep.subr.bf16.mxu0 0
        %1417 = vmatpush1.bf16.msra.mxu0 0
        %1418 = vmatprep.mubr.bf16.mxu0 0
        %1419 = vmatmul.mubr.bf16.gmra.mrb[0].mxu0 %v1384
        %v1420 = vpop.f32.mrb[0].mxu0
        %v1421 = vadd.f32 0.0, %v1420
        %v1422 = vpop.f32.mrb[0].mxu0
        %v1423 = vpop.f32.mrb[0].mxu0
        %v1424 = vadd.f32 0.0, %v1423
        %v1425 = vpop.f32.mrb[0].mxu0
        %1426 = vdwg.mxu0
        %v1427 = vpack.c.bf16 %v1424, %v1421
        %1428 = vrot.lane.b32.xlu0 %v1049, 32
        %v1429 = vpop.permute.xlu0 %1428
        %1430 = vrot.lane.b32.xlu0 %v1050, 32
        %v1431 = vpop.permute.xlu0 %1430
        %v1433 = vsel %vm1058, %v1429, 0
        %v1436 = vsel %vm1058, %v1431, 0
        %1438 = vmatprep.subr.bf16.mxu0 0
        %1439 = vmatpush1.bf16.xpose.msra.mxu0 %v1436
        %1440 = vmatprep.subr.bf16.mxu0 0
        %1441 = vmatpush1.bf16.xpose.msra.mxu0 0
        %1442 = vmatprep.subr.bf16.mxu0 0
        %1443 = vmatpush1.bf16.xpose.msra.mxu0 0
        %1444 = vmatprep.subr.bf16.mxu0 0
        %1445 = vmatpush1.bf16.xpose.msra.mxu0 0
        %1446 = vmatprep.subr.bf16.mxu0 0
        %1447 = vmatpush1.bf16.xpose.msra.mxu0 0
        %1448 = vmatprep.subr.bf16.mxu0 0
        %1449 = vmatpush1.bf16.xpose.msra.mxu0 0
        %1450 = vmatprep.subr.bf16.mxu0 0
        %1451 = vmatpush1.bf16.xpose.msra.mxu0 0
        %1452 = vmatprep.subr.bf16.mxu0 0
        %1453 = vmatpush1.bf16.xpose.msra.mxu0 0
        %1454 = vmatprep.subr.bf16.mxu0 0
        %1455 = vmatpush1.bf16.xpose.msra.mxu0 0
        %1456 = vmatprep.subr.bf16.mxu0 0
        %1457 = vmatpush1.bf16.xpose.msra.mxu0 0
        %1458 = vmatprep.subr.bf16.mxu0 0
        %1459 = vmatpush1.bf16.xpose.msra.mxu0 0
        %1460 = vmatprep.subr.bf16.mxu0 0
        %1461 = vmatpush1.bf16.xpose.msra.mxu0 0
        %1462 = vmatprep.subr.bf16.mxu0 0
        %1463 = vmatpush1.bf16.xpose.msra.mxu0 0
        %1464 = vmatprep.subr.bf16.mxu0 0
        %1465 = vmatpush1.bf16.xpose.msra.mxu0 0
        %1466 = vmatprep.subr.bf16.mxu0 0
        %1467 = vmatpush1.bf16.xpose.msra.mxu0 0
        %1468 = vmatprep.subr.bf16.mxu0 0
        %1469 = vmatpush1.bf16.xpose.msra.mxu0 0
        %1470 = vmatprep.mubr.bf16.mxu0 0
        %1471 = vmatmul.mubr.bf16.gmra.mrb[0].mxu0 %v1433
        %v1472 = vpop.f32.mrb[0].mxu0
        %v1473 = vadd.f32 %v1056, %v1472
        %v1474 = vpop.f32.mrb[0].mxu0
        %v1475 = vpop.f32.mrb[0].mxu0
        %v1476 = vadd.f32 %v1056, %v1475
        %v1477 = vpop.f32.mrb[0].mxu0
        %1478 = vdwg.mxu0
        %v1479 = vadd.f32 %v1473, %v802
        %v1480 = vadd.f32 %v1476, %v803
        %v1481 = vsel %vm1108, %v1479, -inf
        %1482 = vmax.xlane.f32.xlu0 %v1481
        %v1483 = vpop.xlane.xlu0 %1482
        %v1484 = vsel %vm1108, %v1480, -inf
        %1485 = vmax.xlane.f32.xlu0 %v1484
        %v1486 = vpop.xlane.xlu0 %1485
        %v1487 = vsub.f32 %v1479, %v1483
        %v1488 = vsub.f32 %v1480, %v1486
        %v1489 = vmul.f32 %v1487, 1.442695
        %v1490 = vpow.pop %v1489
        %v1491 = vmul.f32 %v1488, 1.442695
        %v1492 = vpow.pop %v1491
        %v1493 = vsel %vm1108, %v1490, 0.0
        %1494 = vadd.xlane.f32.xlu0 %v1493
        %v1495 = vpop.xlane.xlu0 %1494
        %v1496 = vsel %vm1108, %v1492, 0.0
        %1497 = vadd.xlane.f32.xlu0 %v1496
        %v1498 = vpop.xlane.xlu0 %1497
        %v1499 = vrcp.pop %v1495
        %v1500 = vrcp.pop %v1498
        %v1501 = vmul.f32 %v1490, %v1499
        %v1502 = vmul.f32 %v1492, %v1500
        %v1503 = vpack.c.bf16 %v1502, %v1501
        %1504 = vrot.lane.b32.xlu0 %v1051, 32
        %v1505 = vpop.permute.xlu0 %1504
        %v1508 = vsel %vm1108, %v1503, 0
        %1510 = vmatprep.subr.bf16.mxu0 0
        %1511 = vmatpush1.bf16.msra.mxu0 %v1505
        %1512 = vmatprep.subr.bf16.mxu0 0
        %1513 = vmatpush1.bf16.msra.mxu0 0
        %1514 = vmatprep.subr.bf16.mxu0 0
        %1515 = vmatpush1.bf16.msra.mxu0 0
        %1516 = vmatprep.subr.bf16.mxu0 0
        %1517 = vmatpush1.bf16.msra.mxu0 0
        %1518 = vmatprep.subr.bf16.mxu0 0
        %1519 = vmatpush1.bf16.msra.mxu0 0
        %1520 = vmatprep.subr.bf16.mxu0 0
        %1521 = vmatpush1.bf16.msra.mxu0 0
        %1522 = vmatprep.subr.bf16.mxu0 0
        %1523 = vmatpush1.bf16.msra.mxu0 0
        %1524 = vmatprep.subr.bf16.mxu0 0
        %1525 = vmatpush1.bf16.msra.mxu0 0
        %1526 = vmatprep.subr.bf16.mxu0 0
        %1527 = vmatpush1.bf16.msra.mxu0 0
        %1528 = vmatprep.subr.bf16.mxu0 0
        %1529 = vmatpush1.bf16.msra.mxu0 0
        %1530 = vmatprep.subr.bf16.mxu0 0
        %1531 = vmatpush1.bf16.msra.mxu0 0
        %1532 = vmatprep.subr.bf16.mxu0 0
        %1533 = vmatpush1.bf16.msra.mxu0 0
        %1534 = vmatprep.subr.bf16.mxu0 0
        %1535 = vmatpush1.bf16.msra.mxu0 0
        %1536 = vmatprep.subr.bf16.mxu0 0
        %1537 = vmatpush1.bf16.msra.mxu0 0
        %1538 = vmatprep.subr.bf16.mxu0 0
        %1539 = vmatpush1.bf16.msra.mxu0 0
        %1540 = vmatprep.subr.bf16.mxu0 0
        %1541 = vmatpush1.bf16.msra.mxu0 0
        %1542 = vmatprep.mubr.bf16.mxu0 0
        %1543 = vmatmul.mubr.bf16.gmra.mrb[0].mxu0 %v1508
        %v1544 = vpop.f32.mrb[0].mxu0
        %v1545 = vadd.f32 0.0, %v1544
        %v1546 = vpop.f32.mrb[0].mxu0
        %v1547 = vpop.f32.mrb[0].mxu0
        %v1548 = vadd.f32 0.0, %v1547
        %v1549 = vpop.f32.mrb[0].mxu0
        %1550 = vdwg.mxu0
        %v1551 = vpack.c.bf16 %v1548, %v1545
        %1553 = vrot.lane.b32.xlu0 %v1303, 32
        %v1554 = vpop.permute.xlu0 %1553
        %1556 = vrot.lane.b32.xlu0 %v1427, 64
        %v1557 = vpop.permute.xlu0 %1556
        %1559 = vrot.lane.b32.xlu0 %v1551, 96
        %v1560 = vpop.permute.xlu0 %1559
        %v1563 = vsel %vm1058, %v1176, %v1554
        %vm1564 = vcmask 523264
        %v1566 = vsel %vm1564, %v1563, %v1557
        %vm1567 = vcmask 785408
        %v1569 = vsel %vm1567, %v1566, %v1560
        %v1571 = vld [vmem:[%s4] sm:$0xf]
        %v1572 = vld [vmem:[%s4 + $0x4] sm:$0xf]
        %v1573 = vld [vmem:[%s4 + $0x8] sm:$0xf]
        %v1574 = vld [vmem:[%s4 + $0xc] sm:$0xf]
        %v1575 = vld [vmem:[%s4 + $0x10] sm:$0xf]
        %v1576 = vld [vmem:[%s4 + $0x14] sm:$0xf]
        %v1577 = vld [vmem:[%s4 + $0x18] sm:$0xf]
        %v1578 = vld [vmem:[%s4 + $0x1c] sm:$0xf]
        %v1579 = vld [vmem:[%s4 + $0x20] sm:$0xf]
        %v1580 = vld [vmem:[%s4 + $0x24] sm:$0xf]
        %v1581 = vld [vmem:[%s4 + $0x28] sm:$0xf]
        %v1582 = vld [vmem:[%s4 + $0x2c] sm:$0xf]
        %v1583 = vld [vmem:[%s4 + $0x30] sm:$0xf]
        %v1584 = vld [vmem:[%s4 + $0x34] sm:$0xf]
        %v1585 = vld [vmem:[%s4 + $0x38] sm:$0xf]
        %v1586 = vld [vmem:[%s4 + $0x3c] sm:$0xf]
        %v1603 = vunpack.c.l.b16 %v1571
        %v1604 = vunpack.c.l.b16 %v1572
        %v1605 = vunpack.c.l.b16 %v1573
        %v1606 = vunpack.c.l.b16 %v1574
        %v1607 = vunpack.c.l.b16 %v1575
        %v1608 = vunpack.c.l.b16 %v1576
        %v1609 = vunpack.c.l.b16 %v1577
        %v1610 = vunpack.c.l.b16 %v1578
        %v1611 = vunpack.c.l.b16 %v1579
        %v1612 = vunpack.c.l.b16 %v1580
        %v1613 = vunpack.c.l.b16 %v1581
        %v1614 = vunpack.c.l.b16 %v1582
        %v1615 = vunpack.c.l.b16 %v1583
        %v1616 = vunpack.c.l.b16 %v1584
        %v1617 = vunpack.c.l.b16 %v1585
        %v1618 = vunpack.c.l.b16 %v1586
        %v1619 = vpack.c.b16 %v1604, %v1603
        %v1620 = vpack.c.b16 %v1606, %v1605
        %v1621 = vpack.c.b16 %v1608, %v1607
        %v1622 = vpack.c.b16 %v1610, %v1609
        %v1623 = vpack.c.b16 %v1612, %v1611
        %v1624 = vpack.c.b16 %v1614, %v1613
        %v1625 = vpack.c.b16 %v1616, %v1615
        %v1626 = vpack.c.b16 %v1618, %v1617
        %1635 = vmatprep.subr.bf16.mxu0 0
        %1636 = vmatpush1.bf16.msra.mxu0 %v1619
        %1637 = vmatprep.subr.bf16.mxu0 0
        %1638 = vmatpush1.bf16.msra.mxu0 %v1620
        %1639 = vmatprep.subr.bf16.mxu0 0
        %1640 = vmatpush1.bf16.msra.mxu0 %v1621
        %1641 = vmatprep.subr.bf16.mxu0 0
        %1642 = vmatpush1.bf16.msra.mxu0 %v1622
        %1643 = vmatprep.subr.bf16.mxu0 0
        %1644 = vmatpush1.bf16.msra.mxu0 %v1623
        %1645 = vmatprep.subr.bf16.mxu0 0
        %1646 = vmatpush1.bf16.msra.mxu0 %v1624
        %1647 = vmatprep.subr.bf16.mxu0 0
        %1648 = vmatpush1.bf16.msra.mxu0 %v1625
        %1649 = vmatprep.subr.bf16.mxu0 0
        %1650 = vmatpush1.bf16.msra.mxu0 %v1626
        %1651 = vmatprep.subr.bf16.mxu0 0
        %1652 = vmatpush1.bf16.msra.mxu0 0
        %1653 = vmatprep.subr.bf16.mxu0 0
        %1654 = vmatpush1.bf16.msra.mxu0 0
        %1655 = vmatprep.subr.bf16.mxu0 0
        %1656 = vmatpush1.bf16.msra.mxu0 0
        %1657 = vmatprep.subr.bf16.mxu0 0
        %1658 = vmatpush1.bf16.msra.mxu0 0
        %1659 = vmatprep.subr.bf16.mxu0 0
        %1660 = vmatpush1.bf16.msra.mxu0 0
        %1661 = vmatprep.subr.bf16.mxu0 0
        %1662 = vmatpush1.bf16.msra.mxu0 0
        %1663 = vmatprep.subr.bf16.mxu0 0
        %1664 = vmatpush1.bf16.msra.mxu0 0
        %1665 = vmatprep.subr.bf16.mxu0 0
        %1666 = vmatpush1.bf16.msra.mxu0 0
        %1667 = vmatprep.mubr.bf16.mxu0 0
        %1668 = vmatmul.mubr.bf16.gmra.mrb[0].mxu0 %v1569
        %v1669 = vpop.f32.mrb[0].mxu0
        %v1670 = vadd.f32 0.0, %v1669
        %v1671 = vpop.f32.mrb[0].mxu0
        %v1672 = vpop.f32.mrb[0].mxu0
        %v1673 = vadd.f32 0.0, %v1672
        %v1674 = vpop.f32.mrb[0].mxu0
        %1675 = vdwg.mxu0
        %v1676 = vadd.f32 %v786, %v1670
        %v1677 = vadd.f32 %v789, %v1673
        %v1678 = vld [vmem:[%s5] sm:$0x1]
        %v1679 = vld [vmem:[%s6] sm:$0x1]
        %1680 = vadd.xlane.f32.xlu0 %v1676
        %v1681 = vpop.xlane.xlu0 %1680
        %1682 = vadd.xlane.f32.xlu0 %v1677
        %v1683 = vpop.xlane.xlu0 %1682
        %v1684 = vrcp.pop 128.0
        %v1685 = vmul.f32 %v1681, %v1684
        %v1686 = vmul.f32 %v1683, %v1684
        %v1687 = vmul.f32 %v1676, %v1676
        %v1688 = vmul.f32 %v1677, %v1677
        %1689 = vadd.xlane.f32.xlu0 %v1687
        %v1690 = vpop.xlane.xlu0 %1689
        %1691 = vadd.xlane.f32.xlu0 %v1688
        %v1692 = vpop.xlane.xlu0 %1691
        %v1693 = vmul.f32 %v1690, %v1684
        %v1694 = vmul.f32 %v1692, %v1684
        %v1695 = vmul.f32 %v1685, %v1685
        %v1696 = vmul.f32 %v1686, %v1686
        %v1697 = vsub.f32 %v1693, %v1695
        %v1698 = vsub.f32 %v1694, %v1696
        %v1699 = vmax.f32 %v1697, 0.0
        %v1700 = vmax.f32 %v1698, 0.0
        %v1701 = vsub.f32 %v1676, %v1685
        %v1702 = vsub.f32 %v1677, %v1686
        %v1703 = vadd.f32 %v1699, 1e-06
        %v1704 = vadd.f32 %v1700, 1e-06
        %v1705 = vrsqrt.pop %v1703
        %v1706 = vrsqrt.pop %v1704
        %v1707 = vmul.f32 %v1701, %v1705
        %v1708 = vmul.f32 %v1702, %v1706
        %v1710 = vlaneseq
        %v1711 = vshrl.u32 %v1710, 7
        %v1712 = vsub.s32 0, %v1711
        %v1713 = vrot.slane %v1678, %v1712
        %v1715 = vmul.f32 %v1707, %v1713
        %v1716 = vmul.f32 %v1708, %v1713
        %v1718 = vlaneseq
        %v1719 = vshrl.u32 %v1718, 7
        %v1720 = vsub.s32 0, %v1719
        %v1721 = vrot.slane %v1679, %v1720
        %v1723 = vadd.f32 %v1715, %v1721
        %v1724 = vadd.f32 %v1716, %v1721
        %v1725 = vpack.c.bf16 %v1724, %v1723
        %v1726 = vld [vmem:[#allocation5] sm:$0xff]
        %v1727 = vld [vmem:[#allocation5 + $0x8] sm:$0xff]
        %v1728 = vld [vmem:[#allocation5 + $0x10] sm:$0xff]
        %v1729 = vld [vmem:[#allocation5 + $0x18] sm:$0xff]
        %v1730 = vld [vmem:[#allocation5 + $0x20] sm:$0xff]
        %v1731 = vld [vmem:[#allocation5 + $0x28] sm:$0xff]
        %v1732 = vld [vmem:[#allocation5 + $0x30] sm:$0xff]
        %v1733 = vld [vmem:[#allocation5 + $0x38] sm:$0xff]
        %v1734 = vld [vmem:[#allocation5 + $0x40] sm:$0xff]
        %v1735 = vld [vmem:[#allocation5 + $0x48] sm:$0xff]
        %v1736 = vld [vmem:[#allocation5 + $0x50] sm:$0xff]
        %v1737 = vld [vmem:[#allocation5 + $0x58] sm:$0xff]
        %v1738 = vld [vmem:[#allocation5 + $0x60] sm:$0xff]
        %v1739 = vld [vmem:[#allocation5 + $0x68] sm:$0xff]
        %v1740 = vld [vmem:[#allocation5 + $0x70] sm:$0xff]
        %v1741 = vld [vmem:[#allocation5 + $0x78] sm:$0xff]
        %v1742 = vld [vmem:[%s8] sm:$0x3]
        %v1744 = vlaneseq
        %v1745 = vshrl.u32 %v1744, 7
        %v1746 = vsub.s32 0, %v1745
        %v1747 = vrot.slane %v1742, %v1746
        %v1748 = vlaneseq
        %v1749 = vshrl.u32 %v1748, 7
        %v1750 = vsub.s32 1, %v1749
        %v1751 = vrot.slane %v1742, %v1750
        %v1770 = vunpack.c.l.b16 %v1726
        %v1771 = vunpack.c.h.b16 %v1726
        %v1772 = vunpack.c.l.b16 %v1727
        %v1773 = vunpack.c.h.b16 %v1727
        %v1774 = vunpack.c.l.b16 %v1728
        %v1775 = vunpack.c.h.b16 %v1728
        %v1776 = vunpack.c.l.b16 %v1729
        %v1777 = vunpack.c.h.b16 %v1729
        %v1778 = vunpack.c.l.b16 %v1730
        %v1779 = vunpack.c.h.b16 %v1730
        %v1780 = vunpack.c.l.b16 %v1731
        %v1781 = vunpack.c.h.b16 %v1731
        %v1782 = vunpack.c.l.b16 %v1732
        %v1783 = vunpack.c.h.b16 %v1732
        %v1784 = vunpack.c.l.b16 %v1733
        %v1785 = vunpack.c.h.b16 %v1733
        %v1786 = vunpack.c.l.b16 %v1734
        %v1787 = vunpack.c.h.b16 %v1734
        %v1788 = vunpack.c.l.b16 %v1735
        %v1789 = vunpack.c.h.b16 %v1735
        %v1790 = vunpack.c.l.b16 %v1736
        %v1791 = vunpack.c.h.b16 %v1736
        %v1792 = vunpack.c.l.b16 %v1737
        %v1793 = vunpack.c.h.b16 %v1737
        %v1794 = vunpack.c.l.b16 %v1738
        %v1795 = vunpack.c.h.b16 %v1738
        %v1796 = vunpack.c.l.b16 %v1739
        %v1797 = vunpack.c.h.b16 %v1739
        %v1798 = vunpack.c.l.b16 %v1740
        %v1799 = vunpack.c.h.b16 %v1740
        %v1800 = vunpack.c.l.b16 %v1741
        %v1801 = vunpack.c.h.b16 %v1741
        %v1802 = vpack.c.b16 %v1772, %v1770
        %v1803 = vpack.c.b16 %v1773, %v1771
        %v1804 = vpack.c.b16 %v1776, %v1774
        %v1805 = vpack.c.b16 %v1777, %v1775
        %v1806 = vpack.c.b16 %v1780, %v1778
        %v1807 = vpack.c.b16 %v1781, %v1779
        %v1808 = vpack.c.b16 %v1784, %v1782
        %v1809 = vpack.c.b16 %v1785, %v1783
        %v1810 = vpack.c.b16 %v1788, %v1786
        %v1811 = vpack.c.b16 %v1789, %v1787
        %v1812 = vpack.c.b16 %v1792, %v1790
        %v1813 = vpack.c.b16 %v1793, %v1791
        %v1814 = vpack.c.b16 %v1796, %v1794
        %v1815 = vpack.c.b16 %v1797, %v1795
        %v1816 = vpack.c.b16 %v1800, %v1798
        %v1817 = vpack.c.b16 %v1801, %v1799
        %1834 = vmatprep.subr.bf16.mxu0 %v1803
        %1835 = vmatpush1.bf16.msra.mxu0 %v1802
        %1836 = vmatprep.subr.bf16.mxu0 %v1805
        %1837 = vmatpush1.bf16.msra.mxu0 %v1804
        %1838 = vmatprep.subr.bf16.mxu0 %v1807
        %1839 = vmatpush1.bf16.msra.mxu0 %v1806
        %1840 = vmatprep.subr.bf16.mxu0 %v1809
        %1841 = vmatpush1.bf16.msra.mxu0 %v1808
        %1842 = vmatprep.subr.bf16.mxu0 %v1811
        %1843 = vmatpush1.bf16.msra.mxu0 %v1810
        %1844 = vmatprep.subr.bf16.mxu0 %v1813
        %1845 = vmatpush1.bf16.msra.mxu0 %v1812
        %1846 = vmatprep.subr.bf16.mxu0 %v1815
        %1847 = vmatpush1.bf16.msra.mxu0 %v1814
        %1848 = vmatprep.subr.bf16.mxu0 %v1817
        %1849 = vmatpush1.bf16.msra.mxu0 %v1816
        %1850 = vmatprep.subr.bf16.mxu0 0
        %1851 = vmatpush1.bf16.msra.mxu0 0
        %1852 = vmatprep.subr.bf16.mxu0 0
        %1853 = vmatpush1.bf16.msra.mxu0 0
        %1854 = vmatprep.subr.bf16.mxu0 0
        %1855 = vmatpush1.bf16.msra.mxu0 0
        %1856 = vmatprep.subr.bf16.mxu0 0
        %1857 = vmatpush1.bf16.msra.mxu0 0
        %1858 = vmatprep.subr.bf16.mxu0 0
        %1859 = vmatpush1.bf16.msra.mxu0 0
        %1860 = vmatprep.subr.bf16.mxu0 0
        %1861 = vmatpush1.bf16.msra.mxu0 0
        %1862 = vmatprep.subr.bf16.mxu0 0
        %1863 = vmatpush1.bf16.msra.mxu0 0
        %1864 = vmatprep.subr.bf16.mxu0 0
        %1865 = vmatpush1.bf16.msra.mxu0 0
        %1866 = vmatprep.mubr.bf16.mxu0 0
        %1867 = vmatmul.mubr.bf16.gmra.mrb[0].mxu0 %v1725
        %v1868 = vpop.f32.mrb[0].mxu0
        %v1869 = vadd.f32 %v1747, %v1868
        %v1870 = vpop.f32.mrb[0].mxu0
        %v1871 = vadd.f32 %v1751, %v1870
        %v1872 = vpop.f32.mrb[0].mxu0
        %v1873 = vadd.f32 %v1747, %v1872
        %v1874 = vpop.f32.mrb[0].mxu0
        %v1875 = vadd.f32 %v1751, %v1874
        %1876 = vdwg.mxu0
        %v1877 = vmax.f32 %v1869, 0.0
        %v1878 = vmax.f32 %v1871, 0.0
        %v1879 = vmax.f32 %v1873, 0.0
        %v1880 = vmax.f32 %v1875, 0.0
        %v1881 = vpack.c.bf16 %v1879, %v1877
        %v1882 = vpack.c.bf16 %v1880, %v1878
        %v1883 = vld [vmem:[#allocation7] sm:$0xf]
        %v1884 = vld [vmem:[#allocation7 + $0x4] sm:$0xf]
        %v1885 = vld [vmem:[#allocation7 + $0x8] sm:$0xf]
        %v1886 = vld [vmem:[#allocation7 + $0xc] sm:$0xf]
        %v1887 = vld [vmem:[#allocation7 + $0x10] sm:$0xf]
        %v1888 = vld [vmem:[#allocation7 + $0x14] sm:$0xf]
        %v1889 = vld [vmem:[#allocation7 + $0x18] sm:$0xf]
        %v1890 = vld [vmem:[#allocation7 + $0x1c] sm:$0xf]
        %v1891 = vld [vmem:[#allocation7 + $0x20] sm:$0xf]
        %v1892 = vld [vmem:[#allocation7 + $0x24] sm:$0xf]
        %v1893 = vld [vmem:[#allocation7 + $0x28] sm:$0xf]
        %v1894 = vld [vmem:[#allocation7 + $0x2c] sm:$0xf]
        %v1895 = vld [vmem:[#allocation7 + $0x30] sm:$0xf]
        %v1896 = vld [vmem:[#allocation7 + $0x34] sm:$0xf]
        %v1897 = vld [vmem:[#allocation7 + $0x38] sm:$0xf]
        %v1898 = vld [vmem:[#allocation7 + $0x3c] sm:$0xf]
        %v1899 = vld [vmem:[#allocation7 + $0x40] sm:$0xf]
        %v1900 = vld [vmem:[#allocation7 + $0x44] sm:$0xf]
        %v1901 = vld [vmem:[#allocation7 + $0x48] sm:$0xf]
        %v1902 = vld [vmem:[#allocation7 + $0x4c] sm:$0xf]
        %v1903 = vld [vmem:[#allocation7 + $0x50] sm:$0xf]
        %v1904 = vld [vmem:[#allocation7 + $0x54] sm:$0xf]
        %v1905 = vld [vmem:[#allocation7 + $0x58] sm:$0xf]
        %v1906 = vld [vmem:[#allocation7 + $0x5c] sm:$0xf]
        %v1907 = vld [vmem:[#allocation7 + $0x60] sm:$0xf]
        %v1908 = vld [vmem:[#allocation7 + $0x64] sm:$0xf]
        %v1909 = vld [vmem:[#allocation7 + $0x68] sm:$0xf]
        %v1910 = vld [vmem:[#allocation7 + $0x6c] sm:$0xf]
        %v1911 = vld [vmem:[#allocation7 + $0x70] sm:$0xf]
        %v1912 = vld [vmem:[#allocation7 + $0x74] sm:$0xf]
        %v1913 = vld [vmem:[#allocation7 + $0x78] sm:$0xf]
        %v1914 = vld [vmem:[#allocation7 + $0x7c] sm:$0xf]
        %v1915 = vld [vmem:[%s10] sm:$0x1]
        %v1917 = vlaneseq
        %v1918 = vshrl.u32 %v1917, 7
        %v1919 = vsub.s32 0, %v1918
        %v1920 = vrot.slane %v1915, %v1919
        %v1954 = vunpack.c.l.b16 %v1883
        %v1955 = vunpack.c.l.b16 %v1884
        %v1956 = vunpack.c.l.b16 %v1885
        %v1957 = vunpack.c.l.b16 %v1886
        %v1958 = vunpack.c.l.b16 %v1887
        %v1959 = vunpack.c.l.b16 %v1888
        %v1960 = vunpack.c.l.b16 %v1889
        %v1961 = vunpack.c.l.b16 %v1890
        %v1962 = vunpack.c.l.b16 %v1891
        %v1963 = vunpack.c.l.b16 %v1892
        %v1964 = vunpack.c.l.b16 %v1893
        %v1965 = vunpack.c.l.b16 %v1894
        %v1966 = vunpack.c.l.b16 %v1895
        %v1967 = vunpack.c.l.b16 %v1896
        %v1968 = vunpack.c.l.b16 %v1897
        %v1969 = vunpack.c.l.b16 %v1898
        %v1970 = vunpack.c.l.b16 %v1899
        %v1971 = vunpack.c.l.b16 %v1900
        %v1972 = vunpack.c.l.b16 %v1901
        %v1973 = vunpack.c.l.b16 %v1902
        %v1974 = vunpack.c.l.b16 %v1903
        %v1975 = vunpack.c.l.b16 %v1904
        %v1976 = vunpack.c.l.b16 %v1905
        %v1977 = vunpack.c.l.b16 %v1906
        %v1978 = vunpack.c.l.b16 %v1907
        %v1979 = vunpack.c.l.b16 %v1908
        %v1980 = vunpack.c.l.b16 %v1909
        %v1981 = vunpack.c.l.b16 %v1910
        %v1982 = vunpack.c.l.b16 %v1911
        %v1983 = vunpack.c.l.b16 %v1912
        %v1984 = vunpack.c.l.b16 %v1913
        %v1985 = vunpack.c.l.b16 %v1914
        %v1986 = vpack.c.b16 %v1955, %v1954
        %v1987 = vpack.c.b16 %v1957, %v1956
        %v1988 = vpack.c.b16 %v1959, %v1958
        %v1989 = vpack.c.b16 %v1961, %v1960
        %v1990 = vpack.c.b16 %v1963, %v1962
        %v1991 = vpack.c.b16 %v1965, %v1964
        %v1992 = vpack.c.b16 %v1967, %v1966
        %v1993 = vpack.c.b16 %v1969, %v1968
        %v1994 = vpack.c.b16 %v1971, %v1970
        %v1995 = vpack.c.b16 %v1973, %v1972
        %v1996 = vpack.c.b16 %v1975, %v1974
        %v1997 = vpack.c.b16 %v1977, %v1976
        %v1998 = vpack.c.b16 %v1979, %v1978
        %v1999 = vpack.c.b16 %v1981, %v1980
        %v2000 = vpack.c.b16 %v1983, %v1982
        %v2001 = vpack.c.b16 %v1985, %v1984
        %2018 = vmatprep.subr.bf16.mxu0 0
        %2019 = vmatpush1.bf16.msra.mxu0 %v1986
        %2020 = vmatprep.subr.bf16.mxu0 0
        %2021 = vmatpush1.bf16.msra.mxu0 %v1987
        %2022 = vmatprep.subr.bf16.mxu0 0
        %2023 = vmatpush1.bf16.msra.mxu0 %v1988
        %2024 = vmatprep.subr.bf16.mxu0 0
        %2025 = vmatpush1.bf16.msra.mxu0 %v1989
        %2026 = vmatprep.subr.bf16.mxu0 0
        %2027 = vmatpush1.bf16.msra.mxu0 %v1990
        %2028 = vmatprep.subr.bf16.mxu0 0
        %2029 = vmatpush1.bf16.msra.mxu0 %v1991
        %2030 = vmatprep.subr.bf16.mxu0 0
        %2031 = vmatpush1.bf16.msra.mxu0 %v1992
        %2032 = vmatprep.subr.bf16.mxu0 0
        %2033 = vmatpush1.bf16.msra.mxu0 %v1993
        %2034 = vmatprep.subr.bf16.mxu0 0
        %2035 = vmatpush1.bf16.msra.mxu0 %v1994
        %2036 = vmatprep.subr.bf16.mxu0 0
        %2037 = vmatpush1.bf16.msra.mxu0 %v1995
        %2038 = vmatprep.subr.bf16.mxu0 0
        %2039 = vmatpush1.bf16.msra.mxu0 %v1996
        %2040 = vmatprep.subr.bf16.mxu0 0
        %2041 = vmatpush1.bf16.msra.mxu0 %v1997
        %2042 = vmatprep.subr.bf16.mxu0 0
        %2043 = vmatpush1.bf16.msra.mxu0 %v1998
        %2044 = vmatprep.subr.bf16.mxu0 0
        %2045 = vmatpush1.bf16.msra.mxu0 %v1999
        %2046 = vmatprep.subr.bf16.mxu0 0
        %2047 = vmatpush1.bf16.msra.mxu0 %v2000
        %2048 = vmatprep.subr.bf16.mxu0 0
        %2049 = vmatpush1.bf16.msra.mxu0 %v2001
        %2050 = vmatprep.mubr.bf16.mxu0 %v1882
        %2051 = vmatmul.mubr.bf16.gmra.mrb[0].mxu0 %v1881
        %v2052 = vpop.f32.mrb[0].mxu0
        %v2053 = vadd.f32 %v1920, %v2052
        %v2054 = vpop.f32.mrb[0].mxu0
        %v2055 = vpop.f32.mrb[0].mxu0
        %v2056 = vadd.f32 %v1920, %v2055
        %v2057 = vpop.f32.mrb[0].mxu0
        %2058 = vdwg.mxu0
        %v2059 = vadd.f32 %v1723, %v2053
        %v2060 = vadd.f32 %v1724, %v2056
        %v2061 = vld [vmem:[%s11] sm:$0x1]
        %v2062 = vld [vmem:[%s12] sm:$0x1]
        %2063 = vadd.xlane.f32.xlu0 %v2059
        %v2064 = vpop.xlane.xlu0 %2063
        %2065 = vadd.xlane.f32.xlu0 %v2060
        %v2066 = vpop.xlane.xlu0 %2065
        %v2067 = vmul.f32 %v2064, %v1684
        %v2068 = vmul.f32 %v2066, %v1684
        %v2069 = vmul.f32 %v2059, %v2059
        %v2070 = vmul.f32 %v2060, %v2060
        %2071 = vadd.xlane.f32.xlu0 %v2069
        %v2072 = vpop.xlane.xlu0 %2071
        %2073 = vadd.xlane.f32.xlu0 %v2070
        %v2074 = vpop.xlane.xlu0 %2073
        %v2075 = vmul.f32 %v2072, %v1684
        %v2076 = vmul.f32 %v2074, %v1684
        %v2077 = vmul.f32 %v2067, %v2067
        %v2078 = vmul.f32 %v2068, %v2068
        %v2079 = vsub.f32 %v2075, %v2077
        %v2080 = vsub.f32 %v2076, %v2078
        %v2081 = vmax.f32 %v2079, 0.0
        %v2082 = vmax.f32 %v2080, 0.0
        %v2083 = vsub.f32 %v2059, %v2067
        %v2084 = vsub.f32 %v2060, %v2068
        %v2085 = vadd.f32 %v2081, 1e-06
        %v2086 = vadd.f32 %v2082, 1e-06
        %v2087 = vrsqrt.pop %v2085
        %v2088 = vrsqrt.pop %v2086
        %v2089 = vmul.f32 %v2083, %v2087
        %v2090 = vmul.f32 %v2084, %v2088
        %v2092 = vlaneseq
        %v2093 = vshrl.u32 %v2092, 7
        %v2094 = vsub.s32 0, %v2093
        %v2095 = vrot.slane %v2061, %v2094
        %v2097 = vmul.f32 %v2089, %v2095
        %v2098 = vmul.f32 %v2090, %v2095
        %v2100 = vlaneseq
        %v2101 = vshrl.u32 %v2100, 7
        %v2102 = vsub.s32 0, %v2101
        %v2103 = vrot.slane %v2062, %v2102
        %v2105 = vadd.f32 %v2097, %v2103
        %v2106 = vadd.f32 %v2098, %v2103
        %v2107 = vpack.c.bf16 %v2106, %v2105
        %s2108 = scalar_lea.vmem %s3, 192
        %v2109 = vld [vmem:[%s2108] sm:$0xff]
        %v2110 = vld [vmem:[%s2108 + $0x8] sm:$0xf]
        %v2111 = vld [vmem:[%s2108 + $0xc] sm:$0xff]
        %v2112 = vld [vmem:[%s2108 + $0x14] sm:$0xf]
        %v2113 = vld [vmem:[%s2108 + $0x18] sm:$0xff]
        %v2114 = vld [vmem:[%s2108 + $0x20] sm:$0xf]
        %v2115 = vld [vmem:[%s2108 + $0x24] sm:$0xff]
        %v2116 = vld [vmem:[%s2108 + $0x2c] sm:$0xf]
        %v2117 = vld [vmem:[%s2108 + $0x30] sm:$0xff]
        %v2118 = vld [vmem:[%s2108 + $0x38] sm:$0xf]
        %v2119 = vld [vmem:[%s2108 + $0x3c] sm:$0xff]
        %v2120 = vld [vmem:[%s2108 + $0x44] sm:$0xf]
        %v2121 = vld [vmem:[%s2108 + $0x48] sm:$0xff]
        %v2122 = vld [vmem:[%s2108 + $0x50] sm:$0xf]
        %v2123 = vld [vmem:[%s2108 + $0x54] sm:$0xff]
        %v2124 = vld [vmem:[%s2108 + $0x5c] sm:$0xf]
        %v2125 = vld [vmem:[%s2108 + $0x60] sm:$0xff]
        %v2126 = vld [vmem:[%s2108 + $0x68] sm:$0xf]
        %v2127 = vld [vmem:[%s2108 + $0x6c] sm:$0xff]
        %v2128 = vld [vmem:[%s2108 + $0x74] sm:$0xf]
        %v2129 = vld [vmem:[%s2108 + $0x78] sm:$0xff]
        %v2130 = vld [vmem:[%s2108 + $0x80] sm:$0xf]
        %v2131 = vld [vmem:[%s2108 + $0x84] sm:$0xff]
        %v2132 = vld [vmem:[%s2108 + $0x8c] sm:$0xf]
        %v2133 = vld [vmem:[%s2108 + $0x90] sm:$0xff]
        %v2134 = vld [vmem:[%s2108 + $0x98] sm:$0xf]
        %v2135 = vld [vmem:[%s2108 + $0x9c] sm:$0xff]
        %v2136 = vld [vmem:[%s2108 + $0xa4] sm:$0xf]
        %v2137 = vld [vmem:[%s2108 + $0xa8] sm:$0xff]
        %v2138 = vld [vmem:[%s2108 + $0xb0] sm:$0xf]
        %v2139 = vld [vmem:[%s2108 + $0xb4] sm:$0xff]
        %v2140 = vld [vmem:[%s2108 + $0xbc] sm:$0xf]
        %v2173 = vunpack.c.l.b16 %v2109
        %v2174 = vunpack.c.h.b16 %v2109
        %v2175 = vunpack.c.l.b16 %v2110
        %v2176 = vunpack.c.l.b16 %v2111
        %v2177 = vunpack.c.h.b16 %v2111
        %v2178 = vunpack.c.l.b16 %v2112
        %v2179 = vunpack.c.l.b16 %v2113
        %v2180 = vunpack.c.h.b16 %v2113
        %v2181 = vunpack.c.l.b16 %v2114
        %v2182 = vunpack.c.l.b16 %v2115
        %v2183 = vunpack.c.h.b16 %v2115
        %v2184 = vunpack.c.l.b16 %v2116
        %v2185 = vunpack.c.l.b16 %v2117
        %v2186 = vunpack.c.h.b16 %v2117
        %v2187 = vunpack.c.l.b16 %v2118
        %v2188 = vunpack.c.l.b16 %v2119
        %v2189 = vunpack.c.h.b16 %v2119
        %v2190 = vunpack.c.l.b16 %v2120
        %v2191 = vunpack.c.l.b16 %v2121
        %v2192 = vunpack.c.h.b16 %v2121
        %v2193 = vunpack.c.l.b16 %v2122
        %v2194 = vunpack.c.l.b16 %v2123
        %v2195 = vunpack.c.h.b16 %v2123
        %v2196 = vunpack.c.l.b16 %v2124
        %v2197 = vunpack.c.l.b16 %v2125
        %v2198 = vunpack.c.h.b16 %v2125
        %v2199 = vunpack.c.l.b16 %v2126
        %v2200 = vunpack.c.l.b16 %v2127
        %v2201 = vunpack.c.h.b16 %v2127
        %v2202 = vunpack.c.l.b16 %v2128
        %v2203 = vunpack.c.l.b16 %v2129
        %v2204 = vunpack.c.h.b16 %v2129
        %v2205 = vunpack.c.l.b16 %v2130
        %v2206 = vunpack.c.l.b16 %v2131
        %v2207 = vunpack.c.h.b16 %v2131
        %v2208 = vunpack.c.l.b16 %v2132
        %v2209 = vunpack.c.l.b16 %v2133
        %v2210 = vunpack.c.h.b16 %v2133
        %v2211 = vunpack.c.l.b16 %v2134
        %v2212 = vunpack.c.l.b16 %v2135
        %v2213 = vunpack.c.h.b16 %v2135
        %v2214 = vunpack.c.l.b16 %v2136
        %v2215 = vunpack.c.l.b16 %v2137
        %v2216 = vunpack.c.h.b16 %v2137
        %v2217 = vunpack.c.l.b16 %v2138
        %v2218 = vunpack.c.l.b16 %v2139
        %v2219 = vunpack.c.h.b16 %v2139
        %v2220 = vunpack.c.l.b16 %v2140
        %v2221 = vpack.c.b16 %v2176, %v2173
        %v2222 = vpack.c.b16 %v2177, %v2174
        %v2223 = vpack.c.b16 %v2178, %v2175
        %v2224 = vpack.c.b16 %v2182, %v2179
        %v2225 = vpack.c.b16 %v2183, %v2180
        %v2226 = vpack.c.b16 %v2184, %v2181
        %v2227 = vpack.c.b16 %v2188, %v2185
        %v2228 = vpack.c.b16 %v2189, %v2186
        %v2229 = vpack.c.b16 %v2190, %v2187
        %v2230 = vpack.c.b16 %v2194, %v2191
        %v2231 = vpack.c.b16 %v2195, %v2192
        %v2232 = vpack.c.b16 %v2196, %v2193
        %v2233 = vpack.c.b16 %v2200, %v2197
        %v2234 = vpack.c.b16 %v2201, %v2198
        %v2235 = vpack.c.b16 %v2202, %v2199
        %v2236 = vpack.c.b16 %v2206, %v2203
        %v2237 = vpack.c.b16 %v2207, %v2204
        %v2238 = vpack.c.b16 %v2208, %v2205
        %v2239 = vpack.c.b16 %v2212, %v2209
        %v2240 = vpack.c.b16 %v2213, %v2210
        %v2241 = vpack.c.b16 %v2214, %v2211
        %v2242 = vpack.c.b16 %v2218, %v2215
        %v2243 = vpack.c.b16 %v2219, %v2216
        %v2244 = vpack.c.b16 %v2220, %v2217
        %2269 = vmatprep.subr.bf16.mxu0 %v2222
        %2270 = vmatpush1.bf16.msra.mxu0 %v2221
        %2271 = vmatprep.subr.bf16.mxu0 %v2225
        %2272 = vmatpush1.bf16.msra.mxu0 %v2224
        %2273 = vmatprep.subr.bf16.mxu0 %v2228
        %2274 = vmatpush1.bf16.msra.mxu0 %v2227
        %2275 = vmatprep.subr.bf16.mxu0 %v2231
        %2276 = vmatpush1.bf16.msra.mxu0 %v2230
        %2277 = vmatprep.subr.bf16.mxu0 %v2234
        %2278 = vmatpush1.bf16.msra.mxu0 %v2233
        %2279 = vmatprep.subr.bf16.mxu0 %v2237
        %2280 = vmatpush1.bf16.msra.mxu0 %v2236
        %2281 = vmatprep.subr.bf16.mxu0 %v2240
        %2282 = vmatpush1.bf16.msra.mxu0 %v2239
        %2283 = vmatprep.subr.bf16.mxu0 %v2243
        %2284 = vmatpush1.bf16.msra.mxu0 %v2242
        %2285 = vmatprep.subr.bf16.mxu0 0
        %2286 = vmatpush1.bf16.msra.mxu0 0
        %2287 = vmatprep.subr.bf16.mxu0 0
        %2288 = vmatpush1.bf16.msra.mxu0 0
        %2289 = vmatprep.subr.bf16.mxu0 0
        %2290 = vmatpush1.bf16.msra.mxu0 0
        %2291 = vmatprep.subr.bf16.mxu0 0
        %2292 = vmatpush1.bf16.msra.mxu0 0
        %2293 = vmatprep.subr.bf16.mxu0 0
        %2294 = vmatpush1.bf16.msra.mxu0 0
        %2295 = vmatprep.subr.bf16.mxu0 0
        %2296 = vmatpush1.bf16.msra.mxu0 0
        %2297 = vmatprep.subr.bf16.mxu0 0
        %2298 = vmatpush1.bf16.msra.mxu0 0
        %2299 = vmatprep.subr.bf16.mxu0 0
        %2300 = vmatpush1.bf16.msra.mxu0 0
        %2301 = vmatprep.mubr.bf16.mxu0 0
        %2302 = vmatmul.mubr.bf16.gmra.mrb[0].mxu0 %v2107
        %v2303 = vpop.f32.mrb[0].mxu0
        %v2304 = vadd.f32 0.0, %v2303
        %v2305 = vpop.f32.mrb[0].mxu0
        %v2306 = vadd.f32 0.0, %v2305
        %v2307 = vpop.f32.mrb[0].mxu0
        %v2308 = vadd.f32 0.0, %v2307
        %v2309 = vpop.f32.mrb[0].mxu0
        %v2310 = vadd.f32 0.0, %v2309
        %2311 = vdwg.mxu0
        %2312 = vmatprep.subr.bf16.mxu0 0
        %2313 = vmatpush1.bf16.msra.mxu0 %v2223
        %2314 = vmatprep.subr.bf16.mxu0 0
        %2315 = vmatpush1.bf16.msra.mxu0 %v2226
        %2316 = vmatprep.subr.bf16.mxu0 0
        %2317 = vmatpush1.bf16.msra.mxu0 %v2229
        %2318 = vmatprep.subr.bf16.mxu0 0
        %2319 = vmatpush1.bf16.msra.mxu0 %v2232
        %2320 = vmatprep.subr.bf16.mxu0 0
        %2321 = vmatpush1.bf16.msra.mxu0 %v2235
        %2322 = vmatprep.subr.bf16.mxu0 0
        %2323 = vmatpush1.bf16.msra.mxu0 %v2238
        %2324 = vmatprep.subr.bf16.mxu0 0
        %2325 = vmatpush1.bf16.msra.mxu0 %v2241
        %2326 = vmatprep.subr.bf16.mxu0 0
        %2327 = vmatpush1.bf16.msra.mxu0 %v2244
        %2328 = vmatprep.subr.bf16.mxu0 0
        %2329 = vmatpush1.bf16.msra.mxu0 0
        %2330 = vmatprep.subr.bf16.mxu0 0
        %2331 = vmatpush1.bf16.msra.mxu0 0
        %2332 = vmatprep.subr.bf16.mxu0 0
        %2333 = vmatpush1.bf16.msra.mxu0 0
        %2334 = vmatprep.subr.bf16.mxu0 0
        %2335 = vmatpush1.bf16.msra.mxu0 0
        %2336 = vmatprep.subr.bf16.mxu0 0
        %2337 = vmatpush1.bf16.msra.mxu0 0
        %2338 = vmatprep.subr.bf16.mxu0 0
        %2339 = vmatpush1.bf16.msra.mxu0 0
        %2340 = vmatprep.subr.bf16.mxu0 0
        %2341 = vmatpush1.bf16.msra.mxu0 0
        %2342 = vmatprep.subr.bf16.mxu0 0
        %2343 = vmatpush1.bf16.msra.mxu0 0
        %2344 = vmatprep.mubr.bf16.mxu0 0
        %2345 = vmatmul.mubr.bf16.gmra.mrb[0].mxu0 %v2107
        %v2346 = vpop.f32.mrb[0].mxu0
        %v2347 = vadd.f32 0.0, %v2346
        %v2348 = vpop.f32.mrb[0].mxu0
        %v2349 = vpop.f32.mrb[0].mxu0
        %v2350 = vadd.f32 0.0, %v2349
        %v2351 = vpop.f32.mrb[0].mxu0
        %2352 = vdwg.mxu0
        %v2353 = vpack.c.bf16 %v2308, %v2304
        %v2354 = vpack.c.bf16 %v2310, %v2306
        %v2355 = vpack.c.bf16 %v2350, %v2347
        %v2357 = vsel %vm1058, %v2353, 0
        %v2360 = vsel %vm1058, %v2354, 0
        %2362 = vmatprep.subr.bf16.mxu0 0
        %2363 = vmatpush1.bf16.xpose.msra.mxu0 %v2360
        %2364 = vmatprep.subr.bf16.mxu0 0
        %2365 = vmatpush1.bf16.xpose.msra.mxu0 0
        %2366 = vmatprep.subr.bf16.mxu0 0
        %2367 = vmatpush1.bf16.xpose.msra.mxu0 0
        %2368 = vmatprep.subr.bf16.mxu0 0
        %2369 = vmatpush1.bf16.xpose.msra.mxu0 0
        %2370 = vmatprep.subr.bf16.mxu0 0
        %2371 = vmatpush1.bf16.xpose.msra.mxu0 0
        %2372 = vmatprep.subr.bf16.mxu0 0
        %2373 = vmatpush1.bf16.xpose.msra.mxu0 0
        %2374 = vmatprep.subr.bf16.mxu0 0
        %2375 = vmatpush1.bf16.xpose.msra.mxu0 0
        %2376 = vmatprep.subr.bf16.mxu0 0
        %2377 = vmatpush1.bf16.xpose.msra.mxu0 0
        %2378 = vmatprep.subr.bf16.mxu0 0
        %2379 = vmatpush1.bf16.xpose.msra.mxu0 0
        %2380 = vmatprep.subr.bf16.mxu0 0
        %2381 = vmatpush1.bf16.xpose.msra.mxu0 0
        %2382 = vmatprep.subr.bf16.mxu0 0
        %2383 = vmatpush1.bf16.xpose.msra.mxu0 0
        %2384 = vmatprep.subr.bf16.mxu0 0
        %2385 = vmatpush1.bf16.xpose.msra.mxu0 0
        %2386 = vmatprep.subr.bf16.mxu0 0
        %2387 = vmatpush1.bf16.xpose.msra.mxu0 0
        %2388 = vmatprep.subr.bf16.mxu0 0
        %2389 = vmatpush1.bf16.xpose.msra.mxu0 0
        %2390 = vmatprep.subr.bf16.mxu0 0
        %2391 = vmatpush1.bf16.xpose.msra.mxu0 0
        %2392 = vmatprep.subr.bf16.mxu0 0
        %2393 = vmatpush1.bf16.xpose.msra.mxu0 0
        %2394 = vmatprep.mubr.bf16.mxu0 0
        %2395 = vmatmul.mubr.bf16.gmra.mrb[0].mxu0 %v2357
        %v2396 = vpop.f32.mrb[0].mxu0
        %v2397 = vadd.f32 %v1056, %v2396
        %v2398 = vpop.f32.mrb[0].mxu0
        %v2399 = vpop.f32.mrb[0].mxu0
        %v2400 = vadd.f32 %v1056, %v2399
        %v2401 = vpop.f32.mrb[0].mxu0
        %2402 = vdwg.mxu0
        %v2403 = vadd.f32 %v2397, %v802
        %v2404 = vadd.f32 %v2400, %v803
        %v2405 = vsel %vm1108, %v2403, -inf
        %2406 = vmax.xlane.f32.xlu0 %v2405
        %v2407 = vpop.xlane.xlu0 %2406
        %v2408 = vsel %vm1108, %v2404, -inf
        %2409 = vmax.xlane.f32.xlu0 %v2408
        %v2410 = vpop.xlane.xlu0 %2409
        %v2411 = vsub.f32 %v2403, %v2407
        %v2412 = vsub.f32 %v2404, %v2410
        %v2413 = vmul.f32 %v2411, 1.442695
        %v2414 = vpow.pop %v2413
        %v2415 = vmul.f32 %v2412, 1.442695
        %v2416 = vpow.pop %v2415
        %v2417 = vsel %vm1108, %v2414, 0.0
        %2418 = vadd.xlane.f32.xlu0 %v2417
        %v2419 = vpop.xlane.xlu0 %2418
        %v2420 = vsel %vm1108, %v2416, 0.0
        %2421 = vadd.xlane.f32.xlu0 %v2420
        %v2422 = vpop.xlane.xlu0 %2421
        %v2423 = vrcp.pop %v2419
        %v2424 = vrcp.pop %v2422
        %v2425 = vmul.f32 %v2414, %v2423
        %v2426 = vmul.f32 %v2416, %v2424
        %v2427 = vpack.c.bf16 %v2426, %v2425
        %v2429 = vsel %vm1108, %v2427, 0
        %2431 = vmatprep.subr.bf16.mxu0 0
        %2432 = vmatpush1.bf16.msra.mxu0 %v2355
        %2433 = vmatprep.subr.bf16.mxu0 0
        %2434 = vmatpush1.bf16.msra.mxu0 0
        %2435 = vmatprep.subr.bf16.mxu0 0
        %2436 = vmatpush1.bf16.msra.mxu0 0
        %2437 = vmatprep.subr.bf16.mxu0 0
        %2438 = vmatpush1.bf16.msra.mxu0 0
        %2439 = vmatprep.subr.bf16.mxu0 0
        %2440 = vmatpush1.bf16.msra.mxu0 0
        %2441 = vmatprep.subr.bf16.mxu0 0
        %2442 = vmatpush1.bf16.msra.mxu0 0
        %2443 = vmatprep.subr.bf16.mxu0 0
        %2444 = vmatpush1.bf16.msra.mxu0 0
        %2445 = vmatprep.subr.bf16.mxu0 0
        %2446 = vmatpush1.bf16.msra.mxu0 0
        %2447 = vmatprep.subr.bf16.mxu0 0
        %2448 = vmatpush1.bf16.msra.mxu0 0
        %2449 = vmatprep.subr.bf16.mxu0 0
        %2450 = vmatpush1.bf16.msra.mxu0 0
        %2451 = vmatprep.subr.bf16.mxu0 0
        %2452 = vmatpush1.bf16.msra.mxu0 0
        %2453 = vmatprep.subr.bf16.mxu0 0
        %2454 = vmatpush1.bf16.msra.mxu0 0
        %2455 = vmatprep.subr.bf16.mxu0 0
        %2456 = vmatpush1.bf16.msra.mxu0 0
        %2457 = vmatprep.subr.bf16.mxu0 0
        %2458 = vmatpush1.bf16.msra.mxu0 0
        %2459 = vmatprep.subr.bf16.mxu0 0
        %2460 = vmatpush1.bf16.msra.mxu0 0
        %2461 = vmatprep.subr.bf16.mxu0 0
        %2462 = vmatpush1.bf16.msra.mxu0 0
        %2463 = vmatprep.mubr.bf16.mxu0 0
        %2464 = vmatmul.mubr.bf16.gmra.mrb[0].mxu0 %v2429
        %v2465 = vpop.f32.mrb[0].mxu0
        %v2466 = vadd.f32 0.0, %v2465
        %v2467 = vpop.f32.mrb[0].mxu0
        %v2468 = vpop.f32.mrb[0].mxu0
        %v2469 = vadd.f32 0.0, %v2468
        %v2470 = vpop.f32.mrb[0].mxu0
        %2471 = vdwg.mxu0
        %v2472 = vpack.c.bf16 %v2469, %v2466
        %2474 = vrot.lane.b32.xlu0 %v2353, 96
        %v2475 = vpop.permute.xlu0 %2474
        %2477 = vrot.lane.b32.xlu0 %v2354, 96
        %v2478 = vpop.permute.xlu0 %2477
        %v2480 = vsel %vm1058, %v2475, 0
        %v2483 = vsel %vm1058, %v2478, 0
        %2485 = vmatprep.subr.bf16.mxu0 0
        %2486 = vmatpush1.bf16.xpose.msra.mxu0 %v2483
        %2487 = vmatprep.subr.bf16.mxu0 0
        %2488 = vmatpush1.bf16.xpose.msra.mxu0 0
        %2489 = vmatprep.subr.bf16.mxu0 0
        %2490 = vmatpush1.bf16.xpose.msra.mxu0 0
        %2491 = vmatprep.subr.bf16.mxu0 0
        %2492 = vmatpush1.bf16.xpose.msra.mxu0 0
        %2493 = vmatprep.subr.bf16.mxu0 0
        %2494 = vmatpush1.bf16.xpose.msra.mxu0 0
        %2495 = vmatprep.subr.bf16.mxu0 0
        %2496 = vmatpush1.bf16.xpose.msra.mxu0 0
        %2497 = vmatprep.subr.bf16.mxu0 0
        %2498 = vmatpush1.bf16.xpose.msra.mxu0 0
        %2499 = vmatprep.subr.bf16.mxu0 0
        %2500 = vmatpush1.bf16.xpose.msra.mxu0 0
        %2501 = vmatprep.subr.bf16.mxu0 0
        %2502 = vmatpush1.bf16.xpose.msra.mxu0 0
        %2503 = vmatprep.subr.bf16.mxu0 0
        %2504 = vmatpush1.bf16.xpose.msra.mxu0 0
        %2505 = vmatprep.subr.bf16.mxu0 0
        %2506 = vmatpush1.bf16.xpose.msra.mxu0 0
        %2507 = vmatprep.subr.bf16.mxu0 0
        %2508 = vmatpush1.bf16.xpose.msra.mxu0 0
        %2509 = vmatprep.subr.bf16.mxu0 0
        %2510 = vmatpush1.bf16.xpose.msra.mxu0 0
        %2511 = vmatprep.subr.bf16.mxu0 0
        %2512 = vmatpush1.bf16.xpose.msra.mxu0 0
        %2513 = vmatprep.subr.bf16.mxu0 0
        %2514 = vmatpush1.bf16.xpose.msra.mxu0 0
        %2515 = vmatprep.subr.bf16.mxu0 0
        %2516 = vmatpush1.bf16.xpose.msra.mxu0 0
        %2517 = vmatprep.mubr.bf16.mxu0 0
        %2518 = vmatmul.mubr.bf16.gmra.mrb[0].mxu0 %v2480
        %v2519 = vpop.f32.mrb[0].mxu0
        %v2520 = vadd.f32 %v1056, %v2519
        %v2521 = vpop.f32.mrb[0].mxu0
        %v2522 = vpop.f32.mrb[0].mxu0
        %v2523 = vadd.f32 %v1056, %v2522
        %v2524 = vpop.f32.mrb[0].mxu0
        %2525 = vdwg.mxu0
        %v2526 = vadd.f32 %v2520, %v802
        %v2527 = vadd.f32 %v2523, %v803
        %v2528 = vsel %vm1108, %v2526, -inf
        %2529 = vmax.xlane.f32.xlu0 %v2528
        %v2530 = vpop.xlane.xlu0 %2529
        %v2531 = vsel %vm1108, %v2527, -inf
        %2532 = vmax.xlane.f32.xlu0 %v2531
        %v2533 = vpop.xlane.xlu0 %2532
        %v2534 = vsub.f32 %v2526, %v2530
        %v2535 = vsub.f32 %v2527, %v2533
        %v2536 = vmul.f32 %v2534, 1.442695
        %v2537 = vpow.pop %v2536
        %v2538 = vmul.f32 %v2535, 1.442695
        %v2539 = vpow.pop %v2538
        %v2540 = vsel %vm1108, %v2537, 0.0
        %2541 = vadd.xlane.f32.xlu0 %v2540
        %v2542 = vpop.xlane.xlu0 %2541
        %v2543 = vsel %vm1108, %v2539, 0.0
        %2544 = vadd.xlane.f32.xlu0 %v2543
        %v2545 = vpop.xlane.xlu0 %2544
        %v2546 = vrcp.pop %v2542
        %v2547 = vrcp.pop %v2545
        %v2548 = vmul.f32 %v2537, %v2546
        %v2549 = vmul.f32 %v2539, %v2547
        %v2550 = vpack.c.bf16 %v2549, %v2548
        %2552 = vrot.lane.b32.xlu0 %v2355, 96
        %v2553 = vpop.permute.xlu0 %2552
        %v2556 = vsel %vm1108, %v2550, 0
        %2558 = vmatprep.subr.bf16.mxu0 0
        %2559 = vmatpush1.bf16.msra.mxu0 %v2553
        %2560 = vmatprep.subr.bf16.mxu0 0
        %2561 = vmatpush1.bf16.msra.mxu0 0
        %2562 = vmatprep.subr.bf16.mxu0 0
        %2563 = vmatpush1.bf16.msra.mxu0 0
        %2564 = vmatprep.subr.bf16.mxu0 0
        %2565 = vmatpush1.bf16.msra.mxu0 0
        %2566 = vmatprep.subr.bf16.mxu0 0
        %2567 = vmatpush1.bf16.msra.mxu0 0
        %2568 = vmatprep.subr.bf16.mxu0 0
        %2569 = vmatpush1.bf16.msra.mxu0 0
        %2570 = vmatprep.subr.bf16.mxu0 0
        %2571 = vmatpush1.bf16.msra.mxu0 0
        %2572 = vmatprep.subr.bf16.mxu0 0
        %2573 = vmatpush1.bf16.msra.mxu0 0
        %2574 = vmatprep.subr.bf16.mxu0 0
        %2575 = vmatpush1.bf16.msra.mxu0 0
        %2576 = vmatprep.subr.bf16.mxu0 0
        %2577 = vmatpush1.bf16.msra.mxu0 0
        %2578 = vmatprep.subr.bf16.mxu0 0
        %2579 = vmatpush1.bf16.msra.mxu0 0
        %2580 = vmatprep.subr.bf16.mxu0 0
        %2581 = vmatpush1.bf16.msra.mxu0 0
        %2582 = vmatprep.subr.bf16.mxu0 0
        %2583 = vmatpush1.bf16.msra.mxu0 0
        %2584 = vmatprep.subr.bf16.mxu0 0
        %2585 = vmatpush1.bf16.msra.mxu0 0
        %2586 = vmatprep.subr.bf16.mxu0 0
        %2587 = vmatpush1.bf16.msra.mxu0 0
        %2588 = vmatprep.subr.bf16.mxu0 0
        %2589 = vmatpush1.bf16.msra.mxu0 0
        %2590 = vmatprep.mubr.bf16.mxu0 0
        %2591 = vmatmul.mubr.bf16.gmra.mrb[0].mxu0 %v2556
        %v2592 = vpop.f32.mrb[0].mxu0
        %v2593 = vadd.f32 0.0, %v2592
        %v2594 = vpop.f32.mrb[0].mxu0
        %v2595 = vpop.f32.mrb[0].mxu0
        %v2596 = vadd.f32 0.0, %v2595
        %v2597 = vpop.f32.mrb[0].mxu0
        %2598 = vdwg.mxu0
        %v2599 = vpack.c.bf16 %v2596, %v2593
        %2600 = vrot.lane.b32.xlu0 %v2353, 64
        %v2601 = vpop.permute.xlu0 %2600
        %2602 = vrot.lane.b32.xlu0 %v2354, 64
        %v2603 = vpop.permute.xlu0 %2602
        %v2605 = vsel %vm1058, %v2601, 0
        %v2608 = vsel %vm1058, %v2603, 0
        %2610 = vmatprep.subr.bf16.mxu0 0
        %2611 = vmatpush1.bf16.xpose.msra.mxu0 %v2608
        %2612 = vmatprep.subr.bf16.mxu0 0
        %2613 = vmatpush1.bf16.xpose.msra.mxu0 0
        %2614 = vmatprep.subr.bf16.mxu0 0
        %2615 = vmatpush1.bf16.xpose.msra.mxu0 0
        %2616 = vmatprep.subr.bf16.mxu0 0
        %2617 = vmatpush1.bf16.xpose.msra.mxu0 0
        %2618 = vmatprep.subr.bf16.mxu0 0
        %2619 = vmatpush1.bf16.xpose.msra.mxu0 0
        %2620 = vmatprep.subr.bf16.mxu0 0
        %2621 = vmatpush1.bf16.xpose.msra.mxu0 0
        %2622 = vmatprep.subr.bf16.mxu0 0
        %2623 = vmatpush1.bf16.xpose.msra.mxu0 0
        %2624 = vmatprep.subr.bf16.mxu0 0
        %2625 = vmatpush1.bf16.xpose.msra.mxu0 0
        %2626 = vmatprep.subr.bf16.mxu0 0
        %2627 = vmatpush1.bf16.xpose.msra.mxu0 0
        %2628 = vmatprep.subr.bf16.mxu0 0
        %2629 = vmatpush1.bf16.xpose.msra.mxu0 0
        %2630 = vmatprep.subr.bf16.mxu0 0
        %2631 = vmatpush1.bf16.xpose.msra.mxu0 0
        %2632 = vmatprep.subr.bf16.mxu0 0
        %2633 = vmatpush1.bf16.xpose.msra.mxu0 0
        %2634 = vmatprep.subr.bf16.mxu0 0
        %2635 = vmatpush1.bf16.xpose.msra.mxu0 0
        %2636 = vmatprep.subr.bf16.mxu0 0
        %2637 = vmatpush1.bf16.xpose.msra.mxu0 0
        %2638 = vmatprep.subr.bf16.mxu0 0
        %2639 = vmatpush1.bf16.xpose.msra.mxu0 0
        %2640 = vmatprep.subr.bf16.mxu0 0
        %2641 = vmatpush1.bf16.xpose.msra.mxu0 0
        %2642 = vmatprep.mubr.bf16.mxu0 0
        %2643 = vmatmul.mubr.bf16.gmra.mrb[0].mxu0 %v2605
        %v2644 = vpop.f32.mrb[0].mxu0
        %v2645 = vadd.f32 %v1056, %v2644
        %v2646 = vpop.f32.mrb[0].mxu0
        %v2647 = vpop.f32.mrb[0].mxu0
        %v2648 = vadd.f32 %v1056, %v2647
        %v2649 = vpop.f32.mrb[0].mxu0
        %2650 = vdwg.mxu0
        %v2651 = vadd.f32 %v2645, %v802
        %v2652 = vadd.f32 %v2648, %v803
        %v2653 = vsel %vm1108, %v2651, -inf
        %2654 = vmax.xlane.f32.xlu0 %v2653
        %v2655 = vpop.xlane.xlu0 %2654
        %v2656 = vsel %vm1108, %v2652, -inf
        %2657 = vmax.xlane.f32.xlu0 %v2656
        %v2658 = vpop.xlane.xlu0 %2657
        %v2659 = vsub.f32 %v2651, %v2655
        %v2660 = vsub.f32 %v2652, %v2658
        %v2661 = vmul.f32 %v2659, 1.442695
        %v2662 = vpow.pop %v2661
        %v2663 = vmul.f32 %v2660, 1.442695
        %v2664 = vpow.pop %v2663
        %v2665 = vsel %vm1108, %v2662, 0.0
        %2666 = vadd.xlane.f32.xlu0 %v2665
        %v2667 = vpop.xlane.xlu0 %2666
        %v2668 = vsel %vm1108, %v2664, 0.0
        %2669 = vadd.xlane.f32.xlu0 %v2668
        %v2670 = vpop.xlane.xlu0 %2669
        %v2671 = vrcp.pop %v2667
        %v2672 = vrcp.pop %v2670
        %v2673 = vmul.f32 %v2662, %v2671
        %v2674 = vmul.f32 %v2664, %v2672
        %v2675 = vpack.c.bf16 %v2674, %v2673
        %2676 = vrot.lane.b32.xlu0 %v2355, 64
        %v2677 = vpop.permute.xlu0 %2676
        %v2680 = vsel %vm1108, %v2675, 0
        %2682 = vmatprep.subr.bf16.mxu0 0
        %2683 = vmatpush1.bf16.msra.mxu0 %v2677
        %2684 = vmatprep.subr.bf16.mxu0 0
        %2685 = vmatpush1.bf16.msra.mxu0 0
        %2686 = vmatprep.subr.bf16.mxu0 0
        %2687 = vmatpush1.bf16.msra.mxu0 0
        %2688 = vmatprep.subr.bf16.mxu0 0
        %2689 = vmatpush1.bf16.msra.mxu0 0
        %2690 = vmatprep.subr.bf16.mxu0 0
        %2691 = vmatpush1.bf16.msra.mxu0 0
        %2692 = vmatprep.subr.bf16.mxu0 0
        %2693 = vmatpush1.bf16.msra.mxu0 0
        %2694 = vmatprep.subr.bf16.mxu0 0
        %2695 = vmatpush1.bf16.msra.mxu0 0
        %2696 = vmatprep.subr.bf16.mxu0 0
        %2697 = vmatpush1.bf16.msra.mxu0 0
        %2698 = vmatprep.subr.bf16.mxu0 0
        %2699 = vmatpush1.bf16.msra.mxu0 0
        %2700 = vmatprep.subr.bf16.mxu0 0
        %2701 = vmatpush1.bf16.msra.mxu0 0
        %2702 = vmatprep.subr.bf16.mxu0 0
        %2703 = vmatpush1.bf16.msra.mxu0 0
        %2704 = vmatprep.subr.bf16.mxu0 0
        %2705 = vmatpush1.bf16.msra.mxu0 0
        %2706 = vmatprep.subr.bf16.mxu0 0
        %2707 = vmatpush1.bf16.msra.mxu0 0
        %2708 = vmatprep.subr.bf16.mxu0 0
        %2709 = vmatpush1.bf16.msra.mxu0 0
        %2710 = vmatprep.subr.bf16.mxu0 0
        %2711 = vmatpush1.bf16.msra.mxu0 0
        %2712 = vmatprep.subr.bf16.mxu0 0
        %2713 = vmatpush1.bf16.msra.mxu0 0
        %2714 = vmatprep.mubr.bf16.mxu0 0
        %2715 = vmatmul.mubr.bf16.gmra.mrb[0].mxu0 %v2680
        %v2716 = vpop.f32.mrb[0].mxu0
        %v2717 = vadd.f32 0.0, %v2716
        %v2718 = vpop.f32.mrb[0].mxu0
        %v2719 = vpop.f32.mrb[0].mxu0
        %v2720 = vadd.f32 0.0, %v2719
        %v2721 = vpop.f32.mrb[0].mxu0
        %2722 = vdwg.mxu0
        %v2723 = vpack.c.bf16 %v2720, %v2717
        %2724 = vrot.lane.b32.xlu0 %v2353, 32
        %v2725 = vpop.permute.xlu0 %2724
        %2726 = vrot.lane.b32.xlu0 %v2354, 32
        %v2727 = vpop.permute.xlu0 %2726
        %v2729 = vsel %vm1058, %v2725, 0
        %v2732 = vsel %vm1058, %v2727, 0
        %2734 = vmatprep.subr.bf16.mxu0 0
        %2735 = vmatpush1.bf16.xpose.msra.mxu0 %v2732
        %2736 = vmatprep.subr.bf16.mxu0 0
        %2737 = vmatpush1.bf16.xpose.msra.mxu0 0
        %2738 = vmatprep.subr.bf16.mxu0 0
        %2739 = vmatpush1.bf16.xpose.msra.mxu0 0
        %2740 = vmatprep.subr.bf16.mxu0 0
        %2741 = vmatpush1.bf16.xpose.msra.mxu0 0
        %2742 = vmatprep.subr.bf16.mxu0 0
        %2743 = vmatpush1.bf16.xpose.msra.mxu0 0
        %2744 = vmatprep.subr.bf16.mxu0 0
        %2745 = vmatpush1.bf16.xpose.msra.mxu0 0
        %2746 = vmatprep.subr.bf16.mxu0 0
        %2747 = vmatpush1.bf16.xpose.msra.mxu0 0
        %2748 = vmatprep.subr.bf16.mxu0 0
        %2749 = vmatpush1.bf16.xpose.msra.mxu0 0
        %2750 = vmatprep.subr.bf16.mxu0 0
        %2751 = vmatpush1.bf16.xpose.msra.mxu0 0
        %2752 = vmatprep.subr.bf16.mxu0 0
        %2753 = vmatpush1.bf16.xpose.msra.mxu0 0
        %2754 = vmatprep.subr.bf16.mxu0 0
        %2755 = vmatpush1.bf16.xpose.msra.mxu0 0
        %2756 = vmatprep.subr.bf16.mxu0 0
        %2757 = vmatpush1.bf16.xpose.msra.mxu0 0
        %2758 = vmatprep.subr.bf16.mxu0 0
        %2759 = vmatpush1.bf16.xpose.msra.mxu0 0
        %2760 = vmatprep.subr.bf16.mxu0 0
        %2761 = vmatpush1.bf16.xpose.msra.mxu0 0
        %2762 = vmatprep.subr.bf16.mxu0 0
        %2763 = vmatpush1.bf16.xpose.msra.mxu0 0
        %2764 = vmatprep.subr.bf16.mxu0 0
        %2765 = vmatpush1.bf16.xpose.msra.mxu0 0
        %2766 = vmatprep.mubr.bf16.mxu0 0
        %2767 = vmatmul.mubr.bf16.gmra.mrb[0].mxu0 %v2729
        %v2768 = vpop.f32.mrb[0].mxu0
        %v2769 = vadd.f32 %v1056, %v2768
        %v2770 = vpop.f32.mrb[0].mxu0
        %v2771 = vpop.f32.mrb[0].mxu0
        %v2772 = vadd.f32 %v1056, %v2771
        %v2773 = vpop.f32.mrb[0].mxu0
        %2774 = vdwg.mxu0
        %v2775 = vadd.f32 %v2769, %v802
        %v2776 = vadd.f32 %v2772, %v803
        %v2777 = vsel %vm1108, %v2775, -inf
        %2778 = vmax.xlane.f32.xlu0 %v2777
        %v2779 = vpop.xlane.xlu0 %2778
        %v2780 = vsel %vm1108, %v2776, -inf
        %2781 = vmax.xlane.f32.xlu0 %v2780
        %v2782 = vpop.xlane.xlu0 %2781
        %v2783 = vsub.f32 %v2775, %v2779
        %v2784 = vsub.f32 %v2776, %v2782
        %v2785 = vmul.f32 %v2783, 1.442695
        %v2786 = vpow.pop %v2785
        %v2787 = vmul.f32 %v2784, 1.442695
        %v2788 = vpow.pop %v2787
        %v2789 = vsel %vm1108, %v2786, 0.0
        %2790 = vadd.xlane.f32.xlu0 %v2789
        %v2791 = vpop.xlane.xlu0 %2790
        %v2792 = vsel %vm1108, %v2788, 0.0
        %2793 = vadd.xlane.f32.xlu0 %v2792
        %v2794 = vpop.xlane.xlu0 %2793
        %v2795 = vrcp.pop %v2791
        %v2796 = vrcp.pop %v2794
        %v2797 = vmul.f32 %v2786, %v2795
        %v2798 = vmul.f32 %v2788, %v2796
        %v2799 = vpack.c.bf16 %v2798, %v2797
        %2800 = vrot.lane.b32.xlu0 %v2355, 32
        %v2801 = vpop.permute.xlu0 %2800
        %v2804 = vsel %vm1108, %v2799, 0
        %2806 = vmatprep.subr.bf16.mxu0 0
        %2807 = vmatpush1.bf16.msra.mxu0 %v2801
        %2808 = vmatprep.subr.bf16.mxu0 0
        %2809 = vmatpush1.bf16.msra.mxu0 0
        %2810 = vmatprep.subr.bf16.mxu0 0
        %2811 = vmatpush1.bf16.msra.mxu0 0
        %2812 = vmatprep.subr.bf16.mxu0 0
        %2813 = vmatpush1.bf16.msra.mxu0 0
        %2814 = vmatprep.subr.bf16.mxu0 0
        %2815 = vmatpush1.bf16.msra.mxu0 0
        %2816 = vmatprep.subr.bf16.mxu0 0
        %2817 = vmatpush1.bf16.msra.mxu0 0
        %2818 = vmatprep.subr.bf16.mxu0 0
        %2819 = vmatpush1.bf16.msra.mxu0 0
        %2820 = vmatprep.subr.bf16.mxu0 0
        %2821 = vmatpush1.bf16.msra.mxu0 0
        %2822 = vmatprep.subr.bf16.mxu0 0
        %2823 = vmatpush1.bf16.msra.mxu0 0
        %2824 = vmatprep.subr.bf16.mxu0 0
        %2825 = vmatpush1.bf16.msra.mxu0 0
        %2826 = vmatprep.subr.bf16.mxu0 0
        %2827 = vmatpush1.bf16.msra.mxu0 0
        %2828 = vmatprep.subr.bf16.mxu0 0
        %2829 = vmatpush1.bf16.msra.mxu0 0
        %2830 = vmatprep.subr.bf16.mxu0 0
        %2831 = vmatpush1.bf16.msra.mxu0 0
        %2832 = vmatprep.subr.bf16.mxu0 0
        %2833 = vmatpush1.bf16.msra.mxu0 0
        %2834 = vmatprep.subr.bf16.mxu0 0
        %2835 = vmatpush1.bf16.msra.mxu0 0
        %2836 = vmatprep.subr.bf16.mxu0 0
        %2837 = vmatpush1.bf16.msra.mxu0 0
        %2838 = vmatprep.mubr.bf16.mxu0 0
        %2839 = vmatmul.mubr.bf16.gmra.mrb[0].mxu0 %v2804
        %v2840 = vpop.f32.mrb[0].mxu0
        %v2841 = vadd.f32 0.0, %v2840
        %v2842 = vpop.f32.mrb[0].mxu0
        %v2843 = vpop.f32.mrb[0].mxu0
        %v2844 = vadd.f32 0.0, %v2843
        %v2845 = vpop.f32.mrb[0].mxu0
        %2846 = vdwg.mxu0
        %v2847 = vpack.c.bf16 %v2844, %v2841
        %2849 = vrot.lane.b32.xlu0 %v2599, 32
        %v2850 = vpop.permute.xlu0 %2849
        %2852 = vrot.lane.b32.xlu0 %v2723, 64
        %v2853 = vpop.permute.xlu0 %2852
        %2855 = vrot.lane.b32.xlu0 %v2847, 96
        %v2856 = vpop.permute.xlu0 %2855
        %v2859 = vsel %vm1058, %v2472, %v2850
        %v2861 = vsel %vm1564, %v2859, %v2853
        %v2863 = vsel %vm1567, %v2861, %v2856
        %s2865 = scalar_lea.vmem %s4, 64
        %v2866 = vld [vmem:[%s2865] sm:$0xf]
        %v2867 = vld [vmem:[%s2865 + $0x4] sm:$0xf]
        %v2868 = vld [vmem:[%s2865 + $0x8] sm:$0xf]
        %v2869 = vld [vmem:[%s2865 + $0xc] sm:$0xf]
        %v2870 = vld [vmem:[%s2865 + $0x10] sm:$0xf]
        %v2871 = vld [vmem:[%s2865 + $0x14] sm:$0xf]
        %v2872 = vld [vmem:[%s2865 + $0x18] sm:$0xf]
        %v2873 = vld [vmem:[%s2865 + $0x1c] sm:$0xf]
        %v2874 = vld [vmem:[%s2865 + $0x20] sm:$0xf]
        %v2875 = vld [vmem:[%s2865 + $0x24] sm:$0xf]
        %v2876 = vld [vmem:[%s2865 + $0x28] sm:$0xf]
        %v2877 = vld [vmem:[%s2865 + $0x2c] sm:$0xf]
        %v2878 = vld [vmem:[%s2865 + $0x30] sm:$0xf]
        %v2879 = vld [vmem:[%s2865 + $0x34] sm:$0xf]
        %v2880 = vld [vmem:[%s2865 + $0x38] sm:$0xf]
        %v2881 = vld [vmem:[%s2865 + $0x3c] sm:$0xf]
        %v2898 = vunpack.c.l.b16 %v2866
        %v2899 = vunpack.c.l.b16 %v2867
        %v2900 = vunpack.c.l.b16 %v2868
        %v2901 = vunpack.c.l.b16 %v2869
        %v2902 = vunpack.c.l.b16 %v2870
        %v2903 = vunpack.c.l.b16 %v2871
        %v2904 = vunpack.c.l.b16 %v2872
        %v2905 = vunpack.c.l.b16 %v2873
        %v2906 = vunpack.c.l.b16 %v2874
        %v2907 = vunpack.c.l.b16 %v2875
        %v2908 = vunpack.c.l.b16 %v2876
        %v2909 = vunpack.c.l.b16 %v2877
        %v2910 = vunpack.c.l.b16 %v2878
        %v2911 = vunpack.c.l.b16 %v2879
        %v2912 = vunpack.c.l.b16 %v2880
        %v2913 = vunpack.c.l.b16 %v2881
        %v2914 = vpack.c.b16 %v2899, %v2898
        %v2915 = vpack.c.b16 %v2901, %v2900
        %v2916 = vpack.c.b16 %v2903, %v2902
        %v2917 = vpack.c.b16 %v2905, %v2904
        %v2918 = vpack.c.b16 %v2907, %v2906
        %v2919 = vpack.c.b16 %v2909, %v2908
        %v2920 = vpack.c.b16 %v2911, %v2910
        %v2921 = vpack.c.b16 %v2913, %v2912
        %2930 = vmatprep.subr.bf16.mxu0 0
        %2931 = vmatpush1.bf16.msra.mxu0 %v2914
        %2932 = vmatprep.subr.bf16.mxu0 0
        %2933 = vmatpush1.bf16.msra.mxu0 %v2915
        %2934 = vmatprep.subr.bf16.mxu0 0
        %2935 = vmatpush1.bf16.msra.mxu0 %v2916
        %2936 = vmatprep.subr.bf16.mxu0 0
        %2937 = vmatpush1.bf16.msra.mxu0 %v2917
        %2938 = vmatprep.subr.bf16.mxu0 0
        %2939 = vmatpush1.bf16.msra.mxu0 %v2918
        %2940 = vmatprep.subr.bf16.mxu0 0
        %2941 = vmatpush1.bf16.msra.mxu0 %v2919
        %2942 = vmatprep.subr.bf16.mxu0 0
        %2943 = vmatpush1.bf16.msra.mxu0 %v2920
        %2944 = vmatprep.subr.bf16.mxu0 0
        %2945 = vmatpush1.bf16.msra.mxu0 %v2921
        %2946 = vmatprep.subr.bf16.mxu0 0
        %2947 = vmatpush1.bf16.msra.mxu0 0
        %2948 = vmatprep.subr.bf16.mxu0 0
        %2949 = vmatpush1.bf16.msra.mxu0 0
        %2950 = vmatprep.subr.bf16.mxu0 0
        %2951 = vmatpush1.bf16.msra.mxu0 0
        %2952 = vmatprep.subr.bf16.mxu0 0
        %2953 = vmatpush1.bf16.msra.mxu0 0
        %2954 = vmatprep.subr.bf16.mxu0 0
        %2955 = vmatpush1.bf16.msra.mxu0 0
        %2956 = vmatprep.subr.bf16.mxu0 0
        %2957 = vmatpush1.bf16.msra.mxu0 0
        %2958 = vmatprep.subr.bf16.mxu0 0
        %2959 = vmatpush1.bf16.msra.mxu0 0
        %2960 = vmatprep.subr.bf16.mxu0 0
        %2961 = vmatpush1.bf16.msra.mxu0 0
        %2962 = vmatprep.mubr.bf16.mxu0 0
        %2963 = vmatmul.mubr.bf16.gmra.mrb[0].mxu0 %v2863
        %v2964 = vpop.f32.mrb[0].mxu0
        %v2965 = vadd.f32 0.0, %v2964
        %v2966 = vpop.f32.mrb[0].mxu0
        %v2967 = vpop.f32.mrb[0].mxu0
        %v2968 = vadd.f32 0.0, %v2967
        %v2969 = vpop.f32.mrb[0].mxu0
        %2970 = vdwg.mxu0
        %v2971 = vadd.f32 %v2105, %v2965
        %v2972 = vadd.f32 %v2106, %v2968
        %s2973 = scalar_lea.vmem %s5, 1
        %v2974 = vld [vmem:[%s2973] sm:$0x1]
        %s2975 = scalar_lea.vmem %s6, 1
        %v2976 = vld [vmem:[%s2975] sm:$0x1]
        %2977 = vadd.xlane.f32.xlu0 %v2971
        %v2978 = vpop.xlane.xlu0 %2977
        %2979 = vadd.xlane.f32.xlu0 %v2972
        %v2980 = vpop.xlane.xlu0 %2979
        %v2981 = vmul.f32 %v2978, %v1684
        %v2982 = vmul.f32 %v2980, %v1684
        %v2983 = vmul.f32 %v2971, %v2971
        %v2984 = vmul.f32 %v2972, %v2972
        %2985 = vadd.xlane.f32.xlu0 %v2983
        %v2986 = vpop.xlane.xlu0 %2985
        %2987 = vadd.xlane.f32.xlu0 %v2984
        %v2988 = vpop.xlane.xlu0 %2987
        %v2989 = vmul.f32 %v2986, %v1684
        %v2990 = vmul.f32 %v2988, %v1684
        %v2991 = vmul.f32 %v2981, %v2981
        %v2992 = vmul.f32 %v2982, %v2982
        %v2993 = vsub.f32 %v2989, %v2991
        %v2994 = vsub.f32 %v2990, %v2992
        %v2995 = vmax.f32 %v2993, 0.0
        %v2996 = vmax.f32 %v2994, 0.0
        %v2997 = vsub.f32 %v2971, %v2981
        %v2998 = vsub.f32 %v2972, %v2982
        %v2999 = vadd.f32 %v2995, 1e-06
        %v3000 = vadd.f32 %v2996, 1e-06
        %v3001 = vrsqrt.pop %v2999
        %v3002 = vrsqrt.pop %v3000
        %v3003 = vmul.f32 %v2997, %v3001
        %v3004 = vmul.f32 %v2998, %v3002
        %v3006 = vlaneseq
        %v3007 = vshrl.u32 %v3006, 7
        %v3008 = vsub.s32 0, %v3007
        %v3009 = vrot.slane %v2974, %v3008
        %v3011 = vmul.f32 %v3003, %v3009
        %v3012 = vmul.f32 %v3004, %v3009
        %v3014 = vlaneseq
        %v3015 = vshrl.u32 %v3014, 7
        %v3016 = vsub.s32 0, %v3015
        %v3017 = vrot.slane %v2976, %v3016
        %v3019 = vadd.f32 %v3011, %v3017
        %v3020 = vadd.f32 %v3012, %v3017
        %v3021 = vpack.c.bf16 %v3020, %v3019
        %s3022 = scalar_lea.vmem [#allocation5], 128
        %v3023 = vld [vmem:[%s3022] sm:$0xff]
        %v3024 = vld [vmem:[%s3022 + $0x8] sm:$0xff]
        %v3025 = vld [vmem:[%s3022 + $0x10] sm:$0xff]
        %v3026 = vld [vmem:[%s3022 + $0x18] sm:$0xff]
        %v3027 = vld [vmem:[%s3022 + $0x20] sm:$0xff]
        %v3028 = vld [vmem:[%s3022 + $0x28] sm:$0xff]
        %v3029 = vld [vmem:[%s3022 + $0x30] sm:$0xff]
        %v3030 = vld [vmem:[%s3022 + $0x38] sm:$0xff]
        %v3031 = vld [vmem:[%s3022 + $0x40] sm:$0xff]
        %v3032 = vld [vmem:[%s3022 + $0x48] sm:$0xff]
        %v3033 = vld [vmem:[%s3022 + $0x50] sm:$0xff]
        %v3034 = vld [vmem:[%s3022 + $0x58] sm:$0xff]
        %v3035 = vld [vmem:[%s3022 + $0x60] sm:$0xff]
        %v3036 = vld [vmem:[%s3022 + $0x68] sm:$0xff]
        %v3037 = vld [vmem:[%s3022 + $0x70] sm:$0xff]
        %v3038 = vld [vmem:[%s3022 + $0x78] sm:$0xff]
        %s3039 = scalar_lea.vmem %s8, 2
        %v3040 = vld [vmem:[%s3039] sm:$0x3]
        %v3042 = vlaneseq
        %v3043 = vshrl.u32 %v3042, 7
        %v3044 = vsub.s32 0, %v3043
        %v3045 = vrot.slane %v3040, %v3044
        %v3046 = vlaneseq
        %v3047 = vshrl.u32 %v3046, 7
        %v3048 = vsub.s32 1, %v3047
        %v3049 = vrot.slane %v3040, %v3048
        %v3068 = vunpack.c.l.b16 %v3023
        %v3069 = vunpack.c.h.b16 %v3023
        %v3070 = vunpack.c.l.b16 %v3024
        %v3071 = vunpack.c.h.b16 %v3024
        %v3072 = vunpack.c.l.b16 %v3025
        %v3073 = vunpack.c.h.b16 %v3025
        %v3074 = vunpack.c.l.b16 %v3026
        %v3075 = vunpack.c.h.b16 %v3026
        %v3076 = vunpack.c.l.b16 %v3027
        %v3077 = vunpack.c.h.b16 %v3027
        %v3078 = vunpack.c.l.b16 %v3028
        %v3079 = vunpack.c.h.b16 %v3028
        %v3080 = vunpack.c.l.b16 %v3029
        %v3081 = vunpack.c.h.b16 %v3029
        %v3082 = vunpack.c.l.b16 %v3030
        %v3083 = vunpack.c.h.b16 %v3030
        %v3084 = vunpack.c.l.b16 %v3031
        %v3085 = vunpack.c.h.b16 %v3031
        %v3086 = vunpack.c.l.b16 %v3032
        %v3087 = vunpack.c.h.b16 %v3032
        %v3088 = vunpack.c.l.b16 %v3033
        %v3089 = vunpack.c.h.b16 %v3033
        %v3090 = vunpack.c.l.b16 %v3034
        %v3091 = vunpack.c.h.b16 %v3034
        %v3092 = vunpack.c.l.b16 %v3035
        %v3093 = vunpack.c.h.b16 %v3035
        %v3094 = vunpack.c.l.b16 %v3036
        %v3095 = vunpack.c.h.b16 %v3036
        %v3096 = vunpack.c.l.b16 %v3037
        %v3097 = vunpack.c.h.b16 %v3037
        %v3098 = vunpack.c.l.b16 %v3038
        %v3099 = vunpack.c.h.b16 %v3038
        %v3100 = vpack.c.b16 %v3070, %v3068
        %v3101 = vpack.c.b16 %v3071, %v3069
        %v3102 = vpack.c.b16 %v3074, %v3072
        %v3103 = vpack.c.b16 %v3075, %v3073
        %v3104 = vpack.c.b16 %v3078, %v3076
        %v3105 = vpack.c.b16 %v3079, %v3077
        %v3106 = vpack.c.b16 %v3082, %v3080
        %v3107 = vpack.c.b16 %v3083, %v3081
        %v3108 = vpack.c.b16 %v3086, %v3084
        %v3109 = vpack.c.b16 %v3087, %v3085
        %v3110 = vpack.c.b16 %v3090, %v3088
        %v3111 = vpack.c.b16 %v3091, %v3089
        %v3112 = vpack.c.b16 %v3094, %v3092
        %v3113 = vpack.c.b16 %v3095, %v3093
        %v3114 = vpack.c.b16 %v3098, %v3096
        %v3115 = vpack.c.b16 %v3099, %v3097
        %3132 = vmatprep.subr.bf16.mxu0 %v3101
        %3133 = vmatpush1.bf16.msra.mxu0 %v3100
        %3134 = vmatprep.subr.bf16.mxu0 %v3103
        %3135 = vmatpush1.bf16.msra.mxu0 %v3102
        %3136 = vmatprep.subr.bf16.mxu0 %v3105
        %3137 = vmatpush1.bf16.msra.mxu0 %v3104
        %3138 = vmatprep.subr.bf16.mxu0 %v3107
        %3139 = vmatpush1.bf16.msra.mxu0 %v3106
        %3140 = vmatprep.subr.bf16.mxu0 %v3109
        %3141 = vmatpush1.bf16.msra.mxu0 %v3108
        %3142 = vmatprep.subr.bf16.mxu0 %v3111
        %3143 = vmatpush1.bf16.msra.mxu0 %v3110
        %3144 = vmatprep.subr.bf16.mxu0 %v3113
        %3145 = vmatpush1.bf16.msra.mxu0 %v3112
        %3146 = vmatprep.subr.bf16.mxu0 %v3115
        %3147 = vmatpush1.bf16.msra.mxu0 %v3114
        %3148 = vmatprep.subr.bf16.mxu0 0
        %3149 = vmatpush1.bf16.msra.mxu0 0
        %3150 = vmatprep.subr.bf16.mxu0 0
        %3151 = vmatpush1.bf16.msra.mxu0 0
        %3152 = vmatprep.subr.bf16.mxu0 0
        %3153 = vmatpush1.bf16.msra.mxu0 0
        %3154 = vmatprep.subr.bf16.mxu0 0
        %3155 = vmatpush1.bf16.msra.mxu0 0
        %3156 = vmatprep.subr.bf16.mxu0 0
        %3157 = vmatpush1.bf16.msra.mxu0 0
        %3158 = vmatprep.subr.bf16.mxu0 0
        %3159 = vmatpush1.bf16.msra.mxu0 0
        %3160 = vmatprep.subr.bf16.mxu0 0
        %3161 = vmatpush1.bf16.msra.mxu0 0
        %3162 = vmatprep.subr.bf16.mxu0 0
        %3163 = vmatpush1.bf16.msra.mxu0 0
        %3164 = vmatprep.mubr.bf16.mxu0 0
        %3165 = vmatmul.mubr.bf16.gmra.mrb[0].mxu0 %v3021
        %v3166 = vpop.f32.mrb[0].mxu0
        %v3167 = vadd.f32 %v3045, %v3166
        %v3168 = vpop.f32.mrb[0].mxu0
        %v3169 = vadd.f32 %v3049, %v3168
        %v3170 = vpop.f32.mrb[0].mxu0
        %v3171 = vadd.f32 %v3045, %v3170
        %v3172 = vpop.f32.mrb[0].mxu0
        %v3173 = vadd.f32 %v3049, %v3172
        %3174 = vdwg.mxu0
        %v3175 = vmax.f32 %v3167, 0.0
        %v3176 = vmax.f32 %v3169, 0.0
        %v3177 = vmax.f32 %v3171, 0.0
        %v3178 = vmax.f32 %v3173, 0.0
        %v3179 = vpack.c.bf16 %v3177, %v3175
        %v3180 = vpack.c.bf16 %v3178, %v3176
        %s3181 = scalar_lea.vmem [#allocation7], 128
        %v3182 = vld [vmem:[%s3181] sm:$0xf]
        %v3183 = vld [vmem:[%s3181 + $0x4] sm:$0xf]
        %v3184 = vld [vmem:[%s3181 + $0x8] sm:$0xf]
        %v3185 = vld [vmem:[%s3181 + $0xc] sm:$0xf]
        %v3186 = vld [vmem:[%s3181 + $0x10] sm:$0xf]
        %v3187 = vld [vmem:[%s3181 + $0x14] sm:$0xf]
        %v3188 = vld [vmem:[%s3181 + $0x18] sm:$0xf]
        %v3189 = vld [vmem:[%s3181 + $0x1c] sm:$0xf]
        %v3190 = vld [vmem:[%s3181 + $0x20] sm:$0xf]
        %v3191 = vld [vmem:[%s3181 + $0x24] sm:$0xf]
        %v3192 = vld [vmem:[%s3181 + $0x28] sm:$0xf]
        %v3193 = vld [vmem:[%s3181 + $0x2c] sm:$0xf]
        %v3194 = vld [vmem:[%s3181 + $0x30] sm:$0xf]
        %v3195 = vld [vmem:[%s3181 + $0x34] sm:$0xf]
        %v3196 = vld [vmem:[%s3181 + $0x38] sm:$0xf]
        %v3197 = vld [vmem:[%s3181 + $0x3c] sm:$0xf]
        %v3198 = vld [vmem:[%s3181 + $0x40] sm:$0xf]
        %v3199 = vld [vmem:[%s3181 + $0x44] sm:$0xf]
        %v3200 = vld [vmem:[%s3181 + $0x48] sm:$0xf]
        %v3201 = vld [vmem:[%s3181 + $0x4c] sm:$0xf]
        %v3202 = vld [vmem:[%s3181 + $0x50] sm:$0xf]
        %v3203 = vld [vmem:[%s3181 + $0x54] sm:$0xf]
        %v3204 = vld [vmem:[%s3181 + $0x58] sm:$0xf]
        %v3205 = vld [vmem:[%s3181 + $0x5c] sm:$0xf]
        %v3206 = vld [vmem:[%s3181 + $0x60] sm:$0xf]
        %v3207 = vld [vmem:[%s3181 + $0x64] sm:$0xf]
        %v3208 = vld [vmem:[%s3181 + $0x68] sm:$0xf]
        %v3209 = vld [vmem:[%s3181 + $0x6c] sm:$0xf]
        %v3210 = vld [vmem:[%s3181 + $0x70] sm:$0xf]
        %v3211 = vld [vmem:[%s3181 + $0x74] sm:$0xf]
        %v3212 = vld [vmem:[%s3181 + $0x78] sm:$0xf]
        %v3213 = vld [vmem:[%s3181 + $0x7c] sm:$0xf]
        %s3214 = scalar_lea.vmem %s10, 1
        %v3215 = vld [vmem:[%s3214] sm:$0x1]
        %v3217 = vlaneseq
        %v3218 = vshrl.u32 %v3217, 7
        %v3219 = vsub.s32 0, %v3218
        %v3220 = vrot.slane %v3215, %v3219
        %v3254 = vunpack.c.l.b16 %v3182
        %v3255 = vunpack.c.l.b16 %v3183
        %v3256 = vunpack.c.l.b16 %v3184
        %v3257 = vunpack.c.l.b16 %v3185
        %v3258 = vunpack.c.l.b16 %v3186
        %v3259 = vunpack.c.l.b16 %v3187
        %v3260 = vunpack.c.l.b16 %v3188
        %v3261 = vunpack.c.l.b16 %v3189
        %v3262 = vunpack.c.l.b16 %v3190
        %v3263 = vunpack.c.l.b16 %v3191
        %v3264 = vunpack.c.l.b16 %v3192
        %v3265 = vunpack.c.l.b16 %v3193
        %v3266 = vunpack.c.l.b16 %v3194
        %v3267 = vunpack.c.l.b16 %v3195
        %v3268 = vunpack.c.l.b16 %v3196
        %v3269 = vunpack.c.l.b16 %v3197
        %v3270 = vunpack.c.l.b16 %v3198
        %v3271 = vunpack.c.l.b16 %v3199
        %v3272 = vunpack.c.l.b16 %v3200
        %v3273 = vunpack.c.l.b16 %v3201
        %v3274 = vunpack.c.l.b16 %v3202
        %v3275 = vunpack.c.l.b16 %v3203
        %v3276 = vunpack.c.l.b16 %v3204
        %v3277 = vunpack.c.l.b16 %v3205
        %v3278 = vunpack.c.l.b16 %v3206
        %v3279 = vunpack.c.l.b16 %v3207
        %v3280 = vunpack.c.l.b16 %v3208
        %v3281 = vunpack.c.l.b16 %v3209
        %v3282 = vunpack.c.l.b16 %v3210
        %v3283 = vunpack.c.l.b16 %v3211
        %v3284 = vunpack.c.l.b16 %v3212
        %v3285 = vunpack.c.l.b16 %v3213
        %v3286 = vpack.c.b16 %v3255, %v3254
        %v3287 = vpack.c.b16 %v3257, %v3256
        %v3288 = vpack.c.b16 %v3259, %v3258
        %v3289 = vpack.c.b16 %v3261, %v3260
        %v3290 = vpack.c.b16 %v3263, %v3262
        %v3291 = vpack.c.b16 %v3265, %v3264
        %v3292 = vpack.c.b16 %v3267, %v3266
        %v3293 = vpack.c.b16 %v3269, %v3268
        %v3294 = vpack.c.b16 %v3271, %v3270
        %v3295 = vpack.c.b16 %v3273, %v3272
        %v3296 = vpack.c.b16 %v3275, %v3274
        %v3297 = vpack.c.b16 %v3277, %v3276
        %v3298 = vpack.c.b16 %v3279, %v3278
        %v3299 = vpack.c.b16 %v3281, %v3280
        %v3300 = vpack.c.b16 %v3283, %v3282
        %v3301 = vpack.c.b16 %v3285, %v3284
        %3318 = vmatprep.subr.bf16.mxu0 0
        %3319 = vmatpush1.bf16.msra.mxu0 %v3286
        %3320 = vmatprep.subr.bf16.mxu0 0
        %3321 = vmatpush1.bf16.msra.mxu0 %v3287
        %3322 = vmatprep.subr.bf16.mxu0 0
        %3323 = vmatpush1.bf16.msra.mxu0 %v3288
        %3324 = vmatprep.subr.bf16.mxu0 0
        %3325 = vmatpush1.bf16.msra.mxu0 %v3289
        %3326 = vmatprep.subr.bf16.mxu0 0
        %3327 = vmatpush1.bf16.msra.mxu0 %v3290
        %3328 = vmatprep.subr.bf16.mxu0 0
        %3329 = vmatpush1.bf16.msra.mxu0 %v3291
        %3330 = vmatprep.subr.bf16.mxu0 0
        %3331 = vmatpush1.bf16.msra.mxu0 %v3292
        %3332 = vmatprep.subr.bf16.mxu0 0
        %3333 = vmatpush1.bf16.msra.mxu0 %v3293
        %3334 = vmatprep.subr.bf16.mxu0 0
        %3335 = vmatpush1.bf16.msra.mxu0 %v3294
        %3336 = vmatprep.subr.bf16.mxu0 0
        %3337 = vmatpush1.bf16.msra.mxu0 %v3295
        %3338 = vmatprep.subr.bf16.mxu0 0
        %3339 = vmatpush1.bf16.msra.mxu0 %v3296
        %3340 = vmatprep.subr.bf16.mxu0 0
        %3341 = vmatpush1.bf16.msra.mxu0 %v3297
        %3342 = vmatprep.subr.bf16.mxu0 0
        %3343 = vmatpush1.bf16.msra.mxu0 %v3298
        %3344 = vmatprep.subr.bf16.mxu0 0
        %3345 = vmatpush1.bf16.msra.mxu0 %v3299
        %3346 = vmatprep.subr.bf16.mxu0 0
        %3347 = vmatpush1.bf16.msra.mxu0 %v3300
        %3348 = vmatprep.subr.bf16.mxu0 0
        %3349 = vmatpush1.bf16.msra.mxu0 %v3301
        %3350 = vmatprep.mubr.bf16.mxu0 %v3180
        %3351 = vmatmul.mubr.bf16.gmra.mrb[0].mxu0 %v3179
        %v3352 = vpop.f32.mrb[0].mxu0
        %v3353 = vadd.f32 %v3220, %v3352
        %v3354 = vpop.f32.mrb[0].mxu0
        %v3355 = vpop.f32.mrb[0].mxu0
        %v3356 = vadd.f32 %v3220, %v3355
        %v3357 = vpop.f32.mrb[0].mxu0
        %3358 = vdwg.mxu0
        %v3359 = vadd.f32 %v3019, %v3353
        %v3360 = vadd.f32 %v3020, %v3356
        %s3361 = scalar_lea.vmem %s11, 1
        %v3362 = vld [vmem:[%s3361] sm:$0x1]
        %s3363 = scalar_lea.vmem %s12, 1
        %v3364 = vld [vmem:[%s3363] sm:$0x1]
        %3365 = vadd.xlane.f32.xlu0 %v3359
        %v3366 = vpop.xlane.xlu0 %3365
        %3367 = vadd.xlane.f32.xlu0 %v3360
        %v3368 = vpop.xlane.xlu0 %3367
        %v3369 = vmul.f32 %v3366, %v1684
        %v3370 = vmul.f32 %v3368, %v1684
        %v3371 = vmul.f32 %v3359, %v3359
        %v3372 = vmul.f32 %v3360, %v3360
        %3373 = vadd.xlane.f32.xlu0 %v3371
        %v3374 = vpop.xlane.xlu0 %3373
        %3375 = vadd.xlane.f32.xlu0 %v3372
        %v3376 = vpop.xlane.xlu0 %3375
        %v3377 = vmul.f32 %v3374, %v1684
        %v3378 = vmul.f32 %v3376, %v1684
        %v3379 = vmul.f32 %v3369, %v3369
        %v3380 = vmul.f32 %v3370, %v3370
        %v3381 = vsub.f32 %v3377, %v3379
        %v3382 = vsub.f32 %v3378, %v3380
        %v3383 = vmax.f32 %v3381, 0.0
        %v3384 = vmax.f32 %v3382, 0.0
        %v3385 = vsub.f32 %v3359, %v3369
        %v3386 = vsub.f32 %v3360, %v3370
        %v3387 = vadd.f32 %v3383, 1e-06
        %v3388 = vadd.f32 %v3384, 1e-06
        %v3389 = vrsqrt.pop %v3387
        %v3390 = vrsqrt.pop %v3388
        %v3391 = vmul.f32 %v3385, %v3389
        %v3392 = vmul.f32 %v3386, %v3390
        %v3394 = vlaneseq
        %v3395 = vshrl.u32 %v3394, 7
        %v3396 = vsub.s32 0, %v3395
        %v3397 = vrot.slane %v3362, %v3396
        %v3399 = vmul.f32 %v3391, %v3397
        %v3400 = vmul.f32 %v3392, %v3397
        %v3402 = vlaneseq
        %v3403 = vshrl.u32 %v3402, 7
        %v3404 = vsub.s32 0, %v3403
        %v3405 = vrot.slane %v3364, %v3404
        %v3407 = vadd.f32 %v3399, %v3405
        %v3408 = vadd.f32 %v3400, %v3405
        %3409 = vst [vmem:[%s488] sm:$0xff] %v3407
        %3410 = vst [vmem:[%s488 + $0x8] sm:$0xff] %v3408
        %s3411 = sand.u32 %s320, 1
        %s3412 = scalar_lea.sflag [#allocation4], %s3411
        %s3413 = sand.u32 %s320, 1
        %s3414 = smul.addr %s3413, 16
        %s3415 = scalar_lea.vmem [#allocation8], %s3414
        // Predicated region
        $region85: #{graph_paraff_encoder.1} parent=71 // pred_check
          %p3416 = pneg %p330
        $region86: #{graph_paraff_encoder.1} parent=71 // pred_check_branch
          %3418 = sbr.rel (%p3416) target = $region88
        $region87: #{graph_paraff_encoder.1} parent=71 // pred_region
          %s3420 = ssub.s32 256, 256
          %3421 = vsyncadd %s3412, %s3420
          %s3422 = smul.addr %s29, 2
          %s3423 = smul.addr %s3422, 128
          %s3424 = scalar_lea.hbm %s13, %s3423
          %s3425 = sshll.u32 %s3415, 4
          %s3426 = int_to_ptr.vmem [resolvable:$true] %s3425
          %3431 = dma.vmem_to_hbm [thread:$0]  %s3426, 256, %s3424, %s3412, 128, 128, 8
        $region88: #{graph_paraff_encoder.1} parent=71 // pred_fallthru
          _
      $region72: #{graph_paraff_encoder.1} parent=5 // pred_fallthru
        _
      %p3432 = scmp.le.s32.totalorder 2, %s24
      // Predicated region
      $region89: #{graph_paraff_encoder.1} parent=5 // pred_check
        %p3433 = pneg %p3432
      $region90: #{graph_paraff_encoder.1} parent=5 // pred_check_branch
        %3435 = sbr.rel (%p3433) target = $region92
      $region91: #{graph_paraff_encoder.1} parent=5 // pred_region
        %s3436 = ssub.s32 %s24, 2
        // Predicated region
        $region93: #{graph_paraff_encoder.1} parent=91 // pred_check
          %p3437 = pneg %p336
        $region94: #{graph_paraff_encoder.1} parent=91 // pred_check_branch
          %3439 = sbr.rel (%p3437) target = $region96
        $region95: #{graph_paraff_encoder.1} parent=91 // pred_region
          %s3440 = sand.u32 %s321, 1
          %s3441 = scalar_lea.sflag [#allocation4], %s3440
          %s3442 = sand.u32 %s321, 1
          %s3443 = smul.addr %s3442, 16
          %s3444 = scalar_lea.vmem [#allocation8], %s3443
          %3445 = dma.done %s3441, 256
        $region96: #{graph_paraff_encoder.1} parent=91 // pred_fallthru
          _
      $region92: #{graph_paraff_encoder.1} parent=5 // pred_fallthru
        _
    $region6: #{graph_paraff_encoder.1} parent=1 // loop_footer
      %s28 = sadd.s32 1, %s24
    $region7: #{graph_paraff_encoder.1} parent=1 // loop_footer_branch
      %23 = sbr.rel target = $region3
    $region8: #{graph_paraff_encoder.1} parent=1 // loop_exit
      _
    %3446 = vsyncpa [#allocation3], 1
    %s3447 = scalar_lea.sflag [#allocation3], 1
    %3448 = vsyncpa %s3447, 1
    %3449 = vsyncpa [#allocation6], 1
    %3450 = vsyncpa [#allocation4], 1
    %s3451 = scalar_lea.sflag [#allocation4], 1
    %3452 = vsyncpa %s3451, 1

</llo_original>
